<compile_context>
chip_gen: v7x
topology: tpu7x:2x2x1
jax: 0.10.0
libtpu: 0.0.40
codegen_flags: <defaults>
</compile_context>

<pallas_src>
import numpy as np

import jax
import jax.numpy as jnp
from jax.experimental import pallas as pl
from jax.experimental.pallas import tpu as pltpu


# --------------------------------------------------------------------------
# fused kernel
# --------------------------------------------------------------------------
#
# Encoder layout ("family A"): rows = channels, lanes = flattened positions.
#   conv1 input  x1  : (12, 512)  feature f = c*4+ph*2+pw,
#                      lane = (pi*2+pj)*128 + (qi*2+qj)*32 + b*16 + m*4 + n
#                      where conv1-out pos = (4m+2qi+pi, 4n+2qj+pj)
#   conv1 output h1  : (8, 512)   -> avgpool = mean of the 4 lane blocks of 128
#   pooled       p   : (8, 128)   lane = (qi*2+qj)*32 + b*16 + m*4 + n
#   conv2 output h2  : (16, 32)   lane = b*16 + m*4 + n
# Latent / decoder layout ("family B"): rows = batch (padded to 8), lanes = C*H*W.
# ConvT stages:    value block (16, 16) rows = b*8+co, lanes = m*4+n,
#                  scattered to (16, 256) canvases, final image (B*3, 1024)
#                  rows = b*3+c3, lanes = (kh*2+kw)*256 + h*16 + w.

def _vae_kernel(
    x1_ref, eps_ref,
    w1_ref, b1_ref, g1_ref, be1_ref,
    w2_ref, b2_ref, g2_ref, be2_ref,
    wcat_ref, bcat_ref,
    kd1_ref, bd1r_ref, bd1c_ref, g3_ref, be3_ref,
    smat_ref, bdall_ref, bd2c_ref, g4_ref, be4_ref,
    mean_ref, logvar_ref, img_ref,
    lat_ref, d1a_ref,
):
    def fma_matmul(w, x):
        # (M, K) @ (K, N) with small K as unrolled VPU broadcast-FMAs
        # (keeps the MXU free for the two real GEMMs).
        acc = w[:, 0:1] * x[0:1, :]
        for k in range(1, w.shape[1]):
            acc = acc + w[:, k:k + 1] * x[k:k + 1, :]
        return acc

    def bn_lane(y, inv_n, gamma, beta):
        # training-mode BatchNorm over the lane axis, one-pass stats,
        # biased variance, eps = 1e-5.  Normalization by reciprocal constant.
        s1 = jnp.sum(y, axis=1, keepdims=True)
        s2 = jnp.sum(y * y, axis=1, keepdims=True)
        mu = s1 * inv_n
        var = s2 * inv_n - mu * mu
        scale = jax.lax.rsqrt(var + 1e-5) * gamma
        return (y - mu) * scale + beta

    # ----------------------- encoder -----------------------
    # Conv2d(3,8,2,2) + ReLU + BN1   (stats over B*16*16 = 512 positions)
    h1 = jnp.maximum(fma_matmul(w1_ref[...], x1_ref[...]) + b1_ref[...], 0.0)
    h1 = bn_lane(h1, 1.0 / 512.0, g1_ref[...], be1_ref[...])              # (8, 512)

    # AvgPool2d(2,2): the 4 taps of each window are the 4 lane blocks of 128.
    p = 0.25 * (h1[:, 0:128] + h1[:, 128:256] + h1[:, 256:384] + h1[:, 384:512])

    # Conv2d(8,16,2,2) + ReLU + BN2  (stats over B*4*4 = 32 positions)
    x2 = jnp.concatenate([p[:, 0:32], p[:, 32:64], p[:, 64:96], p[:, 96:128]],
                         axis=0)                                          # (32, 32)
    h2 = jnp.maximum(fma_matmul(w2_ref[...], x2) + b2_ref[...], 0.0)      # (16, 32)
    h2 = bn_lane(h2, 1.0 / 32.0, g2_ref[...], be2_ref[...])

    # ---------------- latent relayout + reparameterize ----------------
    # PyTorch Flatten of (B,16,4,4): lat[b, c*16+s] = h2[c, b*16+s].
    lat_ref[...] = jnp.zeros_like(lat_ref)            # rows 2..7 = zero padding
    for c in range(16):
        for b in range(2):
            lat_ref[b:b + 1, c * 16:(c + 1) * 16] = h2[c:c + 1, b * 16:(b + 1) * 16]

    # merged fc_mean | fc_std : one MXU GEMM, M padded to 8 rows.
    ml = jnp.dot(lat_ref[...], wcat_ref[...],
                 preferred_element_type=jnp.float32) + bcat_ref[...]      # (8, 512)
    mean = ml[0:2, 0:256]
    logvar = ml[0:2, 256:512]
    mean_ref[...] = mean
    logvar_ref[...] = logvar
    z = mean + jnp.exp(0.5 * logvar) * eps_ref[...]                       # (2, 256)

    # ----------------------- decoder -----------------------
    # ConvTranspose2d(16,8,1x1,stride=5): only 16/256 positions carry values;
    # compute them as z @ kron(W, I16) (channel mixing per spatial slot).
    lat_ref[0:2, :] = z
    d1 = jnp.dot(lat_ref[...], kd1_ref[...],
                 preferred_element_type=jnp.float32) + bd1r_ref[...]      # (8, 128)
    yv = jnp.maximum(d1[0:2, :], 0.0)                 # (2, 128)  [b, co*16 + m*4+n]

    # relayout value block to rows = (b, co), lanes = m*4+n
    for b in range(2):
        for co in range(8):
            r = b * 8 + co
            d1a_ref[r:r + 1, :] = yv[b:b + 1, co * 16:(co + 1) * 16]
    yva = d1a_ref[...]                                                    # (16, 16)

    # BN3 with analytic handling of the 2*240 bias-only positions (N = 512).
    rb = jnp.maximum(bd1c_ref[...], 0.0)                                  # (8, 1)
    rs1 = jnp.sum(yva, axis=1, keepdims=True)
    rs2 = jnp.sum(yva * yva, axis=1, keepdims=True)
    s1 = rs1[0:8] + rs1[8:16] + 480.0 * rb
    s2 = rs2[0:8] + rs2[8:16] + 480.0 * rb * rb
    mu3 = s1 * (1.0 / 512.0)
    var3 = s2 * (1.0 / 512.0) - mu3 * mu3
    sc3 = jax.lax.rsqrt(var3 + 1e-5) * g3_ref[...]                        # (8, 1)
    q3 = (rb - mu3) * sc3 + be3_ref[...]              # normalized bias-only value
    mu3r = jnp.concatenate([mu3, mu3], axis=0)
    sc3r = jnp.concatenate([sc3, sc3], axis=0)
    be3r = jnp.concatenate([be3_ref[...], be3_ref[...]], axis=0)
    q3r = jnp.concatenate([q3, q3], axis=0)                               # (16, 1)
    yvn = (yva - mu3r) * sc3r + be3r                                      # (16, 16)

    # Scatter the value block onto the 16x16 canvas (values at h,w in {0,5,10,15}),
    # background = q3, via a 16-term FMA with the 0/1 scatter matrix.
    x3 = q3r + fma_matmul(yvn - q3r, smat_ref[...])                       # (16, 256)

    # ConvTranspose2d(8,3,2x2,s=2): one (6,256) block per (kh,kw) output tap,
    # weights are batch-block-diagonal (6,16) matrices prepared on the host.
    blocks = []
    for j in range(4):
        bdj = bdall_ref[j]                                                # (6, 16)
        blocks.append(bd2c_ref[...] + fma_matmul(bdj, x3))
    y4 = jnp.maximum(jnp.concatenate(blocks, axis=1), 0.0)                # (6, 1024)

    # BN4 (N = B*32*32 = 2048): pool the two batch row-groups per channel.
    rs1 = jnp.sum(y4, axis=1, keepdims=True)
    rs2 = jnp.sum(y4 * y4, axis=1, keepdims=True)
    s1 = rs1[0:3] + rs1[3:6]
    s2 = rs2[0:3] + rs2[3:6]
    mu4 = s1 * (1.0 / 2048.0)
    var4 = s2 * (1.0 / 2048.0) - mu4 * mu4
    sc4 = jax.lax.rsqrt(var4 + 1e-5) * g4_ref[...]
    mu4r = jnp.concatenate([mu4, mu4], axis=0)
    sc4r = jnp.concatenate([sc4, sc4], axis=0)
    be4r = jnp.concatenate([be4_ref[...], be4_ref[...]], axis=0)
    img_ref[...] = (y4 - mu4r) * sc4r + be4r                              # (6, 1024)


# --------------------------------------------------------------------------
# parameters
# --------------------------------------------------------------------------

def init_params(key):
    ks = jax.random.split(key, 8)
    f32 = jnp.float32
    return {
        # encoder
        "conv1_w": 0.1 * jax.random.normal(ks[0], (8, 3, 2, 2), f32),
        "conv1_b": jnp.zeros((8,), f32),
        "bn1_g": jnp.ones((8,), f32), "bn1_b": jnp.zeros((8,), f32),
        "conv2_w": 0.1 * jax.random.normal(ks[1], (16, 8, 2, 2), f32),
        "conv2_b": jnp.zeros((16,), f32),
        "bn2_g": jnp.ones((16,), f32), "bn2_b": jnp.zeros((16,), f32),
        # fc_mean / fc_std : PyTorch Linear weight is (out, in)
        "fcm_w": 0.05 * jax.random.normal(ks[2], (256, 256), f32),
        "fcm_b": jnp.zeros((256,), f32),
        "fcs_w": 0.05 * jax.random.normal(ks[3], (256, 256), f32),
        "fcs_b": jnp.zeros((256,), f32),
        # decoder : ConvTranspose weight is (in, out, kh, kw)
        "dconv1_w": 0.1 * jax.random.normal(ks[4], (16, 8, 1, 1), f32),
        "dconv1_b": 0.1 * jax.random.normal(ks[5], (8,), f32),
        "bn3_g": jnp.ones((8,), f32), "bn3_b": jnp.zeros((8,), f32),
        "dconv2_w": 0.1 * jax.random.normal(ks[6], (8, 3, 2, 2), f32),
        "dconv2_b": 0.1 * jax.random.normal(ks[7], (3,), f32),
        "bn4_g": jnp.ones((3,), f32), "bn4_b": jnp.zeros((3,), f32),
    }


def prep_params(p):
    """One-time re-layout of weights/biases into kernel-ready arrays."""
    f32 = jnp.float32

    w1 = p["conv1_w"].reshape(8, 12)                       # [cout, cin*4+ph*2+pw]
    b1 = p["conv1_b"].reshape(8, 1)
    g1, be1 = p["bn1_g"].reshape(8, 1), p["bn1_b"].reshape(8, 1)

    w2 = jnp.transpose(p["conv2_w"], (0, 2, 3, 1)).reshape(16, 32)   # [cout,(qi,qj)*8+cin]
    b2 = p["conv2_b"].reshape(16, 1)
    g2, be2 = p["bn2_g"].reshape(16, 1), p["bn2_b"].reshape(16, 1)

    wcat = jnp.concatenate([p["fcm_w"].T, p["fcs_w"].T], axis=1)     # (256, 512)
    bcat = jnp.concatenate([p["fcm_b"], p["fcs_b"]]).reshape(1, 512)

    wd1 = p["dconv1_w"].reshape(16, 8)                               # (cin, cout)
    kd1 = jnp.kron(wd1, jnp.eye(16, dtype=f32))                      # (256, 128)
    bd1r = jnp.repeat(p["dconv1_b"], 16).reshape(1, 128)
    bd1c = p["dconv1_b"].reshape(8, 1)
    g3, be3 = p["bn3_g"].reshape(8, 1), p["bn3_b"].reshape(8, 1)

    # 0/1 scatter matrix: stride-5 value positions of the 1x1 conv-transpose.
    smat = np.zeros((16, 256), np.float32)
    for m in range(4):
        for n in range(4):
            smat[m * 4 + n, (5 * m) * 16 + 5 * n] = 1.0
    smat = jnp.asarray(smat)

    # dconv2: one batch-block-diagonal (6,16) weight per (kh, kw) tap.
    zeros38 = jnp.zeros((3, 8), f32)
    bds = []
    for kh in range(2):
        for kw in range(2):
            a = p["dconv2_w"][:, :, kh, kw].T                        # (3, 8) [c3, co]
            bds.append(jnp.concatenate(
                [jnp.concatenate([a, zeros38], axis=1),
                 jnp.concatenate([zeros38, a], axis=1)], axis=0))    # (6, 16)
    bdall = jnp.stack(bds)                                           # (4, 6, 16)
    bd2c = jnp.tile(p["dconv2_b"], 2).reshape(6, 1)
    g4, be4 = p["bn4_g"].reshape(3, 1), p["bn4_b"].reshape(3, 1)

    return (w1, b1, g1, be1, w2, b2, g2, be2, wcat, bcat,
            kd1, bd1r, bd1c, g3, be3, smat, bdall, bd2c, g4, be4)


# --------------------------------------------------------------------------
# forward
# --------------------------------------------------------------------------

def _full_spec(shape):
    zeros = (0,) * len(shape)
    return pl.BlockSpec(shape, lambda i: zeros)


def vae_forward(kp, x, eps):
    B = x.shape[0]
    assert B == 2, "kernel is specialised to batch size 2"

    # im2col for conv1 with a pool/conv2-friendly lane ordering:
    # H = 8m + 4qi + 2pi + ph, W = 8n + 4qj + 2pj + pw
    # lane = (pi,pj)*128 + (qi,qj)*32 + b*16 + m*4 + n ; feature = c*4 + ph*2 + pw
    xr = x.reshape(B, 3, 4, 2, 2, 2, 4, 2, 2, 2)
    xr = jnp.transpose(xr, (1, 5, 9, 4, 8, 3, 7, 0, 2, 6))
    x1 = xr.reshape(12, 256 * B)                                     # (12, 512)

    inputs = (x1, eps) + kp
    out_shapes = (
        jax.ShapeDtypeStruct((B, 256), jnp.float32),                 # mean
        jax.ShapeDtypeStruct((B, 256), jnp.float32),                 # log_var
        jax.ShapeDtypeStruct((B * 3, 1024), jnp.float32),            # image slab
    )
    mean, log_var, img6 = pl.pallas_call(
        _vae_kernel,
        grid=(1,),
        in_specs=[_full_spec(a.shape) for a in inputs],
        out_specs=[_full_spec(s.shape) for s in out_shapes],
        out_shape=out_shapes,
        scratch_shapes=[pltpu.VMEM((8, 256), jnp.float32),           # padded latent / z
                        pltpu.VMEM((16, 16), jnp.float32)],          # dconv1 value block
        compiler_params=pltpu.CompilerParams(
            dimension_semantics=("arbitrary",)),
    )(*inputs)

    # depth-to-space back to NCHW: rows=(b,c3), lanes=(kh,kw,h,w) -> (B,3,32,32)
    out = img6.reshape(B, 3, 2, 2, 16, 16)
    out = jnp.transpose(out, (0, 1, 4, 2, 5, 3)).reshape(B, 3, 32, 32)
    return out, mean, log_var, eps


if __name__ == "__main__":
    key = jax.random.PRNGKey(0)
    kx, keps, kparam = jax.random.split(key, 3)

    B = 2
    x = jax.random.normal(kx, (B, 3, 32, 32), jnp.float32)   # 32x32 required by fc(16*4*4)
    # TODO(synk): epsilon (torch.randn_like) is sampled outside the kernel and
    # passed in / returned, matching the module's returned epsilon.
    eps = jax.random.normal(keps, (B, 256), jnp.float32)
    params = init_params(kparam)
    kp = prep_params(params)                                 # one-time weight re-layout

    fwd = jax.jit(vae_forward)
    out, mean, log_var, epsilon = fwd(kp, x, eps)
    jax.block_until_ready((out, mean, log_var, epsilon))

    assert out.shape == (B, 3, 32, 32)
    assert mean.shape == (B, 256) and log_var.shape == (B, 256) and epsilon.shape == (B, 256)
    assert bool(jnp.all(jnp.isfinite(out)))
    print("KERNEL_OK")
</pallas_src>

<mosaic_0001>
module attributes {stable_mosaic.version = 11 : i64} {
  func.func @_vae_kernel(%arg0: i32, %arg1: memref<12x512xf32, #tpu.memory_space<vmem>>, %arg2: memref<2x256xf32, #tpu.memory_space<vmem>>, %arg3: memref<8x12xf32, #tpu.memory_space<vmem>>, %arg4: memref<8x1xf32, #tpu.memory_space<vmem>>, %arg5: memref<8x1xf32, #tpu.memory_space<vmem>>, %arg6: memref<8x1xf32, #tpu.memory_space<vmem>>, %arg7: memref<16x32xf32, #tpu.memory_space<vmem>>, %arg8: memref<16x1xf32, #tpu.memory_space<vmem>>, %arg9: memref<16x1xf32, #tpu.memory_space<vmem>>, %arg10: memref<16x1xf32, #tpu.memory_space<vmem>>, %arg11: memref<256x512xf32, #tpu.memory_space<vmem>>, %arg12: memref<1x512xf32, #tpu.memory_space<vmem>>, %arg13: memref<256x128xf32, #tpu.memory_space<vmem>>, %arg14: memref<1x128xf32, #tpu.memory_space<vmem>>, %arg15: memref<8x1xf32, #tpu.memory_space<vmem>>, %arg16: memref<8x1xf32, #tpu.memory_space<vmem>>, %arg17: memref<8x1xf32, #tpu.memory_space<vmem>>, %arg18: memref<16x256xf32, #tpu.memory_space<vmem>>, %arg19: memref<4x6x16xf32, #tpu.memory_space<vmem>>, %arg20: memref<6x1xf32, #tpu.memory_space<vmem>>, %arg21: memref<3x1xf32, #tpu.memory_space<vmem>>, %arg22: memref<3x1xf32, #tpu.memory_space<vmem>>, %arg23: memref<2x256xf32, #tpu.memory_space<vmem>>, %arg24: memref<2x256xf32, #tpu.memory_space<vmem>>, %arg25: memref<6x1024xf32, #tpu.memory_space<vmem>>, %arg26: memref<8x256xf32, #tpu.memory_space<vmem>>, %arg27: memref<16x16xf32, #tpu.memory_space<vmem>>) attributes {dimension_semantics = [#tpu.dimension_semantics<arbitrary>], iteration_bounds = array<i64: 1>, scalar_prefetch = 0 : i64, scratch_operands = 2 : i64, tpu.core_type = #tpu.core_type<tc>, window_params = [{pipeline_mode = #tpu.pipeline_mode<synchronous>, transform_indices = @transform_0, window_bounds = array<i64: 12, 512>}, {pipeline_mode = #tpu.pipeline_mode<synchronous>, transform_indices = @transform_1, window_bounds = array<i64: 2, 256>}, {pipeline_mode = #tpu.pipeline_mode<synchronous>, transform_indices = @transform_2, window_bounds = array<i64: 8, 12>}, {pipeline_mode = #tpu.pipeline_mode<synchronous>, transform_indices = @transform_3, window_bounds = array<i64: 8, 1>}, {pipeline_mode = #tpu.pipeline_mode<synchronous>, transform_indices = @transform_4, window_bounds = array<i64: 8, 1>}, {pipeline_mode = #tpu.pipeline_mode<synchronous>, transform_indices = @transform_5, window_bounds = array<i64: 8, 1>}, {pipeline_mode = #tpu.pipeline_mode<synchronous>, transform_indices = @transform_6, window_bounds = array<i64: 16, 32>}, {pipeline_mode = #tpu.pipeline_mode<synchronous>, transform_indices = @transform_7, window_bounds = array<i64: 16, 1>}, {pipeline_mode = #tpu.pipeline_mode<synchronous>, transform_indices = @transform_8, window_bounds = array<i64: 16, 1>}, {pipeline_mode = #tpu.pipeline_mode<synchronous>, transform_indices = @transform_9, window_bounds = array<i64: 16, 1>}, {pipeline_mode = #tpu.pipeline_mode<synchronous>, transform_indices = @transform_10, window_bounds = array<i64: 256, 512>}, {pipeline_mode = #tpu.pipeline_mode<synchronous>, transform_indices = @transform_11, window_bounds = array<i64: 1, 512>}, {pipeline_mode = #tpu.pipeline_mode<synchronous>, transform_indices = @transform_12, window_bounds = array<i64: 256, 128>}, {pipeline_mode = #tpu.pipeline_mode<synchronous>, transform_indices = @transform_13, window_bounds = array<i64: 1, 128>}, {pipeline_mode = #tpu.pipeline_mode<synchronous>, transform_indices = @transform_14, window_bounds = array<i64: 8, 1>}, {pipeline_mode = #tpu.pipeline_mode<synchronous>, transform_indices = @transform_15, window_bounds = array<i64: 8, 1>}, {pipeline_mode = #tpu.pipeline_mode<synchronous>, transform_indices = @transform_16, window_bounds = array<i64: 8, 1>}, {pipeline_mode = #tpu.pipeline_mode<synchronous>, transform_indices = @transform_17, window_bounds = array<i64: 16, 256>}, {pipeline_mode = #tpu.pipeline_mode<synchronous>, transform_indices = @transform_18, window_bounds = array<i64: 4, 6, 16>}, {pipeline_mode = #tpu.pipeline_mode<synchronous>, transform_indices = @transform_19, window_bounds = array<i64: 6, 1>}, {pipeline_mode = #tpu.pipeline_mode<synchronous>, transform_indices = @transform_20, window_bounds = array<i64: 3, 1>}, {pipeline_mode = #tpu.pipeline_mode<synchronous>, transform_indices = @transform_21, window_bounds = array<i64: 3, 1>}, {pipeline_mode = #tpu.pipeline_mode<synchronous>, transform_indices = @transform_22, window_bounds = array<i64: 2, 256>}, {pipeline_mode = #tpu.pipeline_mode<synchronous>, transform_indices = @transform_23, window_bounds = array<i64: 2, 256>}, {pipeline_mode = #tpu.pipeline_mode<synchronous>, transform_indices = @transform_24, window_bounds = array<i64: 6, 1024>}]} {
    %c0 = arith.constant 0 : index
    %c0_0 = arith.constant 0 : index
    %0 = vector.load %arg3[%c0, %c0_0] : memref<8x12xf32, #tpu.memory_space<vmem>>, vector<8x12xf32>
    %c0_1 = arith.constant 0 : index
    %c0_2 = arith.constant 0 : index
    %1 = vector.load %arg1[%c0_1, %c0_2] : memref<12x512xf32, #tpu.memory_space<vmem>>, vector<12x512xf32>
    %2 = vector.extract_strided_slice %0 {offsets = [0, 0], sizes = [8, 1], strides = [1, 1]} : vector<8x12xf32> to vector<8x1xf32>
    %3 = vector.extract_strided_slice %1 {offsets = [0, 0], sizes = [1, 512], strides = [1, 1]} : vector<12x512xf32> to vector<1x512xf32>
    %4 = vector.broadcast %2 : vector<8x1xf32> to vector<8x512xf32>
    %5 = vector.broadcast %3 : vector<1x512xf32> to vector<8x512xf32>
    %6 = arith.mulf %4, %5 : vector<8x512xf32>
    %7 = vector.extract_strided_slice %0 {offsets = [0, 1], sizes = [8, 1], strides = [1, 1]} : vector<8x12xf32> to vector<8x1xf32>
    %8 = vector.extract_strided_slice %1 {offsets = [1, 0], sizes = [1, 512], strides = [1, 1]} : vector<12x512xf32> to vector<1x512xf32>
    %9 = vector.broadcast %7 : vector<8x1xf32> to vector<8x512xf32>
    %10 = vector.broadcast %8 : vector<1x512xf32> to vector<8x512xf32>
    %11 = arith.mulf %9, %10 : vector<8x512xf32>
    %12 = arith.addf %6, %11 : vector<8x512xf32>
    %13 = vector.extract_strided_slice %0 {offsets = [0, 2], sizes = [8, 1], strides = [1, 1]} : vector<8x12xf32> to vector<8x1xf32>
    %14 = vector.extract_strided_slice %1 {offsets = [2, 0], sizes = [1, 512], strides = [1, 1]} : vector<12x512xf32> to vector<1x512xf32>
    %15 = vector.broadcast %13 : vector<8x1xf32> to vector<8x512xf32>
    %16 = vector.broadcast %14 : vector<1x512xf32> to vector<8x512xf32>
    %17 = arith.mulf %15, %16 : vector<8x512xf32>
    %18 = arith.addf %12, %17 : vector<8x512xf32>
    %19 = vector.extract_strided_slice %0 {offsets = [0, 3], sizes = [8, 1], strides = [1, 1]} : vector<8x12xf32> to vector<8x1xf32>
    %20 = vector.extract_strided_slice %1 {offsets = [3, 0], sizes = [1, 512], strides = [1, 1]} : vector<12x512xf32> to vector<1x512xf32>
    %21 = vector.broadcast %19 : vector<8x1xf32> to vector<8x512xf32>
    %22 = vector.broadcast %20 : vector<1x512xf32> to vector<8x512xf32>
    %23 = arith.mulf %21, %22 : vector<8x512xf32>
    %24 = arith.addf %18, %23 : vector<8x512xf32>
    %25 = vector.extract_strided_slice %0 {offsets = [0, 4], sizes = [8, 1], strides = [1, 1]} : vector<8x12xf32> to vector<8x1xf32>
    %26 = vector.extract_strided_slice %1 {offsets = [4, 0], sizes = [1, 512], strides = [1, 1]} : vector<12x512xf32> to vector<1x512xf32>
    %27 = vector.broadcast %25 : vector<8x1xf32> to vector<8x512xf32>
    %28 = vector.broadcast %26 : vector<1x512xf32> to vector<8x512xf32>
    %29 = arith.mulf %27, %28 : vector<8x512xf32>
    %30 = arith.addf %24, %29 : vector<8x512xf32>
    %31 = vector.extract_strided_slice %0 {offsets = [0, 5], sizes = [8, 1], strides = [1, 1]} : vector<8x12xf32> to vector<8x1xf32>
    %32 = vector.extract_strided_slice %1 {offsets = [5, 0], sizes = [1, 512], strides = [1, 1]} : vector<12x512xf32> to vector<1x512xf32>
    %33 = vector.broadcast %31 : vector<8x1xf32> to vector<8x512xf32>
    %34 = vector.broadcast %32 : vector<1x512xf32> to vector<8x512xf32>
    %35 = arith.mulf %33, %34 : vector<8x512xf32>
    %36 = arith.addf %30, %35 : vector<8x512xf32>
    %37 = vector.extract_strided_slice %0 {offsets = [0, 6], sizes = [8, 1], strides = [1, 1]} : vector<8x12xf32> to vector<8x1xf32>
    %38 = vector.extract_strided_slice %1 {offsets = [6, 0], sizes = [1, 512], strides = [1, 1]} : vector<12x512xf32> to vector<1x512xf32>
    %39 = vector.broadcast %37 : vector<8x1xf32> to vector<8x512xf32>
    %40 = vector.broadcast %38 : vector<1x512xf32> to vector<8x512xf32>
    %41 = arith.mulf %39, %40 : vector<8x512xf32>
    %42 = arith.addf %36, %41 : vector<8x512xf32>
    %43 = vector.extract_strided_slice %0 {offsets = [0, 7], sizes = [8, 1], strides = [1, 1]} : vector<8x12xf32> to vector<8x1xf32>
    %44 = vector.extract_strided_slice %1 {offsets = [7, 0], sizes = [1, 512], strides = [1, 1]} : vector<12x512xf32> to vector<1x512xf32>
    %45 = vector.broadcast %43 : vector<8x1xf32> to vector<8x512xf32>
    %46 = vector.broadcast %44 : vector<1x512xf32> to vector<8x512xf32>
    %47 = arith.mulf %45, %46 : vector<8x512xf32>
    %48 = arith.addf %42, %47 : vector<8x512xf32>
    %49 = vector.extract_strided_slice %0 {offsets = [0, 8], sizes = [8, 1], strides = [1, 1]} : vector<8x12xf32> to vector<8x1xf32>
    %50 = vector.extract_strided_slice %1 {offsets = [8, 0], sizes = [1, 512], strides = [1, 1]} : vector<12x512xf32> to vector<1x512xf32>
    %51 = vector.broadcast %49 : vector<8x1xf32> to vector<8x512xf32>
    %52 = vector.broadcast %50 : vector<1x512xf32> to vector<8x512xf32>
    %53 = arith.mulf %51, %52 : vector<8x512xf32>
    %54 = arith.addf %48, %53 : vector<8x512xf32>
    %55 = vector.extract_strided_slice %0 {offsets = [0, 9], sizes = [8, 1], strides = [1, 1]} : vector<8x12xf32> to vector<8x1xf32>
    %56 = vector.extract_strided_slice %1 {offsets = [9, 0], sizes = [1, 512], strides = [1, 1]} : vector<12x512xf32> to vector<1x512xf32>
    %57 = vector.broadcast %55 : vector<8x1xf32> to vector<8x512xf32>
    %58 = vector.broadcast %56 : vector<1x512xf32> to vector<8x512xf32>
    %59 = arith.mulf %57, %58 : vector<8x512xf32>
    %60 = arith.addf %54, %59 : vector<8x512xf32>
    %61 = vector.extract_strided_slice %0 {offsets = [0, 10], sizes = [8, 1], strides = [1, 1]} : vector<8x12xf32> to vector<8x1xf32>
    %62 = vector.extract_strided_slice %1 {offsets = [10, 0], sizes = [1, 512], strides = [1, 1]} : vector<12x512xf32> to vector<1x512xf32>
    %63 = vector.broadcast %61 : vector<8x1xf32> to vector<8x512xf32>
    %64 = vector.broadcast %62 : vector<1x512xf32> to vector<8x512xf32>
    %65 = arith.mulf %63, %64 : vector<8x512xf32>
    %66 = arith.addf %60, %65 : vector<8x512xf32>
    %67 = vector.extract_strided_slice %0 {offsets = [0, 11], sizes = [8, 1], strides = [1, 1]} : vector<8x12xf32> to vector<8x1xf32>
    %68 = vector.extract_strided_slice %1 {offsets = [11, 0], sizes = [1, 512], strides = [1, 1]} : vector<12x512xf32> to vector<1x512xf32>
    %69 = vector.broadcast %67 : vector<8x1xf32> to vector<8x512xf32>
    %70 = vector.broadcast %68 : vector<1x512xf32> to vector<8x512xf32>
    %71 = arith.mulf %69, %70 : vector<8x512xf32>
    %72 = arith.addf %66, %71 : vector<8x512xf32>
    %c0_3 = arith.constant 0 : index
    %c0_4 = arith.constant 0 : index
    %73 = vector.load %arg4[%c0_3, %c0_4] : memref<8x1xf32, #tpu.memory_space<vmem>>, vector<8x1xf32>
    %74 = vector.broadcast %73 : vector<8x1xf32> to vector<8x512xf32>
    %75 = arith.addf %72, %74 : vector<8x512xf32>
    %cst = arith.constant 0.000000e+00 : f32
    %76 = vector.broadcast %cst : f32 to vector<8x512xf32>
    %77 = arith.maximumf %75, %76 : vector<8x512xf32>
    %c0_5 = arith.constant 0 : index
    %c0_6 = arith.constant 0 : index
    %78 = vector.load %arg5[%c0_5, %c0_6] : memref<8x1xf32, #tpu.memory_space<vmem>>, vector<8x1xf32>
    %c0_7 = arith.constant 0 : index
    %c0_8 = arith.constant 0 : index
    %79 = vector.load %arg6[%c0_7, %c0_8] : memref<8x1xf32, #tpu.memory_space<vmem>>, vector<8x1xf32>
    %cst_9 = arith.constant dense<0.000000e+00> : vector<8xf32>
    %80 = vector.multi_reduction <add>, %77, %cst_9 [1] : vector<8x512xf32> to vector<8xf32>
    %81 = vector.shape_cast %80 : vector<8xf32> to vector<8x1xf32>
    %82 = arith.mulf %77, %77 : vector<8x512xf32>
    %cst_10 = arith.constant dense<0.000000e+00> : vector<8xf32>
    %83 = vector.multi_reduction <add>, %82, %cst_10 [1] : vector<8x512xf32> to vector<8xf32>
    %84 = vector.shape_cast %83 : vector<8xf32> to vector<8x1xf32>
    %cst_11 = arith.constant 0.001953125 : f32
    %85 = vector.broadcast %cst_11 : f32 to vector<8x1xf32>
    %86 = arith.mulf %81, %85 : vector<8x1xf32>
    %cst_12 = arith.constant 0.001953125 : f32
    %87 = vector.broadcast %cst_12 : f32 to vector<8x1xf32>
    %88 = arith.mulf %84, %87 : vector<8x1xf32>
    %89 = arith.mulf %86, %86 : vector<8x1xf32>
    %90 = arith.subf %88, %89 : vector<8x1xf32>
    %cst_13 = arith.constant 9.99999974E-6 : f32
    %91 = vector.broadcast %cst_13 : f32 to vector<8x1xf32>
    %92 = arith.addf %90, %91 : vector<8x1xf32>
    %93 = math.rsqrt %92 : vector<8x1xf32>
    %94 = arith.mulf %93, %78 : vector<8x1xf32>
    %95 = vector.broadcast %86 : vector<8x1xf32> to vector<8x512xf32>
    %96 = arith.subf %77, %95 : vector<8x512xf32>
    %97 = vector.broadcast %94 : vector<8x1xf32> to vector<8x512xf32>
    %98 = arith.mulf %96, %97 : vector<8x512xf32>
    %99 = vector.broadcast %79 : vector<8x1xf32> to vector<8x512xf32>
    %100 = arith.addf %98, %99 : vector<8x512xf32>
    %101 = vector.extract_strided_slice %100 {offsets = [0, 0], sizes = [8, 128], strides = [1, 1]} : vector<8x512xf32> to vector<8x128xf32>
    %102 = vector.extract_strided_slice %100 {offsets = [0, 128], sizes = [8, 128], strides = [1, 1]} : vector<8x512xf32> to vector<8x128xf32>
    %103 = arith.addf %101, %102 : vector<8x128xf32>
    %104 = vector.extract_strided_slice %100 {offsets = [0, 256], sizes = [8, 128], strides = [1, 1]} : vector<8x512xf32> to vector<8x128xf32>
    %105 = arith.addf %103, %104 : vector<8x128xf32>
    %106 = vector.extract_strided_slice %100 {offsets = [0, 384], sizes = [8, 128], strides = [1, 1]} : vector<8x512xf32> to vector<8x128xf32>
    %107 = arith.addf %105, %106 : vector<8x128xf32>
    %cst_14 = arith.constant 2.500000e-01 : f32
    %108 = vector.broadcast %cst_14 : f32 to vector<8x128xf32>
    %109 = arith.mulf %108, %107 : vector<8x128xf32>
    %110 = vector.extract_strided_slice %109 {offsets = [0, 0], sizes = [8, 32], strides = [1, 1]} : vector<8x128xf32> to vector<8x32xf32>
    %111 = vector.extract_strided_slice %109 {offsets = [0, 32], sizes = [8, 32], strides = [1, 1]} : vector<8x128xf32> to vector<8x32xf32>
    %112 = vector.extract_strided_slice %109 {offsets = [0, 64], sizes = [8, 32], strides = [1, 1]} : vector<8x128xf32> to vector<8x32xf32>
    %113 = vector.extract_strided_slice %109 {offsets = [0, 96], sizes = [8, 32], strides = [1, 1]} : vector<8x128xf32> to vector<8x32xf32>
    %114 = tpu.concatenate %110, %111, %112, %113 in 0 : vector<8x32xf32>, vector<8x32xf32>, vector<8x32xf32>, vector<8x32xf32> -> vector<32x32xf32>
    %c0_15 = arith.constant 0 : index
    %c0_16 = arith.constant 0 : index
    %115 = vector.load %arg7[%c0_15, %c0_16] : memref<16x32xf32, #tpu.memory_space<vmem>>, vector<16x32xf32>
    %116 = vector.extract_strided_slice %115 {offsets = [0, 0], sizes = [16, 1], strides = [1, 1]} : vector<16x32xf32> to vector<16x1xf32>
    %117 = vector.extract_strided_slice %114 {offsets = [0, 0], sizes = [1, 32], strides = [1, 1]} : vector<32x32xf32> to vector<1x32xf32>
    %118 = vector.broadcast %116 : vector<16x1xf32> to vector<16x32xf32>
    %119 = vector.broadcast %117 : vector<1x32xf32> to vector<16x32xf32>
    %120 = arith.mulf %118, %119 : vector<16x32xf32>
    %121 = vector.extract_strided_slice %115 {offsets = [0, 1], sizes = [16, 1], strides = [1, 1]} : vector<16x32xf32> to vector<16x1xf32>
    %122 = vector.extract_strided_slice %114 {offsets = [1, 0], sizes = [1, 32], strides = [1, 1]} : vector<32x32xf32> to vector<1x32xf32>
    %123 = vector.broadcast %121 : vector<16x1xf32> to vector<16x32xf32>
    %124 = vector.broadcast %122 : vector<1x32xf32> to vector<16x32xf32>
    %125 = arith.mulf %123, %124 : vector<16x32xf32>
    %126 = arith.addf %120, %125 : vector<16x32xf32>
    %127 = vector.extract_strided_slice %115 {offsets = [0, 2], sizes = [16, 1], strides = [1, 1]} : vector<16x32xf32> to vector<16x1xf32>
    %128 = vector.extract_strided_slice %114 {offsets = [2, 0], sizes = [1, 32], strides = [1, 1]} : vector<32x32xf32> to vector<1x32xf32>
    %129 = vector.broadcast %127 : vector<16x1xf32> to vector<16x32xf32>
    %130 = vector.broadcast %128 : vector<1x32xf32> to vector<16x32xf32>
    %131 = arith.mulf %129, %130 : vector<16x32xf32>
    %132 = arith.addf %126, %131 : vector<16x32xf32>
    %133 = vector.extract_strided_slice %115 {offsets = [0, 3], sizes = [16, 1], strides = [1, 1]} : vector<16x32xf32> to vector<16x1xf32>
    %134 = vector.extract_strided_slice %114 {offsets = [3, 0], sizes = [1, 32], strides = [1, 1]} : vector<32x32xf32> to vector<1x32xf32>
    %135 = vector.broadcast %133 : vector<16x1xf32> to vector<16x32xf32>
    %136 = vector.broadcast %134 : vector<1x32xf32> to vector<16x32xf32>
    %137 = arith.mulf %135, %136 : vector<16x32xf32>
    %138 = arith.addf %132, %137 : vector<16x32xf32>
    %139 = vector.extract_strided_slice %115 {offsets = [0, 4], sizes = [16, 1], strides = [1, 1]} : vector<16x32xf32> to vector<16x1xf32>
    %140 = vector.extract_strided_slice %114 {offsets = [4, 0], sizes = [1, 32], strides = [1, 1]} : vector<32x32xf32> to vector<1x32xf32>
    %141 = vector.broadcast %139 : vector<16x1xf32> to vector<16x32xf32>
    %142 = vector.broadcast %140 : vector<1x32xf32> to vector<16x32xf32>
    %143 = arith.mulf %141, %142 : vector<16x32xf32>
    %144 = arith.addf %138, %143 : vector<16x32xf32>
    %145 = vector.extract_strided_slice %115 {offsets = [0, 5], sizes = [16, 1], strides = [1, 1]} : vector<16x32xf32> to vector<16x1xf32>
    %146 = vector.extract_strided_slice %114 {offsets = [5, 0], sizes = [1, 32], strides = [1, 1]} : vector<32x32xf32> to vector<1x32xf32>
    %147 = vector.broadcast %145 : vector<16x1xf32> to vector<16x32xf32>
    %148 = vector.broadcast %146 : vector<1x32xf32> to vector<16x32xf32>
    %149 = arith.mulf %147, %148 : vector<16x32xf32>
    %150 = arith.addf %144, %149 : vector<16x32xf32>
    %151 = vector.extract_strided_slice %115 {offsets = [0, 6], sizes = [16, 1], strides = [1, 1]} : vector<16x32xf32> to vector<16x1xf32>
    %152 = vector.extract_strided_slice %114 {offsets = [6, 0], sizes = [1, 32], strides = [1, 1]} : vector<32x32xf32> to vector<1x32xf32>
    %153 = vector.broadcast %151 : vector<16x1xf32> to vector<16x32xf32>
    %154 = vector.broadcast %152 : vector<1x32xf32> to vector<16x32xf32>
    %155 = arith.mulf %153, %154 : vector<16x32xf32>
    %156 = arith.addf %150, %155 : vector<16x32xf32>
    %157 = vector.extract_strided_slice %115 {offsets = [0, 7], sizes = [16, 1], strides = [1, 1]} : vector<16x32xf32> to vector<16x1xf32>
    %158 = vector.extract_strided_slice %114 {offsets = [7, 0], sizes = [1, 32], strides = [1, 1]} : vector<32x32xf32> to vector<1x32xf32>
    %159 = vector.broadcast %157 : vector<16x1xf32> to vector<16x32xf32>
    %160 = vector.broadcast %158 : vector<1x32xf32> to vector<16x32xf32>
    %161 = arith.mulf %159, %160 : vector<16x32xf32>
    %162 = arith.addf %156, %161 : vector<16x32xf32>
    %163 = vector.extract_strided_slice %115 {offsets = [0, 8], sizes = [16, 1], strides = [1, 1]} : vector<16x32xf32> to vector<16x1xf32>
    %164 = vector.extract_strided_slice %114 {offsets = [8, 0], sizes = [1, 32], strides = [1, 1]} : vector<32x32xf32> to vector<1x32xf32>
    %165 = vector.broadcast %163 : vector<16x1xf32> to vector<16x32xf32>
    %166 = vector.broadcast %164 : vector<1x32xf32> to vector<16x32xf32>
    %167 = arith.mulf %165, %166 : vector<16x32xf32>
    %168 = arith.addf %162, %167 : vector<16x32xf32>
    %169 = vector.extract_strided_slice %115 {offsets = [0, 9], sizes = [16, 1], strides = [1, 1]} : vector<16x32xf32> to vector<16x1xf32>
    %170 = vector.extract_strided_slice %114 {offsets = [9, 0], sizes = [1, 32], strides = [1, 1]} : vector<32x32xf32> to vector<1x32xf32>
    %171 = vector.broadcast %169 : vector<16x1xf32> to vector<16x32xf32>
    %172 = vector.broadcast %170 : vector<1x32xf32> to vector<16x32xf32>
    %173 = arith.mulf %171, %172 : vector<16x32xf32>
    %174 = arith.addf %168, %173 : vector<16x32xf32>
    %175 = vector.extract_strided_slice %115 {offsets = [0, 10], sizes = [16, 1], strides = [1, 1]} : vector<16x32xf32> to vector<16x1xf32>
    %176 = vector.extract_strided_slice %114 {offsets = [10, 0], sizes = [1, 32], strides = [1, 1]} : vector<32x32xf32> to vector<1x32xf32>
    %177 = vector.broadcast %175 : vector<16x1xf32> to vector<16x32xf32>
    %178 = vector.broadcast %176 : vector<1x32xf32> to vector<16x32xf32>
    %179 = arith.mulf %177, %178 : vector<16x32xf32>
    %180 = arith.addf %174, %179 : vector<16x32xf32>
    %181 = vector.extract_strided_slice %115 {offsets = [0, 11], sizes = [16, 1], strides = [1, 1]} : vector<16x32xf32> to vector<16x1xf32>
    %182 = vector.extract_strided_slice %114 {offsets = [11, 0], sizes = [1, 32], strides = [1, 1]} : vector<32x32xf32> to vector<1x32xf32>
    %183 = vector.broadcast %181 : vector<16x1xf32> to vector<16x32xf32>
    %184 = vector.broadcast %182 : vector<1x32xf32> to vector<16x32xf32>
    %185 = arith.mulf %183, %184 : vector<16x32xf32>
    %186 = arith.addf %180, %185 : vector<16x32xf32>
    %187 = vector.extract_strided_slice %115 {offsets = [0, 12], sizes = [16, 1], strides = [1, 1]} : vector<16x32xf32> to vector<16x1xf32>
    %188 = vector.extract_strided_slice %114 {offsets = [12, 0], sizes = [1, 32], strides = [1, 1]} : vector<32x32xf32> to vector<1x32xf32>
    %189 = vector.broadcast %187 : vector<16x1xf32> to vector<16x32xf32>
    %190 = vector.broadcast %188 : vector<1x32xf32> to vector<16x32xf32>
    %191 = arith.mulf %189, %190 : vector<16x32xf32>
    %192 = arith.addf %186, %191 : vector<16x32xf32>
    %193 = vector.extract_strided_slice %115 {offsets = [0, 13], sizes = [16, 1], strides = [1, 1]} : vector<16x32xf32> to vector<16x1xf32>
    %194 = vector.extract_strided_slice %114 {offsets = [13, 0], sizes = [1, 32], strides = [1, 1]} : vector<32x32xf32> to vector<1x32xf32>
    %195 = vector.broadcast %193 : vector<16x1xf32> to vector<16x32xf32>
    %196 = vector.broadcast %194 : vector<1x32xf32> to vector<16x32xf32>
    %197 = arith.mulf %195, %196 : vector<16x32xf32>
    %198 = arith.addf %192, %197 : vector<16x32xf32>
    %199 = vector.extract_strided_slice %115 {offsets = [0, 14], sizes = [16, 1], strides = [1, 1]} : vector<16x32xf32> to vector<16x1xf32>
    %200 = vector.extract_strided_slice %114 {offsets = [14, 0], sizes = [1, 32], strides = [1, 1]} : vector<32x32xf32> to vector<1x32xf32>
    %201 = vector.broadcast %199 : vector<16x1xf32> to vector<16x32xf32>
    %202 = vector.broadcast %200 : vector<1x32xf32> to vector<16x32xf32>
    %203 = arith.mulf %201, %202 : vector<16x32xf32>
    %204 = arith.addf %198, %203 : vector<16x32xf32>
    %205 = vector.extract_strided_slice %115 {offsets = [0, 15], sizes = [16, 1], strides = [1, 1]} : vector<16x32xf32> to vector<16x1xf32>
    %206 = vector.extract_strided_slice %114 {offsets = [15, 0], sizes = [1, 32], strides = [1, 1]} : vector<32x32xf32> to vector<1x32xf32>
    %207 = vector.broadcast %205 : vector<16x1xf32> to vector<16x32xf32>
    %208 = vector.broadcast %206 : vector<1x32xf32> to vector<16x32xf32>
    %209 = arith.mulf %207, %208 : vector<16x32xf32>
    %210 = arith.addf %204, %209 : vector<16x32xf32>
    %211 = vector.extract_strided_slice %115 {offsets = [0, 16], sizes = [16, 1], strides = [1, 1]} : vector<16x32xf32> to vector<16x1xf32>
    %212 = vector.extract_strided_slice %114 {offsets = [16, 0], sizes = [1, 32], strides = [1, 1]} : vector<32x32xf32> to vector<1x32xf32>
    %213 = vector.broadcast %211 : vector<16x1xf32> to vector<16x32xf32>
    %214 = vector.broadcast %212 : vector<1x32xf32> to vector<16x32xf32>
    %215 = arith.mulf %213, %214 : vector<16x32xf32>
    %216 = arith.addf %210, %215 : vector<16x32xf32>
    %217 = vector.extract_strided_slice %115 {offsets = [0, 17], sizes = [16, 1], strides = [1, 1]} : vector<16x32xf32> to vector<16x1xf32>
    %218 = vector.extract_strided_slice %114 {offsets = [17, 0], sizes = [1, 32], strides = [1, 1]} : vector<32x32xf32> to vector<1x32xf32>
    %219 = vector.broadcast %217 : vector<16x1xf32> to vector<16x32xf32>
    %220 = vector.broadcast %218 : vector<1x32xf32> to vector<16x32xf32>
    %221 = arith.mulf %219, %220 : vector<16x32xf32>
    %222 = arith.addf %216, %221 : vector<16x32xf32>
    %223 = vector.extract_strided_slice %115 {offsets = [0, 18], sizes = [16, 1], strides = [1, 1]} : vector<16x32xf32> to vector<16x1xf32>
    %224 = vector.extract_strided_slice %114 {offsets = [18, 0], sizes = [1, 32], strides = [1, 1]} : vector<32x32xf32> to vector<1x32xf32>
    %225 = vector.broadcast %223 : vector<16x1xf32> to vector<16x32xf32>
    %226 = vector.broadcast %224 : vector<1x32xf32> to vector<16x32xf32>
    %227 = arith.mulf %225, %226 : vector<16x32xf32>
    %228 = arith.addf %222, %227 : vector<16x32xf32>
    %229 = vector.extract_strided_slice %115 {offsets = [0, 19], sizes = [16, 1], strides = [1, 1]} : vector<16x32xf32> to vector<16x1xf32>
    %230 = vector.extract_strided_slice %114 {offsets = [19, 0], sizes = [1, 32], strides = [1, 1]} : vector<32x32xf32> to vector<1x32xf32>
    %231 = vector.broadcast %229 : vector<16x1xf32> to vector<16x32xf32>
    %232 = vector.broadcast %230 : vector<1x32xf32> to vector<16x32xf32>
    %233 = arith.mulf %231, %232 : vector<16x32xf32>
    %234 = arith.addf %228, %233 : vector<16x32xf32>
    %235 = vector.extract_strided_slice %115 {offsets = [0, 20], sizes = [16, 1], strides = [1, 1]} : vector<16x32xf32> to vector<16x1xf32>
    %236 = vector.extract_strided_slice %114 {offsets = [20, 0], sizes = [1, 32], strides = [1, 1]} : vector<32x32xf32> to vector<1x32xf32>
    %237 = vector.broadcast %235 : vector<16x1xf32> to vector<16x32xf32>
    %238 = vector.broadcast %236 : vector<1x32xf32> to vector<16x32xf32>
    %239 = arith.mulf %237, %238 : vector<16x32xf32>
    %240 = arith.addf %234, %239 : vector<16x32xf32>
    %241 = vector.extract_strided_slice %115 {offsets = [0, 21], sizes = [16, 1], strides = [1, 1]} : vector<16x32xf32> to vector<16x1xf32>
    %242 = vector.extract_strided_slice %114 {offsets = [21, 0], sizes = [1, 32], strides = [1, 1]} : vector<32x32xf32> to vector<1x32xf32>
    %243 = vector.broadcast %241 : vector<16x1xf32> to vector<16x32xf32>
    %244 = vector.broadcast %242 : vector<1x32xf32> to vector<16x32xf32>
    %245 = arith.mulf %243, %244 : vector<16x32xf32>
    %246 = arith.addf %240, %245 : vector<16x32xf32>
    %247 = vector.extract_strided_slice %115 {offsets = [0, 22], sizes = [16, 1], strides = [1, 1]} : vector<16x32xf32> to vector<16x1xf32>
    %248 = vector.extract_strided_slice %114 {offsets = [22, 0], sizes = [1, 32], strides = [1, 1]} : vector<32x32xf32> to vector<1x32xf32>
    %249 = vector.broadcast %247 : vector<16x1xf32> to vector<16x32xf32>
    %250 = vector.broadcast %248 : vector<1x32xf32> to vector<16x32xf32>
    %251 = arith.mulf %249, %250 : vector<16x32xf32>
    %252 = arith.addf %246, %251 : vector<16x32xf32>
    %253 = vector.extract_strided_slice %115 {offsets = [0, 23], sizes = [16, 1], strides = [1, 1]} : vector<16x32xf32> to vector<16x1xf32>
    %254 = vector.extract_strided_slice %114 {offsets = [23, 0], sizes = [1, 32], strides = [1, 1]} : vector<32x32xf32> to vector<1x32xf32>
    %255 = vector.broadcast %253 : vector<16x1xf32> to vector<16x32xf32>
    %256 = vector.broadcast %254 : vector<1x32xf32> to vector<16x32xf32>
    %257 = arith.mulf %255, %256 : vector<16x32xf32>
    %258 = arith.addf %252, %257 : vector<16x32xf32>
    %259 = vector.extract_strided_slice %115 {offsets = [0, 24], sizes = [16, 1], strides = [1, 1]} : vector<16x32xf32> to vector<16x1xf32>
    %260 = vector.extract_strided_slice %114 {offsets = [24, 0], sizes = [1, 32], strides = [1, 1]} : vector<32x32xf32> to vector<1x32xf32>
    %261 = vector.broadcast %259 : vector<16x1xf32> to vector<16x32xf32>
    %262 = vector.broadcast %260 : vector<1x32xf32> to vector<16x32xf32>
    %263 = arith.mulf %261, %262 : vector<16x32xf32>
    %264 = arith.addf %258, %263 : vector<16x32xf32>
    %265 = vector.extract_strided_slice %115 {offsets = [0, 25], sizes = [16, 1], strides = [1, 1]} : vector<16x32xf32> to vector<16x1xf32>
    %266 = vector.extract_strided_slice %114 {offsets = [25, 0], sizes = [1, 32], strides = [1, 1]} : vector<32x32xf32> to vector<1x32xf32>
    %267 = vector.broadcast %265 : vector<16x1xf32> to vector<16x32xf32>
    %268 = vector.broadcast %266 : vector<1x32xf32> to vector<16x32xf32>
    %269 = arith.mulf %267, %268 : vector<16x32xf32>
    %270 = arith.addf %264, %269 : vector<16x32xf32>
    %271 = vector.extract_strided_slice %115 {offsets = [0, 26], sizes = [16, 1], strides = [1, 1]} : vector<16x32xf32> to vector<16x1xf32>
    %272 = vector.extract_strided_slice %114 {offsets = [26, 0], sizes = [1, 32], strides = [1, 1]} : vector<32x32xf32> to vector<1x32xf32>
    %273 = vector.broadcast %271 : vector<16x1xf32> to vector<16x32xf32>
    %274 = vector.broadcast %272 : vector<1x32xf32> to vector<16x32xf32>
    %275 = arith.mulf %273, %274 : vector<16x32xf32>
    %276 = arith.addf %270, %275 : vector<16x32xf32>
    %277 = vector.extract_strided_slice %115 {offsets = [0, 27], sizes = [16, 1], strides = [1, 1]} : vector<16x32xf32> to vector<16x1xf32>
    %278 = vector.extract_strided_slice %114 {offsets = [27, 0], sizes = [1, 32], strides = [1, 1]} : vector<32x32xf32> to vector<1x32xf32>
    %279 = vector.broadcast %277 : vector<16x1xf32> to vector<16x32xf32>
    %280 = vector.broadcast %278 : vector<1x32xf32> to vector<16x32xf32>
    %281 = arith.mulf %279, %280 : vector<16x32xf32>
    %282 = arith.addf %276, %281 : vector<16x32xf32>
    %283 = vector.extract_strided_slice %115 {offsets = [0, 28], sizes = [16, 1], strides = [1, 1]} : vector<16x32xf32> to vector<16x1xf32>
    %284 = vector.extract_strided_slice %114 {offsets = [28, 0], sizes = [1, 32], strides = [1, 1]} : vector<32x32xf32> to vector<1x32xf32>
    %285 = vector.broadcast %283 : vector<16x1xf32> to vector<16x32xf32>
    %286 = vector.broadcast %284 : vector<1x32xf32> to vector<16x32xf32>
    %287 = arith.mulf %285, %286 : vector<16x32xf32>
    %288 = arith.addf %282, %287 : vector<16x32xf32>
    %289 = vector.extract_strided_slice %115 {offsets = [0, 29], sizes = [16, 1], strides = [1, 1]} : vector<16x32xf32> to vector<16x1xf32>
    %290 = vector.extract_strided_slice %114 {offsets = [29, 0], sizes = [1, 32], strides = [1, 1]} : vector<32x32xf32> to vector<1x32xf32>
    %291 = vector.broadcast %289 : vector<16x1xf32> to vector<16x32xf32>
    %292 = vector.broadcast %290 : vector<1x32xf32> to vector<16x32xf32>
    %293 = arith.mulf %291, %292 : vector<16x32xf32>
    %294 = arith.addf %288, %293 : vector<16x32xf32>
    %295 = vector.extract_strided_slice %115 {offsets = [0, 30], sizes = [16, 1], strides = [1, 1]} : vector<16x32xf32> to vector<16x1xf32>
    %296 = vector.extract_strided_slice %114 {offsets = [30, 0], sizes = [1, 32], strides = [1, 1]} : vector<32x32xf32> to vector<1x32xf32>
    %297 = vector.broadcast %295 : vector<16x1xf32> to vector<16x32xf32>
    %298 = vector.broadcast %296 : vector<1x32xf32> to vector<16x32xf32>
    %299 = arith.mulf %297, %298 : vector<16x32xf32>
    %300 = arith.addf %294, %299 : vector<16x32xf32>
    %301 = vector.extract_strided_slice %115 {offsets = [0, 31], sizes = [16, 1], strides = [1, 1]} : vector<16x32xf32> to vector<16x1xf32>
    %302 = vector.extract_strided_slice %114 {offsets = [31, 0], sizes = [1, 32], strides = [1, 1]} : vector<32x32xf32> to vector<1x32xf32>
    %303 = vector.broadcast %301 : vector<16x1xf32> to vector<16x32xf32>
    %304 = vector.broadcast %302 : vector<1x32xf32> to vector<16x32xf32>
    %305 = arith.mulf %303, %304 : vector<16x32xf32>
    %306 = arith.addf %300, %305 : vector<16x32xf32>
    %c0_17 = arith.constant 0 : index
    %c0_18 = arith.constant 0 : index
    %307 = vector.load %arg8[%c0_17, %c0_18] : memref<16x1xf32, #tpu.memory_space<vmem>>, vector<16x1xf32>
    %308 = vector.broadcast %307 : vector<16x1xf32> to vector<16x32xf32>
    %309 = arith.addf %306, %308 : vector<16x32xf32>
    %cst_19 = arith.constant 0.000000e+00 : f32
    %310 = vector.broadcast %cst_19 : f32 to vector<16x32xf32>
    %311 = arith.maximumf %309, %310 : vector<16x32xf32>
    %c0_20 = arith.constant 0 : index
    %c0_21 = arith.constant 0 : index
    %312 = vector.load %arg9[%c0_20, %c0_21] : memref<16x1xf32, #tpu.memory_space<vmem>>, vector<16x1xf32>
    %c0_22 = arith.constant 0 : index
    %c0_23 = arith.constant 0 : index
    %313 = vector.load %arg10[%c0_22, %c0_23] : memref<16x1xf32, #tpu.memory_space<vmem>>, vector<16x1xf32>
    %cst_24 = arith.constant dense<0.000000e+00> : vector<16xf32>
    %314 = vector.multi_reduction <add>, %311, %cst_24 [1] : vector<16x32xf32> to vector<16xf32>
    %315 = vector.shape_cast %314 : vector<16xf32> to vector<16x1xf32>
    %316 = arith.mulf %311, %311 : vector<16x32xf32>
    %cst_25 = arith.constant dense<0.000000e+00> : vector<16xf32>
    %317 = vector.multi_reduction <add>, %316, %cst_25 [1] : vector<16x32xf32> to vector<16xf32>
    %318 = vector.shape_cast %317 : vector<16xf32> to vector<16x1xf32>
    %cst_26 = arith.constant 3.125000e-02 : f32
    %319 = vector.broadcast %cst_26 : f32 to vector<16x1xf32>
    %320 = arith.mulf %315, %319 : vector<16x1xf32>
    %cst_27 = arith.constant 3.125000e-02 : f32
    %321 = vector.broadcast %cst_27 : f32 to vector<16x1xf32>
    %322 = arith.mulf %318, %321 : vector<16x1xf32>
    %323 = arith.mulf %320, %320 : vector<16x1xf32>
    %324 = arith.subf %322, %323 : vector<16x1xf32>
    %cst_28 = arith.constant 9.99999974E-6 : f32
    %325 = vector.broadcast %cst_28 : f32 to vector<16x1xf32>
    %326 = arith.addf %324, %325 : vector<16x1xf32>
    %327 = math.rsqrt %326 : vector<16x1xf32>
    %328 = arith.mulf %327, %312 : vector<16x1xf32>
    %329 = vector.broadcast %320 : vector<16x1xf32> to vector<16x32xf32>
    %330 = arith.subf %311, %329 : vector<16x32xf32>
    %331 = vector.broadcast %328 : vector<16x1xf32> to vector<16x32xf32>
    %332 = arith.mulf %330, %331 : vector<16x32xf32>
    %333 = vector.broadcast %313 : vector<16x1xf32> to vector<16x32xf32>
    %334 = arith.addf %332, %333 : vector<16x32xf32>
    %cst_29 = arith.constant 0.000000e+00 : f32
    %335 = vector.broadcast %cst_29 : f32 to vector<8x256xf32>
    %c0_30 = arith.constant 0 : index
    %c0_31 = arith.constant 0 : index
    %336 = vector.load %arg26[%c0_30, %c0_31] : memref<8x256xf32, #tpu.memory_space<vmem>>, vector<8x256xf32>
    tpu.vector_store %arg26[%c0_30, %c0_31], %335 {strides = array<i32>} : memref<8x256xf32, #tpu.memory_space<vmem>>, vector<8x256xf32>,
    %337 = vector.extract_strided_slice %334 {offsets = [0, 0], sizes = [1, 16], strides = [1, 1]} : vector<16x32xf32> to vector<1x16xf32>
    %c0_32 = arith.constant 0 : index
    %c0_33 = arith.constant 0 : index
    %338 = vector.load %arg26[%c0_32, %c0_33] : memref<8x256xf32, #tpu.memory_space<vmem>>, vector<1x16xf32>
    tpu.vector_store %arg26[%c0_32, %c0_33], %337 {strides = array<i32>} : memref<8x256xf32, #tpu.memory_space<vmem>>, vector<1x16xf32>,
    %339 = vector.extract_strided_slice %334 {offsets = [0, 16], sizes = [1, 16], strides = [1, 1]} : vector<16x32xf32> to vector<1x16xf32>
    %c1 = arith.constant 1 : index
    %c0_34 = arith.constant 0 : index
    %340 = vector.load %arg26[%c1, %c0_34] : memref<8x256xf32, #tpu.memory_space<vmem>>, vector<1x16xf32>
    tpu.vector_store %arg26[%c1, %c0_34], %339 {strides = array<i32>} : memref<8x256xf32, #tpu.memory_space<vmem>>, vector<1x16xf32>,
    %341 = vector.extract_strided_slice %334 {offsets = [1, 0], sizes = [1, 16], strides = [1, 1]} : vector<16x32xf32> to vector<1x16xf32>
    %c0_35 = arith.constant 0 : index
    %c16 = arith.constant 16 : index
    %342 = vector.load %arg26[%c0_35, %c16] : memref<8x256xf32, #tpu.memory_space<vmem>>, vector<1x16xf32>
    tpu.vector_store %arg26[%c0_35, %c16], %341 {strides = array<i32>} : memref<8x256xf32, #tpu.memory_space<vmem>>, vector<1x16xf32>,
    %343 = vector.extract_strided_slice %334 {offsets = [1, 16], sizes = [1, 16], strides = [1, 1]} : vector<16x32xf32> to vector<1x16xf32>
    %c1_36 = arith.constant 1 : index
    %c16_37 = arith.constant 16 : index
    %344 = vector.load %arg26[%c1_36, %c16_37] : memref<8x256xf32, #tpu.memory_space<vmem>>, vector<1x16xf32>
    tpu.vector_store %arg26[%c1_36, %c16_37], %343 {strides = array<i32>} : memref<8x256xf32, #tpu.memory_space<vmem>>, vector<1x16xf32>,
    %345 = vector.extract_strided_slice %334 {offsets = [2, 0], sizes = [1, 16], strides = [1, 1]} : vector<16x32xf32> to vector<1x16xf32>
    %c0_38 = arith.constant 0 : index
    %c32 = arith.constant 32 : index
    %346 = vector.load %arg26[%c0_38, %c32] : memref<8x256xf32, #tpu.memory_space<vmem>>, vector<1x16xf32>
    tpu.vector_store %arg26[%c0_38, %c32], %345 {strides = array<i32>} : memref<8x256xf32, #tpu.memory_space<vmem>>, vector<1x16xf32>,
    %347 = vector.extract_strided_slice %334 {offsets = [2, 16], sizes = [1, 16], strides = [1, 1]} : vector<16x32xf32> to vector<1x16xf32>
    %c1_39 = arith.constant 1 : index
    %c32_40 = arith.constant 32 : index
    %348 = vector.load %arg26[%c1_39, %c32_40] : memref<8x256xf32, #tpu.memory_space<vmem>>, vector<1x16xf32>
    tpu.vector_store %arg26[%c1_39, %c32_40], %347 {strides = array<i32>} : memref<8x256xf32, #tpu.memory_space<vmem>>, vector<1x16xf32>,
    %349 = vector.extract_strided_slice %334 {offsets = [3, 0], sizes = [1, 16], strides = [1, 1]} : vector<16x32xf32> to vector<1x16xf32>
    %c0_41 = arith.constant 0 : index
    %c48 = arith.constant 48 : index
    %350 = vector.load %arg26[%c0_41, %c48] : memref<8x256xf32, #tpu.memory_space<vmem>>, vector<1x16xf32>
    tpu.vector_store %arg26[%c0_41, %c48], %349 {strides = array<i32>} : memref<8x256xf32, #tpu.memory_space<vmem>>, vector<1x16xf32>,
    %351 = vector.extract_strided_slice %334 {offsets = [3, 16], sizes = [1, 16], strides = [1, 1]} : vector<16x32xf32> to vector<1x16xf32>
    %c1_42 = arith.constant 1 : index
    %c48_43 = arith.constant 48 : index
    %352 = vector.load %arg26[%c1_42, %c48_43] : memref<8x256xf32, #tpu.memory_space<vmem>>, vector<1x16xf32>
    tpu.vector_store %arg26[%c1_42, %c48_43], %351 {strides = array<i32>} : memref<8x256xf32, #tpu.memory_space<vmem>>, vector<1x16xf32>,
    %353 = vector.extract_strided_slice %334 {offsets = [4, 0], sizes = [1, 16], strides = [1, 1]} : vector<16x32xf32> to vector<1x16xf32>
    %c0_44 = arith.constant 0 : index
    %c64 = arith.constant 64 : index
    %354 = vector.load %arg26[%c0_44, %c64] : memref<8x256xf32, #tpu.memory_space<vmem>>, vector<1x16xf32>
    tpu.vector_store %arg26[%c0_44, %c64], %353 {strides = array<i32>} : memref<8x256xf32, #tpu.memory_space<vmem>>, vector<1x16xf32>,
    %355 = vector.extract_strided_slice %334 {offsets = [4, 16], sizes = [1, 16], strides = [1, 1]} : vector<16x32xf32> to vector<1x16xf32>
    %c1_45 = arith.constant 1 : index
    %c64_46 = arith.constant 64 : index
    %356 = vector.load %arg26[%c1_45, %c64_46] : memref<8x256xf32, #tpu.memory_space<vmem>>, vector<1x16xf32>
    tpu.vector_store %arg26[%c1_45, %c64_46], %355 {strides = array<i32>} : memref<8x256xf32, #tpu.memory_space<vmem>>, vector<1x16xf32>,
    %357 = vector.extract_strided_slice %334 {offsets = [5, 0], sizes = [1, 16], strides = [1, 1]} : vector<16x32xf32> to vector<1x16xf32>
    %c0_47 = arith.constant 0 : index
    %c80 = arith.constant 80 : index
    %358 = vector.load %arg26[%c0_47, %c80] : memref<8x256xf32, #tpu.memory_space<vmem>>, vector<1x16xf32>
    tpu.vector_store %arg26[%c0_47, %c80], %357 {strides = array<i32>} : memref<8x256xf32, #tpu.memory_space<vmem>>, vector<1x16xf32>,
    %359 = vector.extract_strided_slice %334 {offsets = [5, 16], sizes = [1, 16], strides = [1, 1]} : vector<16x32xf32> to vector<1x16xf32>
    %c1_48 = arith.constant 1 : index
    %c80_49 = arith.constant 80 : index
    %360 = vector.load %arg26[%c1_48, %c80_49] : memref<8x256xf32, #tpu.memory_space<vmem>>, vector<1x16xf32>
    tpu.vector_store %arg26[%c1_48, %c80_49], %359 {strides = array<i32>} : memref<8x256xf32, #tpu.memory_space<vmem>>, vector<1x16xf32>,
    %361 = vector.extract_strided_slice %334 {offsets = [6, 0], sizes = [1, 16], strides = [1, 1]} : vector<16x32xf32> to vector<1x16xf32>
    %c0_50 = arith.constant 0 : index
    %c96 = arith.constant 96 : index
    %362 = vector.load %arg26[%c0_50, %c96] : memref<8x256xf32, #tpu.memory_space<vmem>>, vector<1x16xf32>
    tpu.vector_store %arg26[%c0_50, %c96], %361 {strides = array<i32>} : memref<8x256xf32, #tpu.memory_space<vmem>>, vector<1x16xf32>,
    %363 = vector.extract_strided_slice %334 {offsets = [6, 16], sizes = [1, 16], strides = [1, 1]} : vector<16x32xf32> to vector<1x16xf32>
    %c1_51 = arith.constant 1 : index
    %c96_52 = arith.constant 96 : index
    %364 = vector.load %arg26[%c1_51, %c96_52] : memref<8x256xf32, #tpu.memory_space<vmem>>, vector<1x16xf32>
    tpu.vector_store %arg26[%c1_51, %c96_52], %363 {strides = array<i32>} : memref<8x256xf32, #tpu.memory_space<vmem>>, vector<1x16xf32>,
    %365 = vector.extract_strided_slice %334 {offsets = [7, 0], sizes = [1, 16], strides = [1, 1]} : vector<16x32xf32> to vector<1x16xf32>
    %c0_53 = arith.constant 0 : index
    %c112 = arith.constant 112 : index
    %366 = vector.load %arg26[%c0_53, %c112] : memref<8x256xf32, #tpu.memory_space<vmem>>, vector<1x16xf32>
    tpu.vector_store %arg26[%c0_53, %c112], %365 {strides = array<i32>} : memref<8x256xf32, #tpu.memory_space<vmem>>, vector<1x16xf32>,
    %367 = vector.extract_strided_slice %334 {offsets = [7, 16], sizes = [1, 16], strides = [1, 1]} : vector<16x32xf32> to vector<1x16xf32>
    %c1_54 = arith.constant 1 : index
    %c112_55 = arith.constant 112 : index
    %368 = vector.load %arg26[%c1_54, %c112_55] : memref<8x256xf32, #tpu.memory_space<vmem>>, vector<1x16xf32>
    tpu.vector_store %arg26[%c1_54, %c112_55], %367 {strides = array<i32>} : memref<8x256xf32, #tpu.memory_space<vmem>>, vector<1x16xf32>,
    %369 = vector.extract_strided_slice %334 {offsets = [8, 0], sizes = [1, 16], strides = [1, 1]} : vector<16x32xf32> to vector<1x16xf32>
    %c0_56 = arith.constant 0 : index
    %c128 = arith.constant 128 : index
    %370 = vector.load %arg26[%c0_56, %c128] : memref<8x256xf32, #tpu.memory_space<vmem>>, vector<1x16xf32>
    tpu.vector_store %arg26[%c0_56, %c128], %369 {strides = array<i32>} : memref<8x256xf32, #tpu.memory_space<vmem>>, vector<1x16xf32>,
    %371 = vector.extract_strided_slice %334 {offsets = [8, 16], sizes = [1, 16], strides = [1, 1]} : vector<16x32xf32> to vector<1x16xf32>
    %c1_57 = arith.constant 1 : index
    %c128_58 = arith.constant 128 : index
    %372 = vector.load %arg26[%c1_57, %c128_58] : memref<8x256xf32, #tpu.memory_space<vmem>>, vector<1x16xf32>
    tpu.vector_store %arg26[%c1_57, %c128_58], %371 {strides = array<i32>} : memref<8x256xf32, #tpu.memory_space<vmem>>, vector<1x16xf32>,
    %373 = vector.extract_strided_slice %334 {offsets = [9, 0], sizes = [1, 16], strides = [1, 1]} : vector<16x32xf32> to vector<1x16xf32>
    %c0_59 = arith.constant 0 : index
    %c144 = arith.constant 144 : index
    %374 = vector.load %arg26[%c0_59, %c144] : memref<8x256xf32, #tpu.memory_space<vmem>>, vector<1x16xf32>
    tpu.vector_store %arg26[%c0_59, %c144], %373 {strides = array<i32>} : memref<8x256xf32, #tpu.memory_space<vmem>>, vector<1x16xf32>,
    %375 = vector.extract_strided_slice %334 {offsets = [9, 16], sizes = [1, 16], strides = [1, 1]} : vector<16x32xf32> to vector<1x16xf32>
    %c1_60 = arith.constant 1 : index
    %c144_61 = arith.constant 144 : index
    %376 = vector.load %arg26[%c1_60, %c144_61] : memref<8x256xf32, #tpu.memory_space<vmem>>, vector<1x16xf32>
    tpu.vector_store %arg26[%c1_60, %c144_61], %375 {strides = array<i32>} : memref<8x256xf32, #tpu.memory_space<vmem>>, vector<1x16xf32>,
    %377 = vector.extract_strided_slice %334 {offsets = [10, 0], sizes = [1, 16], strides = [1, 1]} : vector<16x32xf32> to vector<1x16xf32>
    %c0_62 = arith.constant 0 : index
    %c160 = arith.constant 160 : index
    %378 = vector.load %arg26[%c0_62, %c160] : memref<8x256xf32, #tpu.memory_space<vmem>>, vector<1x16xf32>
    tpu.vector_store %arg26[%c0_62, %c160], %377 {strides = array<i32>} : memref<8x256xf32, #tpu.memory_space<vmem>>, vector<1x16xf32>,
    %379 = vector.extract_strided_slice %334 {offsets = [10, 16], sizes = [1, 16], strides = [1, 1]} : vector<16x32xf32> to vector<1x16xf32>
    %c1_63 = arith.constant 1 : index
    %c160_64 = arith.constant 160 : index
    %380 = vector.load %arg26[%c1_63, %c160_64] : memref<8x256xf32, #tpu.memory_space<vmem>>, vector<1x16xf32>
    tpu.vector_store %arg26[%c1_63, %c160_64], %379 {strides = array<i32>} : memref<8x256xf32, #tpu.memory_space<vmem>>, vector<1x16xf32>,
    %381 = vector.extract_strided_slice %334 {offsets = [11, 0], sizes = [1, 16], strides = [1, 1]} : vector<16x32xf32> to vector<1x16xf32>
    %c0_65 = arith.constant 0 : index
    %c176 = arith.constant 176 : index
    %382 = vector.load %arg26[%c0_65, %c176] : memref<8x256xf32, #tpu.memory_space<vmem>>, vector<1x16xf32>
    tpu.vector_store %arg26[%c0_65, %c176], %381 {strides = array<i32>} : memref<8x256xf32, #tpu.memory_space<vmem>>, vector<1x16xf32>,
    %383 = vector.extract_strided_slice %334 {offsets = [11, 16], sizes = [1, 16], strides = [1, 1]} : vector<16x32xf32> to vector<1x16xf32>
    %c1_66 = arith.constant 1 : index
    %c176_67 = arith.constant 176 : index
    %384 = vector.load %arg26[%c1_66, %c176_67] : memref<8x256xf32, #tpu.memory_space<vmem>>, vector<1x16xf32>
    tpu.vector_store %arg26[%c1_66, %c176_67], %383 {strides = array<i32>} : memref<8x256xf32, #tpu.memory_space<vmem>>, vector<1x16xf32>,
    %385 = vector.extract_strided_slice %334 {offsets = [12, 0], sizes = [1, 16], strides = [1, 1]} : vector<16x32xf32> to vector<1x16xf32>
    %c0_68 = arith.constant 0 : index
    %c192 = arith.constant 192 : index
    %386 = vector.load %arg26[%c0_68, %c192] : memref<8x256xf32, #tpu.memory_space<vmem>>, vector<1x16xf32>
    tpu.vector_store %arg26[%c0_68, %c192], %385 {strides = array<i32>} : memref<8x256xf32, #tpu.memory_space<vmem>>, vector<1x16xf32>,
    %387 = vector.extract_strided_slice %334 {offsets = [12, 16], sizes = [1, 16], strides = [1, 1]} : vector<16x32xf32> to vector<1x16xf32>
    %c1_69 = arith.constant 1 : index
    %c192_70 = arith.constant 192 : index
    %388 = vector.load %arg26[%c1_69, %c192_70] : memref<8x256xf32, #tpu.memory_space<vmem>>, vector<1x16xf32>
    tpu.vector_store %arg26[%c1_69, %c192_70], %387 {strides = array<i32>} : memref<8x256xf32, #tpu.memory_space<vmem>>, vector<1x16xf32>,
    %389 = vector.extract_strided_slice %334 {offsets = [13, 0], sizes = [1, 16], strides = [1, 1]} : vector<16x32xf32> to vector<1x16xf32>
    %c0_71 = arith.constant 0 : index
    %c208 = arith.constant 208 : index
    %390 = vector.load %arg26[%c0_71, %c208] : memref<8x256xf32, #tpu.memory_space<vmem>>, vector<1x16xf32>
    tpu.vector_store %arg26[%c0_71, %c208], %389 {strides = array<i32>} : memref<8x256xf32, #tpu.memory_space<vmem>>, vector<1x16xf32>,
    %391 = vector.extract_strided_slice %334 {offsets = [13, 16], sizes = [1, 16], strides = [1, 1]} : vector<16x32xf32> to vector<1x16xf32>
    %c1_72 = arith.constant 1 : index
    %c208_73 = arith.constant 208 : index
    %392 = vector.load %arg26[%c1_72, %c208_73] : memref<8x256xf32, #tpu.memory_space<vmem>>, vector<1x16xf32>
    tpu.vector_store %arg26[%c1_72, %c208_73], %391 {strides = array<i32>} : memref<8x256xf32, #tpu.memory_space<vmem>>, vector<1x16xf32>,
    %393 = vector.extract_strided_slice %334 {offsets = [14, 0], sizes = [1, 16], strides = [1, 1]} : vector<16x32xf32> to vector<1x16xf32>
    %c0_74 = arith.constant 0 : index
    %c224 = arith.constant 224 : index
    %394 = vector.load %arg26[%c0_74, %c224] : memref<8x256xf32, #tpu.memory_space<vmem>>, vector<1x16xf32>
    tpu.vector_store %arg26[%c0_74, %c224], %393 {strides = array<i32>} : memref<8x256xf32, #tpu.memory_space<vmem>>, vector<1x16xf32>,
    %395 = vector.extract_strided_slice %334 {offsets = [14, 16], sizes = [1, 16], strides = [1, 1]} : vector<16x32xf32> to vector<1x16xf32>
    %c1_75 = arith.constant 1 : index
    %c224_76 = arith.constant 224 : index
    %396 = vector.load %arg26[%c1_75, %c224_76] : memref<8x256xf32, #tpu.memory_space<vmem>>, vector<1x16xf32>
    tpu.vector_store %arg26[%c1_75, %c224_76], %395 {strides = array<i32>} : memref<8x256xf32, #tpu.memory_space<vmem>>, vector<1x16xf32>,
    %397 = vector.extract_strided_slice %334 {offsets = [15, 0], sizes = [1, 16], strides = [1, 1]} : vector<16x32xf32> to vector<1x16xf32>
    %c0_77 = arith.constant 0 : index
    %c240 = arith.constant 240 : index
    %398 = vector.load %arg26[%c0_77, %c240] : memref<8x256xf32, #tpu.memory_space<vmem>>, vector<1x16xf32>
    tpu.vector_store %arg26[%c0_77, %c240], %397 {strides = array<i32>} : memref<8x256xf32, #tpu.memory_space<vmem>>, vector<1x16xf32>,
    %399 = vector.extract_strided_slice %334 {offsets = [15, 16], sizes = [1, 16], strides = [1, 1]} : vector<16x32xf32> to vector<1x16xf32>
    %c1_78 = arith.constant 1 : index
    %c240_79 = arith.constant 240 : index
    %400 = vector.load %arg26[%c1_78, %c240_79] : memref<8x256xf32, #tpu.memory_space<vmem>>, vector<1x16xf32>
    tpu.vector_store %arg26[%c1_78, %c240_79], %399 {strides = array<i32>} : memref<8x256xf32, #tpu.memory_space<vmem>>, vector<1x16xf32>,
    %c0_80 = arith.constant 0 : index
    %c0_81 = arith.constant 0 : index
    %401 = vector.load %arg26[%c0_80, %c0_81] : memref<8x256xf32, #tpu.memory_space<vmem>>, vector<8x256xf32>
    %c0_82 = arith.constant 0 : index
    %c0_83 = arith.constant 0 : index
    %402 = vector.load %arg11[%c0_82, %c0_83] : memref<256x512xf32, #tpu.memory_space<vmem>>, vector<256x512xf32>
    %cst_84 = arith.constant dense<0.000000e+00> : vector<8x512xf32>
    %403 = tpu.matmul %401, %402, %cst_84 {dimension_numbers = #tpu.dot_dimension_numbers<[1], [0], [0], [1], [0, 0, 1, 1], [], []>} : vector<8x256xf32>, vector<256x512xf32>, vector<8x512xf32> -> vector<8x512xf32>
    %c0_85 = arith.constant 0 : index
    %c0_86 = arith.constant 0 : index
    %404 = vector.load %arg12[%c0_85, %c0_86] : memref<1x512xf32, #tpu.memory_space<vmem>>, vector<1x512xf32>
    %405 = vector.broadcast %404 : vector<1x512xf32> to vector<8x512xf32>
    %406 = arith.addf %403, %405 : vector<8x512xf32>
    %407 = vector.extract_strided_slice %406 {offsets = [0, 0], sizes = [2, 256], strides = [1, 1]} : vector<8x512xf32> to vector<2x256xf32>
    %408 = vector.extract_strided_slice %406 {offsets = [0, 256], sizes = [2, 256], strides = [1, 1]} : vector<8x512xf32> to vector<2x256xf32>
    %c0_87 = arith.constant 0 : index
    %c0_88 = arith.constant 0 : index
    %409 = vector.load %arg23[%c0_87, %c0_88] : memref<2x256xf32, #tpu.memory_space<vmem>>, vector<2x256xf32>
    tpu.vector_store %arg23[%c0_87, %c0_88], %407 {strides = array<i32>} : memref<2x256xf32, #tpu.memory_space<vmem>>, vector<2x256xf32>,
    %c0_89 = arith.constant 0 : index
    %c0_90 = arith.constant 0 : index
    %410 = vector.load %arg24[%c0_89, %c0_90] : memref<2x256xf32, #tpu.memory_space<vmem>>, vector<2x256xf32>
    tpu.vector_store %arg24[%c0_89, %c0_90], %408 {strides = array<i32>} : memref<2x256xf32, #tpu.memory_space<vmem>>, vector<2x256xf32>,
    %cst_91 = arith.constant 5.000000e-01 : f32
    %411 = vector.broadcast %cst_91 : f32 to vector<2x256xf32>
    %412 = arith.mulf %411, %408 : vector<2x256xf32>
    %413 = math.exp %412 : vector<2x256xf32>
    %c0_92 = arith.constant 0 : index
    %c0_93 = arith.constant 0 : index
    %414 = vector.load %arg2[%c0_92, %c0_93] : memref<2x256xf32, #tpu.memory_space<vmem>>, vector<2x256xf32>
    %415 = arith.mulf %413, %414 : vector<2x256xf32>
    %416 = arith.addf %407, %415 : vector<2x256xf32>
    %c0_94 = arith.constant 0 : index
    %c0_95 = arith.constant 0 : index
    %417 = vector.load %arg26[%c0_94, %c0_95] : memref<8x256xf32, #tpu.memory_space<vmem>>, vector<2x256xf32>
    tpu.vector_store %arg26[%c0_94, %c0_95], %416 {strides = array<i32>} : memref<8x256xf32, #tpu.memory_space<vmem>>, vector<2x256xf32>,
    %c0_96 = arith.constant 0 : index
    %c0_97 = arith.constant 0 : index
    %418 = vector.load %arg26[%c0_96, %c0_97] : memref<8x256xf32, #tpu.memory_space<vmem>>, vector<8x256xf32>
    %c0_98 = arith.constant 0 : index
    %c0_99 = arith.constant 0 : index
    %419 = vector.load %arg13[%c0_98, %c0_99] : memref<256x128xf32, #tpu.memory_space<vmem>>, vector<256x128xf32>
    %cst_100 = arith.constant dense<0.000000e+00> : vector<8x128xf32>
    %420 = tpu.matmul %418, %419, %cst_100 {dimension_numbers = #tpu.dot_dimension_numbers<[1], [0], [0], [1], [0, 0, 1, 1], [], []>} : vector<8x256xf32>, vector<256x128xf32>, vector<8x128xf32> -> vector<8x128xf32>
    %c0_101 = arith.constant 0 : index
    %c0_102 = arith.constant 0 : index
    %421 = vector.load %arg14[%c0_101, %c0_102] : memref<1x128xf32, #tpu.memory_space<vmem>>, vector<1x128xf32>
    %422 = vector.broadcast %421 : vector<1x128xf32> to vector<8x128xf32>
    %423 = arith.addf %420, %422 : vector<8x128xf32>
    %424 = vector.extract_strided_slice %423 {offsets = [0, 0], sizes = [2, 128], strides = [1, 1]} : vector<8x128xf32> to vector<2x128xf32>
    %cst_103 = arith.constant 0.000000e+00 : f32
    %425 = vector.broadcast %cst_103 : f32 to vector<2x128xf32>
    %426 = arith.maximumf %424, %425 : vector<2x128xf32>
    %427 = vector.extract_strided_slice %426 {offsets = [0, 0], sizes = [1, 16], strides = [1, 1]} : vector<2x128xf32> to vector<1x16xf32>
    %c0_104 = arith.constant 0 : index
    %c0_105 = arith.constant 0 : index
    %428 = vector.load %arg27[%c0_104, %c0_105] : memref<16x16xf32, #tpu.memory_space<vmem>>, vector<1x16xf32>
    tpu.vector_store %arg27[%c0_104, %c0_105], %427 {strides = array<i32>} : memref<16x16xf32, #tpu.memory_space<vmem>>, vector<1x16xf32>,
    %429 = vector.extract_strided_slice %426 {offsets = [0, 16], sizes = [1, 16], strides = [1, 1]} : vector<2x128xf32> to vector<1x16xf32>
    %c1_106 = arith.constant 1 : index
    %c0_107 = arith.constant 0 : index
    %430 = vector.load %arg27[%c1_106, %c0_107] : memref<16x16xf32, #tpu.memory_space<vmem>>, vector<1x16xf32>
    tpu.vector_store %arg27[%c1_106, %c0_107], %429 {strides = array<i32>} : memref<16x16xf32, #tpu.memory_space<vmem>>, vector<1x16xf32>,
    %431 = vector.extract_strided_slice %426 {offsets = [0, 32], sizes = [1, 16], strides = [1, 1]} : vector<2x128xf32> to vector<1x16xf32>
    %c2 = arith.constant 2 : index
    %c0_108 = arith.constant 0 : index
    %432 = vector.load %arg27[%c2, %c0_108] : memref<16x16xf32, #tpu.memory_space<vmem>>, vector<1x16xf32>
    tpu.vector_store %arg27[%c2, %c0_108], %431 {strides = array<i32>} : memref<16x16xf32, #tpu.memory_space<vmem>>, vector<1x16xf32>,
    %433 = vector.extract_strided_slice %426 {offsets = [0, 48], sizes = [1, 16], strides = [1, 1]} : vector<2x128xf32> to vector<1x16xf32>
    %c3 = arith.constant 3 : index
    %c0_109 = arith.constant 0 : index
    %434 = vector.load %arg27[%c3, %c0_109] : memref<16x16xf32, #tpu.memory_space<vmem>>, vector<1x16xf32>
    tpu.vector_store %arg27[%c3, %c0_109], %433 {strides = array<i32>} : memref<16x16xf32, #tpu.memory_space<vmem>>, vector<1x16xf32>,
    %435 = vector.extract_strided_slice %426 {offsets = [0, 64], sizes = [1, 16], strides = [1, 1]} : vector<2x128xf32> to vector<1x16xf32>
    %c4 = arith.constant 4 : index
    %c0_110 = arith.constant 0 : index
    %436 = vector.load %arg27[%c4, %c0_110] : memref<16x16xf32, #tpu.memory_space<vmem>>, vector<1x16xf32>
    tpu.vector_store %arg27[%c4, %c0_110], %435 {strides = array<i32>} : memref<16x16xf32, #tpu.memory_space<vmem>>, vector<1x16xf32>,
    %437 = vector.extract_strided_slice %426 {offsets = [0, 80], sizes = [1, 16], strides = [1, 1]} : vector<2x128xf32> to vector<1x16xf32>
    %c5 = arith.constant 5 : index
    %c0_111 = arith.constant 0 : index
    %438 = vector.load %arg27[%c5, %c0_111] : memref<16x16xf32, #tpu.memory_space<vmem>>, vector<1x16xf32>
    tpu.vector_store %arg27[%c5, %c0_111], %437 {strides = array<i32>} : memref<16x16xf32, #tpu.memory_space<vmem>>, vector<1x16xf32>,
    %439 = vector.extract_strided_slice %426 {offsets = [0, 96], sizes = [1, 16], strides = [1, 1]} : vector<2x128xf32> to vector<1x16xf32>
    %c6 = arith.constant 6 : index
    %c0_112 = arith.constant 0 : index
    %440 = vector.load %arg27[%c6, %c0_112] : memref<16x16xf32, #tpu.memory_space<vmem>>, vector<1x16xf32>
    tpu.vector_store %arg27[%c6, %c0_112], %439 {strides = array<i32>} : memref<16x16xf32, #tpu.memory_space<vmem>>, vector<1x16xf32>,
    %441 = vector.extract_strided_slice %426 {offsets = [0, 112], sizes = [1, 16], strides = [1, 1]} : vector<2x128xf32> to vector<1x16xf32>
    %c7 = arith.constant 7 : index
    %c0_113 = arith.constant 0 : index
    %442 = vector.load %arg27[%c7, %c0_113] : memref<16x16xf32, #tpu.memory_space<vmem>>, vector<1x16xf32>
    tpu.vector_store %arg27[%c7, %c0_113], %441 {strides = array<i32>} : memref<16x16xf32, #tpu.memory_space<vmem>>, vector<1x16xf32>,
    %443 = vector.extract_strided_slice %426 {offsets = [1, 0], sizes = [1, 16], strides = [1, 1]} : vector<2x128xf32> to vector<1x16xf32>
    %c8 = arith.constant 8 : index
    %c0_114 = arith.constant 0 : index
    %444 = vector.load %arg27[%c8, %c0_114] : memref<16x16xf32, #tpu.memory_space<vmem>>, vector<1x16xf32>
    tpu.vector_store %arg27[%c8, %c0_114], %443 {strides = array<i32>} : memref<16x16xf32, #tpu.memory_space<vmem>>, vector<1x16xf32>,
    %445 = vector.extract_strided_slice %426 {offsets = [1, 16], sizes = [1, 16], strides = [1, 1]} : vector<2x128xf32> to vector<1x16xf32>
    %c9 = arith.constant 9 : index
    %c0_115 = arith.constant 0 : index
    %446 = vector.load %arg27[%c9, %c0_115] : memref<16x16xf32, #tpu.memory_space<vmem>>, vector<1x16xf32>
    tpu.vector_store %arg27[%c9, %c0_115], %445 {strides = array<i32>} : memref<16x16xf32, #tpu.memory_space<vmem>>, vector<1x16xf32>,
    %447 = vector.extract_strided_slice %426 {offsets = [1, 32], sizes = [1, 16], strides = [1, 1]} : vector<2x128xf32> to vector<1x16xf32>
    %c10 = arith.constant 10 : index
    %c0_116 = arith.constant 0 : index
    %448 = vector.load %arg27[%c10, %c0_116] : memref<16x16xf32, #tpu.memory_space<vmem>>, vector<1x16xf32>
    tpu.vector_store %arg27[%c10, %c0_116], %447 {strides = array<i32>} : memref<16x16xf32, #tpu.memory_space<vmem>>, vector<1x16xf32>,
    %449 = vector.extract_strided_slice %426 {offsets = [1, 48], sizes = [1, 16], strides = [1, 1]} : vector<2x128xf32> to vector<1x16xf32>
    %c11 = arith.constant 11 : index
    %c0_117 = arith.constant 0 : index
    %450 = vector.load %arg27[%c11, %c0_117] : memref<16x16xf32, #tpu.memory_space<vmem>>, vector<1x16xf32>
    tpu.vector_store %arg27[%c11, %c0_117], %449 {strides = array<i32>} : memref<16x16xf32, #tpu.memory_space<vmem>>, vector<1x16xf32>,
    %451 = vector.extract_strided_slice %426 {offsets = [1, 64], sizes = [1, 16], strides = [1, 1]} : vector<2x128xf32> to vector<1x16xf32>
    %c12 = arith.constant 12 : index
    %c0_118 = arith.constant 0 : index
    %452 = vector.load %arg27[%c12, %c0_118] : memref<16x16xf32, #tpu.memory_space<vmem>>, vector<1x16xf32>
    tpu.vector_store %arg27[%c12, %c0_118], %451 {strides = array<i32>} : memref<16x16xf32, #tpu.memory_space<vmem>>, vector<1x16xf32>,
    %453 = vector.extract_strided_slice %426 {offsets = [1, 80], sizes = [1, 16], strides = [1, 1]} : vector<2x128xf32> to vector<1x16xf32>
    %c13 = arith.constant 13 : index
    %c0_119 = arith.constant 0 : index
    %454 = vector.load %arg27[%c13, %c0_119] : memref<16x16xf32, #tpu.memory_space<vmem>>, vector<1x16xf32>
    tpu.vector_store %arg27[%c13, %c0_119], %453 {strides = array<i32>} : memref<16x16xf32, #tpu.memory_space<vmem>>, vector<1x16xf32>,
    %455 = vector.extract_strided_slice %426 {offsets = [1, 96], sizes = [1, 16], strides = [1, 1]} : vector<2x128xf32> to vector<1x16xf32>
    %c14 = arith.constant 14 : index
    %c0_120 = arith.constant 0 : index
    %456 = vector.load %arg27[%c14, %c0_120] : memref<16x16xf32, #tpu.memory_space<vmem>>, vector<1x16xf32>
    tpu.vector_store %arg27[%c14, %c0_120], %455 {strides = array<i32>} : memref<16x16xf32, #tpu.memory_space<vmem>>, vector<1x16xf32>,
    %457 = vector.extract_strided_slice %426 {offsets = [1, 112], sizes = [1, 16], strides = [1, 1]} : vector<2x128xf32> to vector<1x16xf32>
    %c15 = arith.constant 15 : index
    %c0_121 = arith.constant 0 : index
    %458 = vector.load %arg27[%c15, %c0_121] : memref<16x16xf32, #tpu.memory_space<vmem>>, vector<1x16xf32>
    tpu.vector_store %arg27[%c15, %c0_121], %457 {strides = array<i32>} : memref<16x16xf32, #tpu.memory_space<vmem>>, vector<1x16xf32>,
    %c0_122 = arith.constant 0 : index
    %c0_123 = arith.constant 0 : index
    %459 = vector.load %arg27[%c0_122, %c0_123] : memref<16x16xf32, #tpu.memory_space<vmem>>, vector<16x16xf32>
    %c0_124 = arith.constant 0 : index
    %c0_125 = arith.constant 0 : index
    %460 = vector.load %arg15[%c0_124, %c0_125] : memref<8x1xf32, #tpu.memory_space<vmem>>, vector<8x1xf32>
    %cst_126 = arith.constant 0.000000e+00 : f32
    %461 = vector.broadcast %cst_126 : f32 to vector<8x1xf32>
    %462 = arith.maximumf %460, %461 : vector<8x1xf32>
    %cst_127 = arith.constant dense<0.000000e+00> : vector<16xf32>
    %463 = vector.multi_reduction <add>, %459, %cst_127 [1] : vector<16x16xf32> to vector<16xf32>
    %464 = vector.shape_cast %463 : vector<16xf32> to vector<16x1xf32>
    %465 = arith.mulf %459, %459 : vector<16x16xf32>
    %cst_128 = arith.constant dense<0.000000e+00> : vector<16xf32>
    %466 = vector.multi_reduction <add>, %465, %cst_128 [1] : vector<16x16xf32> to vector<16xf32>
    %467 = vector.shape_cast %466 : vector<16xf32> to vector<16x1xf32>
    %468 = vector.extract_strided_slice %464 {offsets = [0, 0], sizes = [8, 1], strides = [1, 1]} : vector<16x1xf32> to vector<8x1xf32>
    %469 = vector.extract_strided_slice %464 {offsets = [8, 0], sizes = [8, 1], strides = [1, 1]} : vector<16x1xf32> to vector<8x1xf32>
    %470 = arith.addf %468, %469 : vector<8x1xf32>
    %cst_129 = arith.constant 4.800000e+02 : f32
    %471 = vector.broadcast %cst_129 : f32 to vector<8x1xf32>
    %472 = arith.mulf %471, %462 : vector<8x1xf32>
    %473 = arith.addf %470, %472 : vector<8x1xf32>
    %474 = vector.extract_strided_slice %467 {offsets = [0, 0], sizes = [8, 1], strides = [1, 1]} : vector<16x1xf32> to vector<8x1xf32>
    %475 = vector.extract_strided_slice %467 {offsets = [8, 0], sizes = [8, 1], strides = [1, 1]} : vector<16x1xf32> to vector<8x1xf32>
    %476 = arith.addf %474, %475 : vector<8x1xf32>
    %cst_130 = arith.constant 4.800000e+02 : f32
    %477 = vector.broadcast %cst_130 : f32 to vector<8x1xf32>
    %478 = arith.mulf %477, %462 : vector<8x1xf32>
    %479 = arith.mulf %478, %462 : vector<8x1xf32>
    %480 = arith.addf %476, %479 : vector<8x1xf32>
    %cst_131 = arith.constant 0.001953125 : f32
    %481 = vector.broadcast %cst_131 : f32 to vector<8x1xf32>
    %482 = arith.mulf %473, %481 : vector<8x1xf32>
    %cst_132 = arith.constant 0.001953125 : f32
    %483 = vector.broadcast %cst_132 : f32 to vector<8x1xf32>
    %484 = arith.mulf %480, %483 : vector<8x1xf32>
    %485 = arith.mulf %482, %482 : vector<8x1xf32>
    %486 = arith.subf %484, %485 : vector<8x1xf32>
    %cst_133 = arith.constant 9.99999974E-6 : f32
    %487 = vector.broadcast %cst_133 : f32 to vector<8x1xf32>
    %488 = arith.addf %486, %487 : vector<8x1xf32>
    %489 = math.rsqrt %488 : vector<8x1xf32>
    %c0_134 = arith.constant 0 : index
    %c0_135 = arith.constant 0 : index
    %490 = vector.load %arg16[%c0_134, %c0_135] : memref<8x1xf32, #tpu.memory_space<vmem>>, vector<8x1xf32>
    %491 = arith.mulf %489, %490 : vector<8x1xf32>
    %492 = arith.subf %462, %482 : vector<8x1xf32>
    %493 = arith.mulf %492, %491 : vector<8x1xf32>
    %c0_136 = arith.constant 0 : index
    %c0_137 = arith.constant 0 : index
    %494 = vector.load %arg17[%c0_136, %c0_137] : memref<8x1xf32, #tpu.memory_space<vmem>>, vector<8x1xf32>
    %495 = arith.addf %493, %494 : vector<8x1xf32>
    %496 = tpu.concatenate %482, %482 in 0 : vector<8x1xf32>, vector<8x1xf32> -> vector<16x1xf32>
    %497 = tpu.concatenate %491, %491 in 0 : vector<8x1xf32>, vector<8x1xf32> -> vector<16x1xf32>
    %c0_138 = arith.constant 0 : index
    %c0_139 = arith.constant 0 : index
    %498 = vector.load %arg17[%c0_138, %c0_139] : memref<8x1xf32, #tpu.memory_space<vmem>>, vector<8x1xf32>
    %c0_140 = arith.constant 0 : index
    %c0_141 = arith.constant 0 : index
    %499 = vector.load %arg17[%c0_140, %c0_141] : memref<8x1xf32, #tpu.memory_space<vmem>>, vector<8x1xf32>
    %500 = tpu.concatenate %498, %499 in 0 : vector<8x1xf32>, vector<8x1xf32> -> vector<16x1xf32>
    %501 = tpu.concatenate %495, %495 in 0 : vector<8x1xf32>, vector<8x1xf32> -> vector<16x1xf32>
    %502 = vector.broadcast %496 : vector<16x1xf32> to vector<16x16xf32>
    %503 = arith.subf %459, %502 : vector<16x16xf32>
    %504 = vector.broadcast %497 : vector<16x1xf32> to vector<16x16xf32>
    %505 = arith.mulf %503, %504 : vector<16x16xf32>
    %506 = vector.broadcast %500 : vector<16x1xf32> to vector<16x16xf32>
    %507 = arith.addf %505, %506 : vector<16x16xf32>
    %508 = vector.broadcast %501 : vector<16x1xf32> to vector<16x16xf32>
    %509 = arith.subf %507, %508 : vector<16x16xf32>
    %c0_142 = arith.constant 0 : index
    %c0_143 = arith.constant 0 : index
    %510 = vector.load %arg18[%c0_142, %c0_143] : memref<16x256xf32, #tpu.memory_space<vmem>>, vector<16x256xf32>
    %511 = vector.extract_strided_slice %509 {offsets = [0, 0], sizes = [16, 1], strides = [1, 1]} : vector<16x16xf32> to vector<16x1xf32>
    %512 = vector.extract_strided_slice %510 {offsets = [0, 0], sizes = [1, 256], strides = [1, 1]} : vector<16x256xf32> to vector<1x256xf32>
    %513 = vector.broadcast %511 : vector<16x1xf32> to vector<16x256xf32>
    %514 = vector.broadcast %512 : vector<1x256xf32> to vector<16x256xf32>
    %515 = arith.mulf %513, %514 : vector<16x256xf32>
    %516 = vector.extract_strided_slice %509 {offsets = [0, 1], sizes = [16, 1], strides = [1, 1]} : vector<16x16xf32> to vector<16x1xf32>
    %517 = vector.extract_strided_slice %510 {offsets = [1, 0], sizes = [1, 256], strides = [1, 1]} : vector<16x256xf32> to vector<1x256xf32>
    %518 = vector.broadcast %516 : vector<16x1xf32> to vector<16x256xf32>
    %519 = vector.broadcast %517 : vector<1x256xf32> to vector<16x256xf32>
    %520 = arith.mulf %518, %519 : vector<16x256xf32>
    %521 = arith.addf %515, %520 : vector<16x256xf32>
    %522 = vector.extract_strided_slice %509 {offsets = [0, 2], sizes = [16, 1], strides = [1, 1]} : vector<16x16xf32> to vector<16x1xf32>
    %523 = vector.extract_strided_slice %510 {offsets = [2, 0], sizes = [1, 256], strides = [1, 1]} : vector<16x256xf32> to vector<1x256xf32>
    %524 = vector.broadcast %522 : vector<16x1xf32> to vector<16x256xf32>
    %525 = vector.broadcast %523 : vector<1x256xf32> to vector<16x256xf32>
    %526 = arith.mulf %524, %525 : vector<16x256xf32>
    %527 = arith.addf %521, %526 : vector<16x256xf32>
    %528 = vector.extract_strided_slice %509 {offsets = [0, 3], sizes = [16, 1], strides = [1, 1]} : vector<16x16xf32> to vector<16x1xf32>
    %529 = vector.extract_strided_slice %510 {offsets = [3, 0], sizes = [1, 256], strides = [1, 1]} : vector<16x256xf32> to vector<1x256xf32>
    %530 = vector.broadcast %528 : vector<16x1xf32> to vector<16x256xf32>
    %531 = vector.broadcast %529 : vector<1x256xf32> to vector<16x256xf32>
    %532 = arith.mulf %530, %531 : vector<16x256xf32>
    %533 = arith.addf %527, %532 : vector<16x256xf32>
    %534 = vector.extract_strided_slice %509 {offsets = [0, 4], sizes = [16, 1], strides = [1, 1]} : vector<16x16xf32> to vector<16x1xf32>
    %535 = vector.extract_strided_slice %510 {offsets = [4, 0], sizes = [1, 256], strides = [1, 1]} : vector<16x256xf32> to vector<1x256xf32>
    %536 = vector.broadcast %534 : vector<16x1xf32> to vector<16x256xf32>
    %537 = vector.broadcast %535 : vector<1x256xf32> to vector<16x256xf32>
    %538 = arith.mulf %536, %537 : vector<16x256xf32>
    %539 = arith.addf %533, %538 : vector<16x256xf32>
    %540 = vector.extract_strided_slice %509 {offsets = [0, 5], sizes = [16, 1], strides = [1, 1]} : vector<16x16xf32> to vector<16x1xf32>
    %541 = vector.extract_strided_slice %510 {offsets = [5, 0], sizes = [1, 256], strides = [1, 1]} : vector<16x256xf32> to vector<1x256xf32>
    %542 = vector.broadcast %540 : vector<16x1xf32> to vector<16x256xf32>
    %543 = vector.broadcast %541 : vector<1x256xf32> to vector<16x256xf32>
    %544 = arith.mulf %542, %543 : vector<16x256xf32>
    %545 = arith.addf %539, %544 : vector<16x256xf32>
    %546 = vector.extract_strided_slice %509 {offsets = [0, 6], sizes = [16, 1], strides = [1, 1]} : vector<16x16xf32> to vector<16x1xf32>
    %547 = vector.extract_strided_slice %510 {offsets = [6, 0], sizes = [1, 256], strides = [1, 1]} : vector<16x256xf32> to vector<1x256xf32>
    %548 = vector.broadcast %546 : vector<16x1xf32> to vector<16x256xf32>
    %549 = vector.broadcast %547 : vector<1x256xf32> to vector<16x256xf32>
    %550 = arith.mulf %548, %549 : vector<16x256xf32>
    %551 = arith.addf %545, %550 : vector<16x256xf32>
    %552 = vector.extract_strided_slice %509 {offsets = [0, 7], sizes = [16, 1], strides = [1, 1]} : vector<16x16xf32> to vector<16x1xf32>
    %553 = vector.extract_strided_slice %510 {offsets = [7, 0], sizes = [1, 256], strides = [1, 1]} : vector<16x256xf32> to vector<1x256xf32>
    %554 = vector.broadcast %552 : vector<16x1xf32> to vector<16x256xf32>
    %555 = vector.broadcast %553 : vector<1x256xf32> to vector<16x256xf32>
    %556 = arith.mulf %554, %555 : vector<16x256xf32>
    %557 = arith.addf %551, %556 : vector<16x256xf32>
    %558 = vector.extract_strided_slice %509 {offsets = [0, 8], sizes = [16, 1], strides = [1, 1]} : vector<16x16xf32> to vector<16x1xf32>
    %559 = vector.extract_strided_slice %510 {offsets = [8, 0], sizes = [1, 256], strides = [1, 1]} : vector<16x256xf32> to vector<1x256xf32>
    %560 = vector.broadcast %558 : vector<16x1xf32> to vector<16x256xf32>
    %561 = vector.broadcast %559 : vector<1x256xf32> to vector<16x256xf32>
    %562 = arith.mulf %560, %561 : vector<16x256xf32>
    %563 = arith.addf %557, %562 : vector<16x256xf32>
    %564 = vector.extract_strided_slice %509 {offsets = [0, 9], sizes = [16, 1], strides = [1, 1]} : vector<16x16xf32> to vector<16x1xf32>
    %565 = vector.extract_strided_slice %510 {offsets = [9, 0], sizes = [1, 256], strides = [1, 1]} : vector<16x256xf32> to vector<1x256xf32>
    %566 = vector.broadcast %564 : vector<16x1xf32> to vector<16x256xf32>
    %567 = vector.broadcast %565 : vector<1x256xf32> to vector<16x256xf32>
    %568 = arith.mulf %566, %567 : vector<16x256xf32>
    %569 = arith.addf %563, %568 : vector<16x256xf32>
    %570 = vector.extract_strided_slice %509 {offsets = [0, 10], sizes = [16, 1], strides = [1, 1]} : vector<16x16xf32> to vector<16x1xf32>
    %571 = vector.extract_strided_slice %510 {offsets = [10, 0], sizes = [1, 256], strides = [1, 1]} : vector<16x256xf32> to vector<1x256xf32>
    %572 = vector.broadcast %570 : vector<16x1xf32> to vector<16x256xf32>
    %573 = vector.broadcast %571 : vector<1x256xf32> to vector<16x256xf32>
    %574 = arith.mulf %572, %573 : vector<16x256xf32>
    %575 = arith.addf %569, %574 : vector<16x256xf32>
    %576 = vector.extract_strided_slice %509 {offsets = [0, 11], sizes = [16, 1], strides = [1, 1]} : vector<16x16xf32> to vector<16x1xf32>
    %577 = vector.extract_strided_slice %510 {offsets = [11, 0], sizes = [1, 256], strides = [1, 1]} : vector<16x256xf32> to vector<1x256xf32>
    %578 = vector.broadcast %576 : vector<16x1xf32> to vector<16x256xf32>
    %579 = vector.broadcast %577 : vector<1x256xf32> to vector<16x256xf32>
    %580 = arith.mulf %578, %579 : vector<16x256xf32>
    %581 = arith.addf %575, %580 : vector<16x256xf32>
    %582 = vector.extract_strided_slice %509 {offsets = [0, 12], sizes = [16, 1], strides = [1, 1]} : vector<16x16xf32> to vector<16x1xf32>
    %583 = vector.extract_strided_slice %510 {offsets = [12, 0], sizes = [1, 256], strides = [1, 1]} : vector<16x256xf32> to vector<1x256xf32>
    %584 = vector.broadcast %582 : vector<16x1xf32> to vector<16x256xf32>
    %585 = vector.broadcast %583 : vector<1x256xf32> to vector<16x256xf32>
    %586 = arith.mulf %584, %585 : vector<16x256xf32>
    %587 = arith.addf %581, %586 : vector<16x256xf32>
    %588 = vector.extract_strided_slice %509 {offsets = [0, 13], sizes = [16, 1], strides = [1, 1]} : vector<16x16xf32> to vector<16x1xf32>
    %589 = vector.extract_strided_slice %510 {offsets = [13, 0], sizes = [1, 256], strides = [1, 1]} : vector<16x256xf32> to vector<1x256xf32>
    %590 = vector.broadcast %588 : vector<16x1xf32> to vector<16x256xf32>
    %591 = vector.broadcast %589 : vector<1x256xf32> to vector<16x256xf32>
    %592 = arith.mulf %590, %591 : vector<16x256xf32>
    %593 = arith.addf %587, %592 : vector<16x256xf32>
    %594 = vector.extract_strided_slice %509 {offsets = [0, 14], sizes = [16, 1], strides = [1, 1]} : vector<16x16xf32> to vector<16x1xf32>
    %595 = vector.extract_strided_slice %510 {offsets = [14, 0], sizes = [1, 256], strides = [1, 1]} : vector<16x256xf32> to vector<1x256xf32>
    %596 = vector.broadcast %594 : vector<16x1xf32> to vector<16x256xf32>
    %597 = vector.broadcast %595 : vector<1x256xf32> to vector<16x256xf32>
    %598 = arith.mulf %596, %597 : vector<16x256xf32>
    %599 = arith.addf %593, %598 : vector<16x256xf32>
    %600 = vector.extract_strided_slice %509 {offsets = [0, 15], sizes = [16, 1], strides = [1, 1]} : vector<16x16xf32> to vector<16x1xf32>
    %601 = vector.extract_strided_slice %510 {offsets = [15, 0], sizes = [1, 256], strides = [1, 1]} : vector<16x256xf32> to vector<1x256xf32>
    %602 = vector.broadcast %600 : vector<16x1xf32> to vector<16x256xf32>
    %603 = vector.broadcast %601 : vector<1x256xf32> to vector<16x256xf32>
    %604 = arith.mulf %602, %603 : vector<16x256xf32>
    %605 = arith.addf %599, %604 : vector<16x256xf32>
    %606 = vector.broadcast %501 : vector<16x1xf32> to vector<16x256xf32>
    %607 = arith.addf %606, %605 : vector<16x256xf32>
    %c0_144 = arith.constant 0 : index
    %c0_145 = arith.constant 0 : index
    %c0_146 = arith.constant 0 : index
    %608 = vector.load %arg19[%c0_144, %c0_145, %c0_146] : memref<4x6x16xf32, #tpu.memory_space<vmem>>, vector<1x6x16xf32>
    %609 = vector.shape_cast %608 : vector<1x6x16xf32> to vector<6x16xf32>
    %c0_147 = arith.constant 0 : index
    %c0_148 = arith.constant 0 : index
    %610 = vector.load %arg20[%c0_147, %c0_148] : memref<6x1xf32, #tpu.memory_space<vmem>>, vector<6x1xf32>
    %611 = vector.extract_strided_slice %609 {offsets = [0, 0], sizes = [6, 1], strides = [1, 1]} : vector<6x16xf32> to vector<6x1xf32>
    %612 = vector.extract_strided_slice %607 {offsets = [0, 0], sizes = [1, 256], strides = [1, 1]} : vector<16x256xf32> to vector<1x256xf32>
    %613 = vector.broadcast %611 : vector<6x1xf32> to vector<6x256xf32>
    %614 = vector.broadcast %612 : vector<1x256xf32> to vector<6x256xf32>
    %615 = arith.mulf %613, %614 : vector<6x256xf32>
    %616 = vector.extract_strided_slice %609 {offsets = [0, 1], sizes = [6, 1], strides = [1, 1]} : vector<6x16xf32> to vector<6x1xf32>
    %617 = vector.extract_strided_slice %607 {offsets = [1, 0], sizes = [1, 256], strides = [1, 1]} : vector<16x256xf32> to vector<1x256xf32>
    %618 = vector.broadcast %616 : vector<6x1xf32> to vector<6x256xf32>
    %619 = vector.broadcast %617 : vector<1x256xf32> to vector<6x256xf32>
    %620 = arith.mulf %618, %619 : vector<6x256xf32>
    %621 = arith.addf %615, %620 : vector<6x256xf32>
    %622 = vector.extract_strided_slice %609 {offsets = [0, 2], sizes = [6, 1], strides = [1, 1]} : vector<6x16xf32> to vector<6x1xf32>
    %623 = vector.extract_strided_slice %607 {offsets = [2, 0], sizes = [1, 256], strides = [1, 1]} : vector<16x256xf32> to vector<1x256xf32>
    %624 = vector.broadcast %622 : vector<6x1xf32> to vector<6x256xf32>
    %625 = vector.broadcast %623 : vector<1x256xf32> to vector<6x256xf32>
    %626 = arith.mulf %624, %625 : vector<6x256xf32>
    %627 = arith.addf %621, %626 : vector<6x256xf32>
    %628 = vector.extract_strided_slice %609 {offsets = [0, 3], sizes = [6, 1], strides = [1, 1]} : vector<6x16xf32> to vector<6x1xf32>
    %629 = vector.extract_strided_slice %607 {offsets = [3, 0], sizes = [1, 256], strides = [1, 1]} : vector<16x256xf32> to vector<1x256xf32>
    %630 = vector.broadcast %628 : vector<6x1xf32> to vector<6x256xf32>
    %631 = vector.broadcast %629 : vector<1x256xf32> to vector<6x256xf32>
    %632 = arith.mulf %630, %631 : vector<6x256xf32>
    %633 = arith.addf %627, %632 : vector<6x256xf32>
    %634 = vector.extract_strided_slice %609 {offsets = [0, 4], sizes = [6, 1], strides = [1, 1]} : vector<6x16xf32> to vector<6x1xf32>
    %635 = vector.extract_strided_slice %607 {offsets = [4, 0], sizes = [1, 256], strides = [1, 1]} : vector<16x256xf32> to vector<1x256xf32>
    %636 = vector.broadcast %634 : vector<6x1xf32> to vector<6x256xf32>
    %637 = vector.broadcast %635 : vector<1x256xf32> to vector<6x256xf32>
    %638 = arith.mulf %636, %637 : vector<6x256xf32>
    %639 = arith.addf %633, %638 : vector<6x256xf32>
    %640 = vector.extract_strided_slice %609 {offsets = [0, 5], sizes = [6, 1], strides = [1, 1]} : vector<6x16xf32> to vector<6x1xf32>
    %641 = vector.extract_strided_slice %607 {offsets = [5, 0], sizes = [1, 256], strides = [1, 1]} : vector<16x256xf32> to vector<1x256xf32>
    %642 = vector.broadcast %640 : vector<6x1xf32> to vector<6x256xf32>
    %643 = vector.broadcast %641 : vector<1x256xf32> to vector<6x256xf32>
    %644 = arith.mulf %642, %643 : vector<6x256xf32>
    %645 = arith.addf %639, %644 : vector<6x256xf32>
    %646 = vector.extract_strided_slice %609 {offsets = [0, 6], sizes = [6, 1], strides = [1, 1]} : vector<6x16xf32> to vector<6x1xf32>
    %647 = vector.extract_strided_slice %607 {offsets = [6, 0], sizes = [1, 256], strides = [1, 1]} : vector<16x256xf32> to vector<1x256xf32>
    %648 = vector.broadcast %646 : vector<6x1xf32> to vector<6x256xf32>
    %649 = vector.broadcast %647 : vector<1x256xf32> to vector<6x256xf32>
    %650 = arith.mulf %648, %649 : vector<6x256xf32>
    %651 = arith.addf %645, %650 : vector<6x256xf32>
    %652 = vector.extract_strided_slice %609 {offsets = [0, 7], sizes = [6, 1], strides = [1, 1]} : vector<6x16xf32> to vector<6x1xf32>
    %653 = vector.extract_strided_slice %607 {offsets = [7, 0], sizes = [1, 256], strides = [1, 1]} : vector<16x256xf32> to vector<1x256xf32>
    %654 = vector.broadcast %652 : vector<6x1xf32> to vector<6x256xf32>
    %655 = vector.broadcast %653 : vector<1x256xf32> to vector<6x256xf32>
    %656 = arith.mulf %654, %655 : vector<6x256xf32>
    %657 = arith.addf %651, %656 : vector<6x256xf32>
    %658 = vector.extract_strided_slice %609 {offsets = [0, 8], sizes = [6, 1], strides = [1, 1]} : vector<6x16xf32> to vector<6x1xf32>
    %659 = vector.extract_strided_slice %607 {offsets = [8, 0], sizes = [1, 256], strides = [1, 1]} : vector<16x256xf32> to vector<1x256xf32>
    %660 = vector.broadcast %658 : vector<6x1xf32> to vector<6x256xf32>
    %661 = vector.broadcast %659 : vector<1x256xf32> to vector<6x256xf32>
    %662 = arith.mulf %660, %661 : vector<6x256xf32>
    %663 = arith.addf %657, %662 : vector<6x256xf32>
    %664 = vector.extract_strided_slice %609 {offsets = [0, 9], sizes = [6, 1], strides = [1, 1]} : vector<6x16xf32> to vector<6x1xf32>
    %665 = vector.extract_strided_slice %607 {offsets = [9, 0], sizes = [1, 256], strides = [1, 1]} : vector<16x256xf32> to vector<1x256xf32>
    %666 = vector.broadcast %664 : vector<6x1xf32> to vector<6x256xf32>
    %667 = vector.broadcast %665 : vector<1x256xf32> to vector<6x256xf32>
    %668 = arith.mulf %666, %667 : vector<6x256xf32>
    %669 = arith.addf %663, %668 : vector<6x256xf32>
    %670 = vector.extract_strided_slice %609 {offsets = [0, 10], sizes = [6, 1], strides = [1, 1]} : vector<6x16xf32> to vector<6x1xf32>
    %671 = vector.extract_strided_slice %607 {offsets = [10, 0], sizes = [1, 256], strides = [1, 1]} : vector<16x256xf32> to vector<1x256xf32>
    %672 = vector.broadcast %670 : vector<6x1xf32> to vector<6x256xf32>
    %673 = vector.broadcast %671 : vector<1x256xf32> to vector<6x256xf32>
    %674 = arith.mulf %672, %673 : vector<6x256xf32>
    %675 = arith.addf %669, %674 : vector<6x256xf32>
    %676 = vector.extract_strided_slice %609 {offsets = [0, 11], sizes = [6, 1], strides = [1, 1]} : vector<6x16xf32> to vector<6x1xf32>
    %677 = vector.extract_strided_slice %607 {offsets = [11, 0], sizes = [1, 256], strides = [1, 1]} : vector<16x256xf32> to vector<1x256xf32>
    %678 = vector.broadcast %676 : vector<6x1xf32> to vector<6x256xf32>
    %679 = vector.broadcast %677 : vector<1x256xf32> to vector<6x256xf32>
    %680 = arith.mulf %678, %679 : vector<6x256xf32>
    %681 = arith.addf %675, %680 : vector<6x256xf32>
    %682 = vector.extract_strided_slice %609 {offsets = [0, 12], sizes = [6, 1], strides = [1, 1]} : vector<6x16xf32> to vector<6x1xf32>
    %683 = vector.extract_strided_slice %607 {offsets = [12, 0], sizes = [1, 256], strides = [1, 1]} : vector<16x256xf32> to vector<1x256xf32>
    %684 = vector.broadcast %682 : vector<6x1xf32> to vector<6x256xf32>
    %685 = vector.broadcast %683 : vector<1x256xf32> to vector<6x256xf32>
    %686 = arith.mulf %684, %685 : vector<6x256xf32>
    %687 = arith.addf %681, %686 : vector<6x256xf32>
    %688 = vector.extract_strided_slice %609 {offsets = [0, 13], sizes = [6, 1], strides = [1, 1]} : vector<6x16xf32> to vector<6x1xf32>
    %689 = vector.extract_strided_slice %607 {offsets = [13, 0], sizes = [1, 256], strides = [1, 1]} : vector<16x256xf32> to vector<1x256xf32>
    %690 = vector.broadcast %688 : vector<6x1xf32> to vector<6x256xf32>
    %691 = vector.broadcast %689 : vector<1x256xf32> to vector<6x256xf32>
    %692 = arith.mulf %690, %691 : vector<6x256xf32>
    %693 = arith.addf %687, %692 : vector<6x256xf32>
    %694 = vector.extract_strided_slice %609 {offsets = [0, 14], sizes = [6, 1], strides = [1, 1]} : vector<6x16xf32> to vector<6x1xf32>
    %695 = vector.extract_strided_slice %607 {offsets = [14, 0], sizes = [1, 256], strides = [1, 1]} : vector<16x256xf32> to vector<1x256xf32>
    %696 = vector.broadcast %694 : vector<6x1xf32> to vector<6x256xf32>
    %697 = vector.broadcast %695 : vector<1x256xf32> to vector<6x256xf32>
    %698 = arith.mulf %696, %697 : vector<6x256xf32>
    %699 = arith.addf %693, %698 : vector<6x256xf32>
    %700 = vector.extract_strided_slice %609 {offsets = [0, 15], sizes = [6, 1], strides = [1, 1]} : vector<6x16xf32> to vector<6x1xf32>
    %701 = vector.extract_strided_slice %607 {offsets = [15, 0], sizes = [1, 256], strides = [1, 1]} : vector<16x256xf32> to vector<1x256xf32>
    %702 = vector.broadcast %700 : vector<6x1xf32> to vector<6x256xf32>
    %703 = vector.broadcast %701 : vector<1x256xf32> to vector<6x256xf32>
    %704 = arith.mulf %702, %703 : vector<6x256xf32>
    %705 = arith.addf %699, %704 : vector<6x256xf32>
    %706 = vector.broadcast %610 : vector<6x1xf32> to vector<6x256xf32>
    %707 = arith.addf %706, %705 : vector<6x256xf32>
    %c1_149 = arith.constant 1 : index
    %c0_150 = arith.constant 0 : index
    %c0_151 = arith.constant 0 : index
    %708 = vector.load %arg19[%c1_149, %c0_150, %c0_151] : memref<4x6x16xf32, #tpu.memory_space<vmem>>, vector<1x6x16xf32>
    %709 = vector.shape_cast %708 : vector<1x6x16xf32> to vector<6x16xf32>
    %c0_152 = arith.constant 0 : index
    %c0_153 = arith.constant 0 : index
    %710 = vector.load %arg20[%c0_152, %c0_153] : memref<6x1xf32, #tpu.memory_space<vmem>>, vector<6x1xf32>
    %711 = vector.extract_strided_slice %709 {offsets = [0, 0], sizes = [6, 1], strides = [1, 1]} : vector<6x16xf32> to vector<6x1xf32>
    %712 = vector.extract_strided_slice %607 {offsets = [0, 0], sizes = [1, 256], strides = [1, 1]} : vector<16x256xf32> to vector<1x256xf32>
    %713 = vector.broadcast %711 : vector<6x1xf32> to vector<6x256xf32>
    %714 = vector.broadcast %712 : vector<1x256xf32> to vector<6x256xf32>
    %715 = arith.mulf %713, %714 : vector<6x256xf32>
    %716 = vector.extract_strided_slice %709 {offsets = [0, 1], sizes = [6, 1], strides = [1, 1]} : vector<6x16xf32> to vector<6x1xf32>
    %717 = vector.extract_strided_slice %607 {offsets = [1, 0], sizes = [1, 256], strides = [1, 1]} : vector<16x256xf32> to vector<1x256xf32>
    %718 = vector.broadcast %716 : vector<6x1xf32> to vector<6x256xf32>
    %719 = vector.broadcast %717 : vector<1x256xf32> to vector<6x256xf32>
    %720 = arith.mulf %718, %719 : vector<6x256xf32>
    %721 = arith.addf %715, %720 : vector<6x256xf32>
    %722 = vector.extract_strided_slice %709 {offsets = [0, 2], sizes = [6, 1], strides = [1, 1]} : vector<6x16xf32> to vector<6x1xf32>
    %723 = vector.extract_strided_slice %607 {offsets = [2, 0], sizes = [1, 256], strides = [1, 1]} : vector<16x256xf32> to vector<1x256xf32>
    %724 = vector.broadcast %722 : vector<6x1xf32> to vector<6x256xf32>
    %725 = vector.broadcast %723 : vector<1x256xf32> to vector<6x256xf32>
    %726 = arith.mulf %724, %725 : vector<6x256xf32>
    %727 = arith.addf %721, %726 : vector<6x256xf32>
    %728 = vector.extract_strided_slice %709 {offsets = [0, 3], sizes = [6, 1], strides = [1, 1]} : vector<6x16xf32> to vector<6x1xf32>
    %729 = vector.extract_strided_slice %607 {offsets = [3, 0], sizes = [1, 256], strides = [1, 1]} : vector<16x256xf32> to vector<1x256xf32>
    %730 = vector.broadcast %728 : vector<6x1xf32> to vector<6x256xf32>
    %731 = vector.broadcast %729 : vector<1x256xf32> to vector<6x256xf32>
    %732 = arith.mulf %730, %731 : vector<6x256xf32>
    %733 = arith.addf %727, %732 : vector<6x256xf32>
    %734 = vector.extract_strided_slice %709 {offsets = [0, 4], sizes = [6, 1], strides = [1, 1]} : vector<6x16xf32> to vector<6x1xf32>
    %735 = vector.extract_strided_slice %607 {offsets = [4, 0], sizes = [1, 256], strides = [1, 1]} : vector<16x256xf32> to vector<1x256xf32>
    %736 = vector.broadcast %734 : vector<6x1xf32> to vector<6x256xf32>
    %737 = vector.broadcast %735 : vector<1x256xf32> to vector<6x256xf32>
    %738 = arith.mulf %736, %737 : vector<6x256xf32>
    %739 = arith.addf %733, %738 : vector<6x256xf32>
    %740 = vector.extract_strided_slice %709 {offsets = [0, 5], sizes = [6, 1], strides = [1, 1]} : vector<6x16xf32> to vector<6x1xf32>
    %741 = vector.extract_strided_slice %607 {offsets = [5, 0], sizes = [1, 256], strides = [1, 1]} : vector<16x256xf32> to vector<1x256xf32>
    %742 = vector.broadcast %740 : vector<6x1xf32> to vector<6x256xf32>
    %743 = vector.broadcast %741 : vector<1x256xf32> to vector<6x256xf32>
    %744 = arith.mulf %742, %743 : vector<6x256xf32>
    %745 = arith.addf %739, %744 : vector<6x256xf32>
    %746 = vector.extract_strided_slice %709 {offsets = [0, 6], sizes = [6, 1], strides = [1, 1]} : vector<6x16xf32> to vector<6x1xf32>
    %747 = vector.extract_strided_slice %607 {offsets = [6, 0], sizes = [1, 256], strides = [1, 1]} : vector<16x256xf32> to vector<1x256xf32>
    %748 = vector.broadcast %746 : vector<6x1xf32> to vector<6x256xf32>
    %749 = vector.broadcast %747 : vector<1x256xf32> to vector<6x256xf32>
    %750 = arith.mulf %748, %749 : vector<6x256xf32>
    %751 = arith.addf %745, %750 : vector<6x256xf32>
    %752 = vector.extract_strided_slice %709 {offsets = [0, 7], sizes = [6, 1], strides = [1, 1]} : vector<6x16xf32> to vector<6x1xf32>
    %753 = vector.extract_strided_slice %607 {offsets = [7, 0], sizes = [1, 256], strides = [1, 1]} : vector<16x256xf32> to vector<1x256xf32>
    %754 = vector.broadcast %752 : vector<6x1xf32> to vector<6x256xf32>
    %755 = vector.broadcast %753 : vector<1x256xf32> to vector<6x256xf32>
    %756 = arith.mulf %754, %755 : vector<6x256xf32>
    %757 = arith.addf %751, %756 : vector<6x256xf32>
    %758 = vector.extract_strided_slice %709 {offsets = [0, 8], sizes = [6, 1], strides = [1, 1]} : vector<6x16xf32> to vector<6x1xf32>
    %759 = vector.extract_strided_slice %607 {offsets = [8, 0], sizes = [1, 256], strides = [1, 1]} : vector<16x256xf32> to vector<1x256xf32>
    %760 = vector.broadcast %758 : vector<6x1xf32> to vector<6x256xf32>
    %761 = vector.broadcast %759 : vector<1x256xf32> to vector<6x256xf32>
    %762 = arith.mulf %760, %761 : vector<6x256xf32>
    %763 = arith.addf %757, %762 : vector<6x256xf32>
    %764 = vector.extract_strided_slice %709 {offsets = [0, 9], sizes = [6, 1], strides = [1, 1]} : vector<6x16xf32> to vector<6x1xf32>
    %765 = vector.extract_strided_slice %607 {offsets = [9, 0], sizes = [1, 256], strides = [1, 1]} : vector<16x256xf32> to vector<1x256xf32>
    %766 = vector.broadcast %764 : vector<6x1xf32> to vector<6x256xf32>
    %767 = vector.broadcast %765 : vector<1x256xf32> to vector<6x256xf32>
    %768 = arith.mulf %766, %767 : vector<6x256xf32>
    %769 = arith.addf %763, %768 : vector<6x256xf32>
    %770 = vector.extract_strided_slice %709 {offsets = [0, 10], sizes = [6, 1], strides = [1, 1]} : vector<6x16xf32> to vector<6x1xf32>
    %771 = vector.extract_strided_slice %607 {offsets = [10, 0], sizes = [1, 256], strides = [1, 1]} : vector<16x256xf32> to vector<1x256xf32>
    %772 = vector.broadcast %770 : vector<6x1xf32> to vector<6x256xf32>
    %773 = vector.broadcast %771 : vector<1x256xf32> to vector<6x256xf32>
    %774 = arith.mulf %772, %773 : vector<6x256xf32>
    %775 = arith.addf %769, %774 : vector<6x256xf32>
    %776 = vector.extract_strided_slice %709 {offsets = [0, 11], sizes = [6, 1], strides = [1, 1]} : vector<6x16xf32> to vector<6x1xf32>
    %777 = vector.extract_strided_slice %607 {offsets = [11, 0], sizes = [1, 256], strides = [1, 1]} : vector<16x256xf32> to vector<1x256xf32>
    %778 = vector.broadcast %776 : vector<6x1xf32> to vector<6x256xf32>
    %779 = vector.broadcast %777 : vector<1x256xf32> to vector<6x256xf32>
    %780 = arith.mulf %778, %779 : vector<6x256xf32>
    %781 = arith.addf %775, %780 : vector<6x256xf32>
    %782 = vector.extract_strided_slice %709 {offsets = [0, 12], sizes = [6, 1], strides = [1, 1]} : vector<6x16xf32> to vector<6x1xf32>
    %783 = vector.extract_strided_slice %607 {offsets = [12, 0], sizes = [1, 256], strides = [1, 1]} : vector<16x256xf32> to vector<1x256xf32>
    %784 = vector.broadcast %782 : vector<6x1xf32> to vector<6x256xf32>
    %785 = vector.broadcast %783 : vector<1x256xf32> to vector<6x256xf32>
    %786 = arith.mulf %784, %785 : vector<6x256xf32>
    %787 = arith.addf %781, %786 : vector<6x256xf32>
    %788 = vector.extract_strided_slice %709 {offsets = [0, 13], sizes = [6, 1], strides = [1, 1]} : vector<6x16xf32> to vector<6x1xf32>
    %789 = vector.extract_strided_slice %607 {offsets = [13, 0], sizes = [1, 256], strides = [1, 1]} : vector<16x256xf32> to vector<1x256xf32>
    %790 = vector.broadcast %788 : vector<6x1xf32> to vector<6x256xf32>
    %791 = vector.broadcast %789 : vector<1x256xf32> to vector<6x256xf32>
    %792 = arith.mulf %790, %791 : vector<6x256xf32>
    %793 = arith.addf %787, %792 : vector<6x256xf32>
    %794 = vector.extract_strided_slice %709 {offsets = [0, 14], sizes = [6, 1], strides = [1, 1]} : vector<6x16xf32> to vector<6x1xf32>
    %795 = vector.extract_strided_slice %607 {offsets = [14, 0], sizes = [1, 256], strides = [1, 1]} : vector<16x256xf32> to vector<1x256xf32>
    %796 = vector.broadcast %794 : vector<6x1xf32> to vector<6x256xf32>
    %797 = vector.broadcast %795 : vector<1x256xf32> to vector<6x256xf32>
    %798 = arith.mulf %796, %797 : vector<6x256xf32>
    %799 = arith.addf %793, %798 : vector<6x256xf32>
    %800 = vector.extract_strided_slice %709 {offsets = [0, 15], sizes = [6, 1], strides = [1, 1]} : vector<6x16xf32> to vector<6x1xf32>
    %801 = vector.extract_strided_slice %607 {offsets = [15, 0], sizes = [1, 256], strides = [1, 1]} : vector<16x256xf32> to vector<1x256xf32>
    %802 = vector.broadcast %800 : vector<6x1xf32> to vector<6x256xf32>
    %803 = vector.broadcast %801 : vector<1x256xf32> to vector<6x256xf32>
    %804 = arith.mulf %802, %803 : vector<6x256xf32>
    %805 = arith.addf %799, %804 : vector<6x256xf32>
    %806 = vector.broadcast %710 : vector<6x1xf32> to vector<6x256xf32>
    %807 = arith.addf %806, %805 : vector<6x256xf32>
    %c2_154 = arith.constant 2 : index
    %c0_155 = arith.constant 0 : index
    %c0_156 = arith.constant 0 : index
    %808 = vector.load %arg19[%c2_154, %c0_155, %c0_156] : memref<4x6x16xf32, #tpu.memory_space<vmem>>, vector<1x6x16xf32>
    %809 = vector.shape_cast %808 : vector<1x6x16xf32> to vector<6x16xf32>
    %c0_157 = arith.constant 0 : index
    %c0_158 = arith.constant 0 : index
    %810 = vector.load %arg20[%c0_157, %c0_158] : memref<6x1xf32, #tpu.memory_space<vmem>>, vector<6x1xf32>
    %811 = vector.extract_strided_slice %809 {offsets = [0, 0], sizes = [6, 1], strides = [1, 1]} : vector<6x16xf32> to vector<6x1xf32>
    %812 = vector.extract_strided_slice %607 {offsets = [0, 0], sizes = [1, 256], strides = [1, 1]} : vector<16x256xf32> to vector<1x256xf32>
    %813 = vector.broadcast %811 : vector<6x1xf32> to vector<6x256xf32>
    %814 = vector.broadcast %812 : vector<1x256xf32> to vector<6x256xf32>
    %815 = arith.mulf %813, %814 : vector<6x256xf32>
    %816 = vector.extract_strided_slice %809 {offsets = [0, 1], sizes = [6, 1], strides = [1, 1]} : vector<6x16xf32> to vector<6x1xf32>
    %817 = vector.extract_strided_slice %607 {offsets = [1, 0], sizes = [1, 256], strides = [1, 1]} : vector<16x256xf32> to vector<1x256xf32>
    %818 = vector.broadcast %816 : vector<6x1xf32> to vector<6x256xf32>
    %819 = vector.broadcast %817 : vector<1x256xf32> to vector<6x256xf32>
    %820 = arith.mulf %818, %819 : vector<6x256xf32>
    %821 = arith.addf %815, %820 : vector<6x256xf32>
    %822 = vector.extract_strided_slice %809 {offsets = [0, 2], sizes = [6, 1], strides = [1, 1]} : vector<6x16xf32> to vector<6x1xf32>
    %823 = vector.extract_strided_slice %607 {offsets = [2, 0], sizes = [1, 256], strides = [1, 1]} : vector<16x256xf32> to vector<1x256xf32>
    %824 = vector.broadcast %822 : vector<6x1xf32> to vector<6x256xf32>
    %825 = vector.broadcast %823 : vector<1x256xf32> to vector<6x256xf32>
    %826 = arith.mulf %824, %825 : vector<6x256xf32>
    %827 = arith.addf %821, %826 : vector<6x256xf32>
    %828 = vector.extract_strided_slice %809 {offsets = [0, 3], sizes = [6, 1], strides = [1, 1]} : vector<6x16xf32> to vector<6x1xf32>
    %829 = vector.extract_strided_slice %607 {offsets = [3, 0], sizes = [1, 256], strides = [1, 1]} : vector<16x256xf32> to vector<1x256xf32>
    %830 = vector.broadcast %828 : vector<6x1xf32> to vector<6x256xf32>
    %831 = vector.broadcast %829 : vector<1x256xf32> to vector<6x256xf32>
    %832 = arith.mulf %830, %831 : vector<6x256xf32>
    %833 = arith.addf %827, %832 : vector<6x256xf32>
    %834 = vector.extract_strided_slice %809 {offsets = [0, 4], sizes = [6, 1], strides = [1, 1]} : vector<6x16xf32> to vector<6x1xf32>
    %835 = vector.extract_strided_slice %607 {offsets = [4, 0], sizes = [1, 256], strides = [1, 1]} : vector<16x256xf32> to vector<1x256xf32>
    %836 = vector.broadcast %834 : vector<6x1xf32> to vector<6x256xf32>
    %837 = vector.broadcast %835 : vector<1x256xf32> to vector<6x256xf32>
    %838 = arith.mulf %836, %837 : vector<6x256xf32>
    %839 = arith.addf %833, %838 : vector<6x256xf32>
    %840 = vector.extract_strided_slice %809 {offsets = [0, 5], sizes = [6, 1], strides = [1, 1]} : vector<6x16xf32> to vector<6x1xf32>
    %841 = vector.extract_strided_slice %607 {offsets = [5, 0], sizes = [1, 256], strides = [1, 1]} : vector<16x256xf32> to vector<1x256xf32>
    %842 = vector.broadcast %840 : vector<6x1xf32> to vector<6x256xf32>
    %843 = vector.broadcast %841 : vector<1x256xf32> to vector<6x256xf32>
    %844 = arith.mulf %842, %843 : vector<6x256xf32>
    %845 = arith.addf %839, %844 : vector<6x256xf32>
    %846 = vector.extract_strided_slice %809 {offsets = [0, 6], sizes = [6, 1], strides = [1, 1]} : vector<6x16xf32> to vector<6x1xf32>
    %847 = vector.extract_strided_slice %607 {offsets = [6, 0], sizes = [1, 256], strides = [1, 1]} : vector<16x256xf32> to vector<1x256xf32>
    %848 = vector.broadcast %846 : vector<6x1xf32> to vector<6x256xf32>
    %849 = vector.broadcast %847 : vector<1x256xf32> to vector<6x256xf32>
    %850 = arith.mulf %848, %849 : vector<6x256xf32>
    %851 = arith.addf %845, %850 : vector<6x256xf32>
    %852 = vector.extract_strided_slice %809 {offsets = [0, 7], sizes = [6, 1], strides = [1, 1]} : vector<6x16xf32> to vector<6x1xf32>
    %853 = vector.extract_strided_slice %607 {offsets = [7, 0], sizes = [1, 256], strides = [1, 1]} : vector<16x256xf32> to vector<1x256xf32>
    %854 = vector.broadcast %852 : vector<6x1xf32> to vector<6x256xf32>
    %855 = vector.broadcast %853 : vector<1x256xf32> to vector<6x256xf32>
    %856 = arith.mulf %854, %855 : vector<6x256xf32>
    %857 = arith.addf %851, %856 : vector<6x256xf32>
    %858 = vector.extract_strided_slice %809 {offsets = [0, 8], sizes = [6, 1], strides = [1, 1]} : vector<6x16xf32> to vector<6x1xf32>
    %859 = vector.extract_strided_slice %607 {offsets = [8, 0], sizes = [1, 256], strides = [1, 1]} : vector<16x256xf32> to vector<1x256xf32>
    %860 = vector.broadcast %858 : vector<6x1xf32> to vector<6x256xf32>
    %861 = vector.broadcast %859 : vector<1x256xf32> to vector<6x256xf32>
    %862 = arith.mulf %860, %861 : vector<6x256xf32>
    %863 = arith.addf %857, %862 : vector<6x256xf32>
    %864 = vector.extract_strided_slice %809 {offsets = [0, 9], sizes = [6, 1], strides = [1, 1]} : vector<6x16xf32> to vector<6x1xf32>
    %865 = vector.extract_strided_slice %607 {offsets = [9, 0], sizes = [1, 256], strides = [1, 1]} : vector<16x256xf32> to vector<1x256xf32>
    %866 = vector.broadcast %864 : vector<6x1xf32> to vector<6x256xf32>
    %867 = vector.broadcast %865 : vector<1x256xf32> to vector<6x256xf32>
    %868 = arith.mulf %866, %867 : vector<6x256xf32>
    %869 = arith.addf %863, %868 : vector<6x256xf32>
    %870 = vector.extract_strided_slice %809 {offsets = [0, 10], sizes = [6, 1], strides = [1, 1]} : vector<6x16xf32> to vector<6x1xf32>
    %871 = vector.extract_strided_slice %607 {offsets = [10, 0], sizes = [1, 256], strides = [1, 1]} : vector<16x256xf32> to vector<1x256xf32>
    %872 = vector.broadcast %870 : vector<6x1xf32> to vector<6x256xf32>
    %873 = vector.broadcast %871 : vector<1x256xf32> to vector<6x256xf32>
    %874 = arith.mulf %872, %873 : vector<6x256xf32>
    %875 = arith.addf %869, %874 : vector<6x256xf32>
    %876 = vector.extract_strided_slice %809 {offsets = [0, 11], sizes = [6, 1], strides = [1, 1]} : vector<6x16xf32> to vector<6x1xf32>
    %877 = vector.extract_strided_slice %607 {offsets = [11, 0], sizes = [1, 256], strides = [1, 1]} : vector<16x256xf32> to vector<1x256xf32>
    %878 = vector.broadcast %876 : vector<6x1xf32> to vector<6x256xf32>
    %879 = vector.broadcast %877 : vector<1x256xf32> to vector<6x256xf32>
    %880 = arith.mulf %878, %879 : vector<6x256xf32>
    %881 = arith.addf %875, %880 : vector<6x256xf32>
    %882 = vector.extract_strided_slice %809 {offsets = [0, 12], sizes = [6, 1], strides = [1, 1]} : vector<6x16xf32> to vector<6x1xf32>
    %883 = vector.extract_strided_slice %607 {offsets = [12, 0], sizes = [1, 256], strides = [1, 1]} : vector<16x256xf32> to vector<1x256xf32>
    %884 = vector.broadcast %882 : vector<6x1xf32> to vector<6x256xf32>
    %885 = vector.broadcast %883 : vector<1x256xf32> to vector<6x256xf32>
    %886 = arith.mulf %884, %885 : vector<6x256xf32>
    %887 = arith.addf %881, %886 : vector<6x256xf32>
    %888 = vector.extract_strided_slice %809 {offsets = [0, 13], sizes = [6, 1], strides = [1, 1]} : vector<6x16xf32> to vector<6x1xf32>
    %889 = vector.extract_strided_slice %607 {offsets = [13, 0], sizes = [1, 256], strides = [1, 1]} : vector<16x256xf32> to vector<1x256xf32>
    %890 = vector.broadcast %888 : vector<6x1xf32> to vector<6x256xf32>
    %891 = vector.broadcast %889 : vector<1x256xf32> to vector<6x256xf32>
    %892 = arith.mulf %890, %891 : vector<6x256xf32>
    %893 = arith.addf %887, %892 : vector<6x256xf32>
    %894 = vector.extract_strided_slice %809 {offsets = [0, 14], sizes = [6, 1], strides = [1, 1]} : vector<6x16xf32> to vector<6x1xf32>
    %895 = vector.extract_strided_slice %607 {offsets = [14, 0], sizes = [1, 256], strides = [1, 1]} : vector<16x256xf32> to vector<1x256xf32>
    %896 = vector.broadcast %894 : vector<6x1xf32> to vector<6x256xf32>
    %897 = vector.broadcast %895 : vector<1x256xf32> to vector<6x256xf32>
    %898 = arith.mulf %896, %897 : vector<6x256xf32>
    %899 = arith.addf %893, %898 : vector<6x256xf32>
    %900 = vector.extract_strided_slice %809 {offsets = [0, 15], sizes = [6, 1], strides = [1, 1]} : vector<6x16xf32> to vector<6x1xf32>
    %901 = vector.extract_strided_slice %607 {offsets = [15, 0], sizes = [1, 256], strides = [1, 1]} : vector<16x256xf32> to vector<1x256xf32>
    %902 = vector.broadcast %900 : vector<6x1xf32> to vector<6x256xf32>
    %903 = vector.broadcast %901 : vector<1x256xf32> to vector<6x256xf32>
    %904 = arith.mulf %902, %903 : vector<6x256xf32>
    %905 = arith.addf %899, %904 : vector<6x256xf32>
    %906 = vector.broadcast %810 : vector<6x1xf32> to vector<6x256xf32>
    %907 = arith.addf %906, %905 : vector<6x256xf32>
    %c3_159 = arith.constant 3 : index
    %c0_160 = arith.constant 0 : index
    %c0_161 = arith.constant 0 : index
    %908 = vector.load %arg19[%c3_159, %c0_160, %c0_161] : memref<4x6x16xf32, #tpu.memory_space<vmem>>, vector<1x6x16xf32>
    %909 = vector.shape_cast %908 : vector<1x6x16xf32> to vector<6x16xf32>
    %c0_162 = arith.constant 0 : index
    %c0_163 = arith.constant 0 : index
    %910 = vector.load %arg20[%c0_162, %c0_163] : memref<6x1xf32, #tpu.memory_space<vmem>>, vector<6x1xf32>
    %911 = vector.extract_strided_slice %909 {offsets = [0, 0], sizes = [6, 1], strides = [1, 1]} : vector<6x16xf32> to vector<6x1xf32>
    %912 = vector.extract_strided_slice %607 {offsets = [0, 0], sizes = [1, 256], strides = [1, 1]} : vector<16x256xf32> to vector<1x256xf32>
    %913 = vector.broadcast %911 : vector<6x1xf32> to vector<6x256xf32>
    %914 = vector.broadcast %912 : vector<1x256xf32> to vector<6x256xf32>
    %915 = arith.mulf %913, %914 : vector<6x256xf32>
    %916 = vector.extract_strided_slice %909 {offsets = [0, 1], sizes = [6, 1], strides = [1, 1]} : vector<6x16xf32> to vector<6x1xf32>
    %917 = vector.extract_strided_slice %607 {offsets = [1, 0], sizes = [1, 256], strides = [1, 1]} : vector<16x256xf32> to vector<1x256xf32>
    %918 = vector.broadcast %916 : vector<6x1xf32> to vector<6x256xf32>
    %919 = vector.broadcast %917 : vector<1x256xf32> to vector<6x256xf32>
    %920 = arith.mulf %918, %919 : vector<6x256xf32>
    %921 = arith.addf %915, %920 : vector<6x256xf32>
    %922 = vector.extract_strided_slice %909 {offsets = [0, 2], sizes = [6, 1], strides = [1, 1]} : vector<6x16xf32> to vector<6x1xf32>
    %923 = vector.extract_strided_slice %607 {offsets = [2, 0], sizes = [1, 256], strides = [1, 1]} : vector<16x256xf32> to vector<1x256xf32>
    %924 = vector.broadcast %922 : vector<6x1xf32> to vector<6x256xf32>
    %925 = vector.broadcast %923 : vector<1x256xf32> to vector<6x256xf32>
    %926 = arith.mulf %924, %925 : vector<6x256xf32>
    %927 = arith.addf %921, %926 : vector<6x256xf32>
    %928 = vector.extract_strided_slice %909 {offsets = [0, 3], sizes = [6, 1], strides = [1, 1]} : vector<6x16xf32> to vector<6x1xf32>
    %929 = vector.extract_strided_slice %607 {offsets = [3, 0], sizes = [1, 256], strides = [1, 1]} : vector<16x256xf32> to vector<1x256xf32>
    %930 = vector.broadcast %928 : vector<6x1xf32> to vector<6x256xf32>
    %931 = vector.broadcast %929 : vector<1x256xf32> to vector<6x256xf32>
    %932 = arith.mulf %930, %931 : vector<6x256xf32>
    %933 = arith.addf %927, %932 : vector<6x256xf32>
    %934 = vector.extract_strided_slice %909 {offsets = [0, 4], sizes = [6, 1], strides = [1, 1]} : vector<6x16xf32> to vector<6x1xf32>
    %935 = vector.extract_strided_slice %607 {offsets = [4, 0], sizes = [1, 256], strides = [1, 1]} : vector<16x256xf32> to vector<1x256xf32>
    %936 = vector.broadcast %934 : vector<6x1xf32> to vector<6x256xf32>
    %937 = vector.broadcast %935 : vector<1x256xf32> to vector<6x256xf32>
    %938 = arith.mulf %936, %937 : vector<6x256xf32>
    %939 = arith.addf %933, %938 : vector<6x256xf32>
    %940 = vector.extract_strided_slice %909 {offsets = [0, 5], sizes = [6, 1], strides = [1, 1]} : vector<6x16xf32> to vector<6x1xf32>
    %941 = vector.extract_strided_slice %607 {offsets = [5, 0], sizes = [1, 256], strides = [1, 1]} : vector<16x256xf32> to vector<1x256xf32>
    %942 = vector.broadcast %940 : vector<6x1xf32> to vector<6x256xf32>
    %943 = vector.broadcast %941 : vector<1x256xf32> to vector<6x256xf32>
    %944 = arith.mulf %942, %943 : vector<6x256xf32>
    %945 = arith.addf %939, %944 : vector<6x256xf32>
    %946 = vector.extract_strided_slice %909 {offsets = [0, 6], sizes = [6, 1], strides = [1, 1]} : vector<6x16xf32> to vector<6x1xf32>
    %947 = vector.extract_strided_slice %607 {offsets = [6, 0], sizes = [1, 256], strides = [1, 1]} : vector<16x256xf32> to vector<1x256xf32>
    %948 = vector.broadcast %946 : vector<6x1xf32> to vector<6x256xf32>
    %949 = vector.broadcast %947 : vector<1x256xf32> to vector<6x256xf32>
    %950 = arith.mulf %948, %949 : vector<6x256xf32>
    %951 = arith.addf %945, %950 : vector<6x256xf32>
    %952 = vector.extract_strided_slice %909 {offsets = [0, 7], sizes = [6, 1], strides = [1, 1]} : vector<6x16xf32> to vector<6x1xf32>
    %953 = vector.extract_strided_slice %607 {offsets = [7, 0], sizes = [1, 256], strides = [1, 1]} : vector<16x256xf32> to vector<1x256xf32>
    %954 = vector.broadcast %952 : vector<6x1xf32> to vector<6x256xf32>
    %955 = vector.broadcast %953 : vector<1x256xf32> to vector<6x256xf32>
    %956 = arith.mulf %954, %955 : vector<6x256xf32>
    %957 = arith.addf %951, %956 : vector<6x256xf32>
    %958 = vector.extract_strided_slice %909 {offsets = [0, 8], sizes = [6, 1], strides = [1, 1]} : vector<6x16xf32> to vector<6x1xf32>
    %959 = vector.extract_strided_slice %607 {offsets = [8, 0], sizes = [1, 256], strides = [1, 1]} : vector<16x256xf32> to vector<1x256xf32>
    %960 = vector.broadcast %958 : vector<6x1xf32> to vector<6x256xf32>
    %961 = vector.broadcast %959 : vector<1x256xf32> to vector<6x256xf32>
    %962 = arith.mulf %960, %961 : vector<6x256xf32>
    %963 = arith.addf %957, %962 : vector<6x256xf32>
    %964 = vector.extract_strided_slice %909 {offsets = [0, 9], sizes = [6, 1], strides = [1, 1]} : vector<6x16xf32> to vector<6x1xf32>
    %965 = vector.extract_strided_slice %607 {offsets = [9, 0], sizes = [1, 256], strides = [1, 1]} : vector<16x256xf32> to vector<1x256xf32>
    %966 = vector.broadcast %964 : vector<6x1xf32> to vector<6x256xf32>
    %967 = vector.broadcast %965 : vector<1x256xf32> to vector<6x256xf32>
    %968 = arith.mulf %966, %967 : vector<6x256xf32>
    %969 = arith.addf %963, %968 : vector<6x256xf32>
    %970 = vector.extract_strided_slice %909 {offsets = [0, 10], sizes = [6, 1], strides = [1, 1]} : vector<6x16xf32> to vector<6x1xf32>
    %971 = vector.extract_strided_slice %607 {offsets = [10, 0], sizes = [1, 256], strides = [1, 1]} : vector<16x256xf32> to vector<1x256xf32>
    %972 = vector.broadcast %970 : vector<6x1xf32> to vector<6x256xf32>
    %973 = vector.broadcast %971 : vector<1x256xf32> to vector<6x256xf32>
    %974 = arith.mulf %972, %973 : vector<6x256xf32>
    %975 = arith.addf %969, %974 : vector<6x256xf32>
    %976 = vector.extract_strided_slice %909 {offsets = [0, 11], sizes = [6, 1], strides = [1, 1]} : vector<6x16xf32> to vector<6x1xf32>
    %977 = vector.extract_strided_slice %607 {offsets = [11, 0], sizes = [1, 256], strides = [1, 1]} : vector<16x256xf32> to vector<1x256xf32>
    %978 = vector.broadcast %976 : vector<6x1xf32> to vector<6x256xf32>
    %979 = vector.broadcast %977 : vector<1x256xf32> to vector<6x256xf32>
    %980 = arith.mulf %978, %979 : vector<6x256xf32>
    %981 = arith.addf %975, %980 : vector<6x256xf32>
    %982 = vector.extract_strided_slice %909 {offsets = [0, 12], sizes = [6, 1], strides = [1, 1]} : vector<6x16xf32> to vector<6x1xf32>
    %983 = vector.extract_strided_slice %607 {offsets = [12, 0], sizes = [1, 256], strides = [1, 1]} : vector<16x256xf32> to vector<1x256xf32>
    %984 = vector.broadcast %982 : vector<6x1xf32> to vector<6x256xf32>
    %985 = vector.broadcast %983 : vector<1x256xf32> to vector<6x256xf32>
    %986 = arith.mulf %984, %985 : vector<6x256xf32>
    %987 = arith.addf %981, %986 : vector<6x256xf32>
    %988 = vector.extract_strided_slice %909 {offsets = [0, 13], sizes = [6, 1], strides = [1, 1]} : vector<6x16xf32> to vector<6x1xf32>
    %989 = vector.extract_strided_slice %607 {offsets = [13, 0], sizes = [1, 256], strides = [1, 1]} : vector<16x256xf32> to vector<1x256xf32>
    %990 = vector.broadcast %988 : vector<6x1xf32> to vector<6x256xf32>
    %991 = vector.broadcast %989 : vector<1x256xf32> to vector<6x256xf32>
    %992 = arith.mulf %990, %991 : vector<6x256xf32>
    %993 = arith.addf %987, %992 : vector<6x256xf32>
    %994 = vector.extract_strided_slice %909 {offsets = [0, 14], sizes = [6, 1], strides = [1, 1]} : vector<6x16xf32> to vector<6x1xf32>
    %995 = vector.extract_strided_slice %607 {offsets = [14, 0], sizes = [1, 256], strides = [1, 1]} : vector<16x256xf32> to vector<1x256xf32>
    %996 = vector.broadcast %994 : vector<6x1xf32> to vector<6x256xf32>
    %997 = vector.broadcast %995 : vector<1x256xf32> to vector<6x256xf32>
    %998 = arith.mulf %996, %997 : vector<6x256xf32>
    %999 = arith.addf %993, %998 : vector<6x256xf32>
    %1000 = vector.extract_strided_slice %909 {offsets = [0, 15], sizes = [6, 1], strides = [1, 1]} : vector<6x16xf32> to vector<6x1xf32>
    %1001 = vector.extract_strided_slice %607 {offsets = [15, 0], sizes = [1, 256], strides = [1, 1]} : vector<16x256xf32> to vector<1x256xf32>
    %1002 = vector.broadcast %1000 : vector<6x1xf32> to vector<6x256xf32>
    %1003 = vector.broadcast %1001 : vector<1x256xf32> to vector<6x256xf32>
    %1004 = arith.mulf %1002, %1003 : vector<6x256xf32>
    %1005 = arith.addf %999, %1004 : vector<6x256xf32>
    %1006 = vector.broadcast %910 : vector<6x1xf32> to vector<6x256xf32>
    %1007 = arith.addf %1006, %1005 : vector<6x256xf32>
    %1008 = tpu.concatenate %707, %807, %907, %1007 in 1 : vector<6x256xf32>, vector<6x256xf32>, vector<6x256xf32>, vector<6x256xf32> -> vector<6x1024xf32>
    %cst_164 = arith.constant 0.000000e+00 : f32
    %1009 = vector.broadcast %cst_164 : f32 to vector<6x1024xf32>
    %1010 = arith.maximumf %1008, %1009 : vector<6x1024xf32>
    %cst_165 = arith.constant dense<0.000000e+00> : vector<6xf32>
    %1011 = vector.multi_reduction <add>, %1010, %cst_165 [1] : vector<6x1024xf32> to vector<6xf32>
    %1012 = vector.shape_cast %1011 : vector<6xf32> to vector<6x1xf32>
    %1013 = arith.mulf %1010, %1010 : vector<6x1024xf32>
    %cst_166 = arith.constant dense<0.000000e+00> : vector<6xf32>
    %1014 = vector.multi_reduction <add>, %1013, %cst_166 [1] : vector<6x1024xf32> to vector<6xf32>
    %1015 = vector.shape_cast %1014 : vector<6xf32> to vector<6x1xf32>
    %1016 = vector.extract_strided_slice %1012 {offsets = [0, 0], sizes = [3, 1], strides = [1, 1]} : vector<6x1xf32> to vector<3x1xf32>
    %1017 = vector.extract_strided_slice %1012 {offsets = [3, 0], sizes = [3, 1], strides = [1, 1]} : vector<6x1xf32> to vector<3x1xf32>
    %1018 = arith.addf %1016, %1017 : vector<3x1xf32>
    %1019 = vector.extract_strided_slice %1015 {offsets = [0, 0], sizes = [3, 1], strides = [1, 1]} : vector<6x1xf32> to vector<3x1xf32>
    %1020 = vector.extract_strided_slice %1015 {offsets = [3, 0], sizes = [3, 1], strides = [1, 1]} : vector<6x1xf32> to vector<3x1xf32>
    %1021 = arith.addf %1019, %1020 : vector<3x1xf32>
    %cst_167 = arith.constant 4.8828125E-4 : f32
    %1022 = vector.broadcast %cst_167 : f32 to vector<3x1xf32>
    %1023 = arith.mulf %1018, %1022 : vector<3x1xf32>
    %cst_168 = arith.constant 4.8828125E-4 : f32
    %1024 = vector.broadcast %cst_168 : f32 to vector<3x1xf32>
    %1025 = arith.mulf %1021, %1024 : vector<3x1xf32>
    %1026 = arith.mulf %1023, %1023 : vector<3x1xf32>
    %1027 = arith.subf %1025, %1026 : vector<3x1xf32>
    %cst_169 = arith.constant 9.99999974E-6 : f32
    %1028 = vector.broadcast %cst_169 : f32 to vector<3x1xf32>
    %1029 = arith.addf %1027, %1028 : vector<3x1xf32>
    %1030 = math.rsqrt %1029 : vector<3x1xf32>
    %c0_170 = arith.constant 0 : index
    %c0_171 = arith.constant 0 : index
    %1031 = vector.load %arg21[%c0_170, %c0_171] : memref<3x1xf32, #tpu.memory_space<vmem>>, vector<3x1xf32>
    %1032 = arith.mulf %1030, %1031 : vector<3x1xf32>
    %1033 = tpu.concatenate %1023, %1023 in 0 : vector<3x1xf32>, vector<3x1xf32> -> vector<6x1xf32>
    %1034 = tpu.concatenate %1032, %1032 in 0 : vector<3x1xf32>, vector<3x1xf32> -> vector<6x1xf32>
    %c0_172 = arith.constant 0 : index
    %c0_173 = arith.constant 0 : index
    %1035 = vector.load %arg22[%c0_172, %c0_173] : memref<3x1xf32, #tpu.memory_space<vmem>>, vector<3x1xf32>
    %c0_174 = arith.constant 0 : index
    %c0_175 = arith.constant 0 : index
    %1036 = vector.load %arg22[%c0_174, %c0_175] : memref<3x1xf32, #tpu.memory_space<vmem>>, vector<3x1xf32>
    %1037 = tpu.concatenate %1035, %1036 in 0 : vector<3x1xf32>, vector<3x1xf32> -> vector<6x1xf32>
    %1038 = vector.broadcast %1033 : vector<6x1xf32> to vector<6x1024xf32>
    %1039 = arith.subf %1010, %1038 : vector<6x1024xf32>
    %1040 = vector.broadcast %1034 : vector<6x1xf32> to vector<6x1024xf32>
    %1041 = arith.mulf %1039, %1040 : vector<6x1024xf32>
    %1042 = vector.broadcast %1037 : vector<6x1xf32> to vector<6x1024xf32>
    %1043 = arith.addf %1041, %1042 : vector<6x1024xf32>
    %c0_176 = arith.constant 0 : index
    %c0_177 = arith.constant 0 : index
    %1044 = vector.load %arg25[%c0_176, %c0_177] : memref<6x1024xf32, #tpu.memory_space<vmem>>, vector<6x1024xf32>
    tpu.vector_store %arg25[%c0_176, %c0_177], %1043 {strides = array<i32>} : memref<6x1024xf32, #tpu.memory_space<vmem>>, vector<6x1024xf32>,
    return
  }
  func.func @transform_0(%arg0: i32) -> (i32, i32) {
    %c0_i32 = arith.constant 0 : i32
    %c0_i32_0 = arith.constant 0 : i32
    %c0_i32_1 = arith.constant 0 : i32
    return %c0_i32, %c0_i32_0 : i32, i32
  }
  func.func @transform_1(%arg0: i32) -> (i32, i32) {
    %c0_i32 = arith.constant 0 : i32
    %c0_i32_0 = arith.constant 0 : i32
    %c0_i32_1 = arith.constant 0 : i32
    return %c0_i32, %c0_i32_0 : i32, i32
  }
  func.func @transform_2(%arg0: i32) -> (i32, i32) {
    %c0_i32 = arith.constant 0 : i32
    %c0_i32_0 = arith.constant 0 : i32
    %c0_i32_1 = arith.constant 0 : i32
    return %c0_i32, %c0_i32_0 : i32, i32
  }
  func.func @transform_3(%arg0: i32) -> (i32, i32) {
    %c0_i32 = arith.constant 0 : i32
    %c0_i32_0 = arith.constant 0 : i32
    %c0_i32_1 = arith.constant 0 : i32
    return %c0_i32, %c0_i32_0 : i32, i32
  }
  func.func @transform_4(%arg0: i32) -> (i32, i32) {
    %c0_i32 = arith.constant 0 : i32
    %c0_i32_0 = arith.constant 0 : i32
    %c0_i32_1 = arith.constant 0 : i32
    return %c0_i32, %c0_i32_0 : i32, i32
  }
  func.func @transform_5(%arg0: i32) -> (i32, i32) {
    %c0_i32 = arith.constant 0 : i32
    %c0_i32_0 = arith.constant 0 : i32
    %c0_i32_1 = arith.constant 0 : i32
    return %c0_i32, %c0_i32_0 : i32, i32
  }
  func.func @transform_6(%arg0: i32) -> (i32, i32) {
    %c0_i32 = arith.constant 0 : i32
    %c0_i32_0 = arith.constant 0 : i32
    %c0_i32_1 = arith.constant 0 : i32
    return %c0_i32, %c0_i32_0 : i32, i32
  }
  func.func @transform_7(%arg0: i32) -> (i32, i32) {
    %c0_i32 = arith.constant 0 : i32
    %c0_i32_0 = arith.constant 0 : i32
    %c0_i32_1 = arith.constant 0 : i32
    return %c0_i32, %c0_i32_0 : i32, i32
  }
  func.func @transform_8(%arg0: i32) -> (i32, i32) {
    %c0_i32 = arith.constant 0 : i32
    %c0_i32_0 = arith.constant 0 : i32
    %c0_i32_1 = arith.constant 0 : i32
    return %c0_i32, %c0_i32_0 : i32, i32
  }
  func.func @transform_9(%arg0: i32) -> (i32, i32) {
    %c0_i32 = arith.constant 0 : i32
    %c0_i32_0 = arith.constant 0 : i32
    %c0_i32_1 = arith.constant 0 : i32
    return %c0_i32, %c0_i32_0 : i32, i32
  }
  func.func @transform_10(%arg0: i32) -> (i32, i32) {
    %c0_i32 = arith.constant 0 : i32
    %c0_i32_0 = arith.constant 0 : i32
    %c0_i32_1 = arith.constant 0 : i32
    return %c0_i32, %c0_i32_0 : i32, i32
  }
  func.func @transform_11(%arg0: i32) -> (i32, i32) {
    %c0_i32 = arith.constant 0 : i32
    %c0_i32_0 = arith.constant 0 : i32
    %c0_i32_1 = arith.constant 0 : i32
    return %c0_i32, %c0_i32_0 : i32, i32
  }
  func.func @transform_12(%arg0: i32) -> (i32, i32) {
    %c0_i32 = arith.constant 0 : i32
    %c0_i32_0 = arith.constant 0 : i32
    %c0_i32_1 = arith.constant 0 : i32
    return %c0_i32, %c0_i32_0 : i32, i32
  }
  func.func @transform_13(%arg0: i32) -> (i32, i32) {
    %c0_i32 = arith.constant 0 : i32
    %c0_i32_0 = arith.constant 0 : i32
    %c0_i32_1 = arith.constant 0 : i32
    return %c0_i32, %c0_i32_0 : i32, i32
  }
  func.func @transform_14(%arg0: i32) -> (i32, i32) {
    %c0_i32 = arith.constant 0 : i32
    %c0_i32_0 = arith.constant 0 : i32
    %c0_i32_1 = arith.constant 0 : i32
    return %c0_i32, %c0_i32_0 : i32, i32
  }
  func.func @transform_15(%arg0: i32) -> (i32, i32) {
    %c0_i32 = arith.constant 0 : i32
    %c0_i32_0 = arith.constant 0 : i32
    %c0_i32_1 = arith.constant 0 : i32
    return %c0_i32, %c0_i32_0 : i32, i32
  }
  func.func @transform_16(%arg0: i32) -> (i32, i32) {
    %c0_i32 = arith.constant 0 : i32
    %c0_i32_0 = arith.constant 0 : i32
    %c0_i32_1 = arith.constant 0 : i32
    return %c0_i32, %c0_i32_0 : i32, i32
  }
  func.func @transform_17(%arg0: i32) -> (i32, i32) {
    %c0_i32 = arith.constant 0 : i32
    %c0_i32_0 = arith.constant 0 : i32
    %c0_i32_1 = arith.constant 0 : i32
    return %c0_i32, %c0_i32_0 : i32, i32
  }
  func.func @transform_18(%arg0: i32) -> (i32, i32, i32) {
    %c0_i32 = arith.constant 0 : i32
    %c0_i32_0 = arith.constant 0 : i32
    %c0_i32_1 = arith.constant 0 : i32
    %c0_i32_2 = arith.constant 0 : i32
    return %c0_i32, %c0_i32_0, %c0_i32_1 : i32, i32, i32
  }
  func.func @transform_19(%arg0: i32) -> (i32, i32) {
    %c0_i32 = arith.constant 0 : i32
    %c0_i32_0 = arith.constant 0 : i32
    %c0_i32_1 = arith.constant 0 : i32
    return %c0_i32, %c0_i32_0 : i32, i32
  }
  func.func @transform_20(%arg0: i32) -> (i32, i32) {
    %c0_i32 = arith.constant 0 : i32
    %c0_i32_0 = arith.constant 0 : i32
    %c0_i32_1 = arith.constant 0 : i32
    return %c0_i32, %c0_i32_0 : i32, i32
  }
  func.func @transform_21(%arg0: i32) -> (i32, i32) {
    %c0_i32 = arith.constant 0 : i32
    %c0_i32_0 = arith.constant 0 : i32
    %c0_i32_1 = arith.constant 0 : i32
    return %c0_i32, %c0_i32_0 : i32, i32
  }
  func.func @transform_22(%arg0: i32) -> (i32, i32) {
    %c0_i32 = arith.constant 0 : i32
    %c0_i32_0 = arith.constant 0 : i32
    %c0_i32_1 = arith.constant 0 : i32
    return %c0_i32, %c0_i32_0 : i32, i32
  }
  func.func @transform_23(%arg0: i32) -> (i32, i32) {
    %c0_i32 = arith.constant 0 : i32
    %c0_i32_0 = arith.constant 0 : i32
    %c0_i32_1 = arith.constant 0 : i32
    return %c0_i32, %c0_i32_0 : i32, i32
  }
  func.func @transform_24(%arg0: i32) -> (i32, i32) {
    %c0_i32 = arith.constant 0 : i32
    %c0_i32_0 = arith.constant 0 : i32
    %c0_i32_1 = arith.constant 0 : i32
    return %c0_i32, %c0_i32_0 : i32, i32
  }
}

</mosaic_0001>

<llo_original>
// kernel: vae_forward.1
$region0: #{vae_forward.1}
  #allocation0 [shape = 'u32[]', space=smem, size = 0x4, offset = 0x4, fixed_abs, tag = 'smem constant byte address 0x4 - core index']
  #allocation1 [shape = 'u32[144,128]{1,0:T(1,128)}', space=vmem, size = 0x12000, scoped, tag = 'internal scratch']
  #allocation2 [shape = 'f32[8,256]{1,0:T(8,128)}', space=vmem, size = 0x2000, scoped, tag = 'scratch operand']
  #allocation3 [shape = 'f32[16,16]{1,0:T(8,128)}', space=vmem, size = 0x2000, scoped, tag = 'scratch operand']
  %s0 = inlined_call_operand.vmem [shape: f32[12,512], index: 0, kind: input, shape index: {}]
  %s1 = inlined_call_operand.vmem [shape: f32[2,256], index: 1, kind: input, shape index: {}]
  %s2 = inlined_call_operand.vmem [shape: f32[8,12], index: 2, kind: input, shape index: {}]
  %s3 = inlined_call_operand.vmem [shape: f32[8,1], index: 3, kind: input, shape index: {}]
  %s4 = inlined_call_operand.vmem [shape: f32[8,1], index: 4, kind: input, shape index: {}]
  %s5 = inlined_call_operand.vmem [shape: f32[8,1], index: 5, kind: input, shape index: {}]
  %s6 = inlined_call_operand.vmem [shape: f32[16,32], index: 6, kind: input, shape index: {}]
  %s7 = inlined_call_operand.vmem [shape: f32[16,1], index: 7, kind: input, shape index: {}]
  %s8 = inlined_call_operand.vmem [shape: f32[16,1], index: 8, kind: input, shape index: {}]
  %s9 = inlined_call_operand.vmem [shape: f32[16,1], index: 9, kind: input, shape index: {}]
  %s10 = inlined_call_operand.vmem [shape: f32[256,512], index: 10, kind: input, shape index: {}]
  %s11 = inlined_call_operand.vmem [shape: f32[1,512], index: 11, kind: input, shape index: {}]
  %s12 = inlined_call_operand.vmem [shape: f32[256,128], index: 12, kind: input, shape index: {}]
  %s13 = inlined_call_operand.vmem [shape: f32[1,128], index: 13, kind: input, shape index: {}]
  %s14 = inlined_call_operand.vmem [shape: f32[8,1], index: 14, kind: input, shape index: {}]
  %s15 = inlined_call_operand.vmem [shape: f32[8,1], index: 15, kind: input, shape index: {}]
  %s16 = inlined_call_operand.vmem [shape: f32[8,1], index: 16, kind: input, shape index: {}]
  %s17 = inlined_call_operand.vmem [shape: f32[16,256], index: 17, kind: input, shape index: {}]
  %s18 = inlined_call_operand.vmem [shape: f32[4,6,16], index: 18, kind: input, shape index: {}]
  %s19 = inlined_call_operand.vmem [shape: f32[6,1], index: 19, kind: input, shape index: {}]
  %s20 = inlined_call_operand.vmem [shape: f32[3,1], index: 20, kind: input, shape index: {}]
  %s21 = inlined_call_operand.vmem [shape: f32[3,1], index: 21, kind: input, shape index: {}]
  %s22 = inlined_call_operand.hbm [shape: f32[2,256], index: 22, kind: output, shape index: {0}]
  %s23 = inlined_call_operand.hbm [shape: f32[2,256], index: 23, kind: output, shape index: {1}]
  %s24 = inlined_call_operand.vmem [shape: f32[6,1024], index: 24, kind: output, shape index: {2}]
  %25 = xla_tuple %s22, %s23, %s24
  %s26 = sld [smem:[#allocation0]]
  $region114: #{vae_forward.1} parent=0
    _
  %s28 = ssub.s32 1, %s26
  %s29 = scalar_select 0, %s28, %s26
  $region1: #{vae_forward.1} parent=0
    #allocation4 [shape = 'u8[2048]{0}', space=vmem, size = 0x800, scoped, tag = 'output window, operand 0, single buffered']
    #allocation5 [shape = 's32[1]{0}', space=sflag, size = 0x4, scoped, tag = 'scoped memory for vae_forward.1']
    #allocation6 [shape = 'u8[2048]{0}', space=vmem, size = 0x800, scoped, tag = 'output window, operand 1, single buffered']
    #allocation7 [shape = 's32[1]{0}', space=sflag, size = 0x4, scoped, tag = 'scoped memory for vae_forward.1']
    %30 = vsyncpa [#allocation5], 0
    %31 = vsyncpa [#allocation7], 0
    // Predicated region
    $region2: #{vae_forward.1} parent=1 // pred_check
      _
    $region3: #{vae_forward.1} parent=1 // pred_check_branch
      %33 = sbr.rel (0) target = $region5
    $region4: #{vae_forward.1} parent=1 // pred_region
      _
    $region5: #{vae_forward.1} parent=1 // pred_fallthru
      _
    // Predicated region
    $region6: #{vae_forward.1} parent=1 // pred_check
      _
    $region7: #{vae_forward.1} parent=1 // pred_check_branch
      %35 = sbr.rel (0) target = $region9
    $region8: #{vae_forward.1} parent=1 // pred_region
      _
    $region9: #{vae_forward.1} parent=1 // pred_fallthru
      _
    // Predicated region
    $region10: #{vae_forward.1} parent=1 // pred_check
      _
    $region11: #{vae_forward.1} parent=1 // pred_check_branch
      %37 = sbr.rel (0) target = $region13
    $region12: #{vae_forward.1} parent=1 // pred_region
      _
    $region13: #{vae_forward.1} parent=1 // pred_fallthru
      _
    // Predicated region
    $region14: #{vae_forward.1} parent=1 // pred_check
      _
    $region15: #{vae_forward.1} parent=1 // pred_check_branch
      %39 = sbr.rel (0) target = $region17
    $region16: #{vae_forward.1} parent=1 // pred_region
      _
    $region17: #{vae_forward.1} parent=1 // pred_fallthru
      _
    // Predicated region
    $region18: #{vae_forward.1} parent=1 // pred_check
      _
    $region19: #{vae_forward.1} parent=1 // pred_check_branch
      %41 = sbr.rel (0) target = $region21
    $region20: #{vae_forward.1} parent=1 // pred_region
      _
    $region21: #{vae_forward.1} parent=1 // pred_fallthru
      _
    // Predicated region
    $region22: #{vae_forward.1} parent=1 // pred_check
      _
    $region23: #{vae_forward.1} parent=1 // pred_check_branch
      %43 = sbr.rel (0) target = $region25
    $region24: #{vae_forward.1} parent=1 // pred_region
      _
    $region25: #{vae_forward.1} parent=1 // pred_fallthru
      _
    // Predicated region
    $region26: #{vae_forward.1} parent=1 // pred_check
      _
    $region27: #{vae_forward.1} parent=1 // pred_check_branch
      %45 = sbr.rel (0) target = $region29
    $region28: #{vae_forward.1} parent=1 // pred_region
      _
    $region29: #{vae_forward.1} parent=1 // pred_fallthru
      _
    // Predicated region
    $region30: #{vae_forward.1} parent=1 // pred_check
      _
    $region31: #{vae_forward.1} parent=1 // pred_check_branch
      %47 = sbr.rel (0) target = $region33
    $region32: #{vae_forward.1} parent=1 // pred_region
      _
    $region33: #{vae_forward.1} parent=1 // pred_fallthru
      _
    // Predicated region
    $region34: #{vae_forward.1} parent=1 // pred_check
      _
    $region35: #{vae_forward.1} parent=1 // pred_check_branch
      %49 = sbr.rel (0) target = $region37
    $region36: #{vae_forward.1} parent=1 // pred_region
      _
    $region37: #{vae_forward.1} parent=1 // pred_fallthru
      _
    // Predicated region
    $region38: #{vae_forward.1} parent=1 // pred_check
      _
    $region39: #{vae_forward.1} parent=1 // pred_check_branch
      %51 = sbr.rel (0) target = $region41
    $region40: #{vae_forward.1} parent=1 // pred_region
      _
    $region41: #{vae_forward.1} parent=1 // pred_fallthru
      _
    // Predicated region
    $region42: #{vae_forward.1} parent=1 // pred_check
      _
    $region43: #{vae_forward.1} parent=1 // pred_check_branch
      %53 = sbr.rel (0) target = $region45
    $region44: #{vae_forward.1} parent=1 // pred_region
      _
    $region45: #{vae_forward.1} parent=1 // pred_fallthru
      _
    // Predicated region
    $region46: #{vae_forward.1} parent=1 // pred_check
      _
    $region47: #{vae_forward.1} parent=1 // pred_check_branch
      %55 = sbr.rel (0) target = $region49
    $region48: #{vae_forward.1} parent=1 // pred_region
      _
    $region49: #{vae_forward.1} parent=1 // pred_fallthru
      _
    // Predicated region
    $region50: #{vae_forward.1} parent=1 // pred_check
      _
    $region51: #{vae_forward.1} parent=1 // pred_check_branch
      %57 = sbr.rel (0) target = $region53
    $region52: #{vae_forward.1} parent=1 // pred_region
      _
    $region53: #{vae_forward.1} parent=1 // pred_fallthru
      _
    // Predicated region
    $region54: #{vae_forward.1} parent=1 // pred_check
      _
    $region55: #{vae_forward.1} parent=1 // pred_check_branch
      %59 = sbr.rel (0) target = $region57
    $region56: #{vae_forward.1} parent=1 // pred_region
      _
    $region57: #{vae_forward.1} parent=1 // pred_fallthru
      _
    // Predicated region
    $region58: #{vae_forward.1} parent=1 // pred_check
      _
    $region59: #{vae_forward.1} parent=1 // pred_check_branch
      %61 = sbr.rel (0) target = $region61
    $region60: #{vae_forward.1} parent=1 // pred_region
      _
    $region61: #{vae_forward.1} parent=1 // pred_fallthru
      _
    // Predicated region
    $region62: #{vae_forward.1} parent=1 // pred_check
      _
    $region63: #{vae_forward.1} parent=1 // pred_check_branch
      %63 = sbr.rel (0) target = $region65
    $region64: #{vae_forward.1} parent=1 // pred_region
      _
    $region65: #{vae_forward.1} parent=1 // pred_fallthru
      _
    // Predicated region
    $region66: #{vae_forward.1} parent=1 // pred_check
      _
    $region67: #{vae_forward.1} parent=1 // pred_check_branch
      %65 = sbr.rel (0) target = $region69
    $region68: #{vae_forward.1} parent=1 // pred_region
      _
    $region69: #{vae_forward.1} parent=1 // pred_fallthru
      _
    // Predicated region
    $region70: #{vae_forward.1} parent=1 // pred_check
      _
    $region71: #{vae_forward.1} parent=1 // pred_check_branch
      %67 = sbr.rel (0) target = $region73
    $region72: #{vae_forward.1} parent=1 // pred_region
      _
    $region73: #{vae_forward.1} parent=1 // pred_fallthru
      _
    // Predicated region
    $region74: #{vae_forward.1} parent=1 // pred_check
      _
    $region75: #{vae_forward.1} parent=1 // pred_check_branch
      %69 = sbr.rel (0) target = $region77
    $region76: #{vae_forward.1} parent=1 // pred_region
      _
    $region77: #{vae_forward.1} parent=1 // pred_fallthru
      _
    // Predicated region
    $region78: #{vae_forward.1} parent=1 // pred_check
      _
    $region79: #{vae_forward.1} parent=1 // pred_check_branch
      %71 = sbr.rel (0) target = $region81
    $region80: #{vae_forward.1} parent=1 // pred_region
      _
    $region81: #{vae_forward.1} parent=1 // pred_fallthru
      _
    // Predicated region
    $region82: #{vae_forward.1} parent=1 // pred_check
      _
    $region83: #{vae_forward.1} parent=1 // pred_check_branch
      %73 = sbr.rel (0) target = $region85
    $region84: #{vae_forward.1} parent=1 // pred_region
      _
    $region85: #{vae_forward.1} parent=1 // pred_fallthru
      _
    // Predicated region
    $region86: #{vae_forward.1} parent=1 // pred_check
      _
    $region87: #{vae_forward.1} parent=1 // pred_check_branch
      %75 = sbr.rel (0) target = $region89
    $region88: #{vae_forward.1} parent=1 // pred_region
      _
    $region89: #{vae_forward.1} parent=1 // pred_fallthru
      _
    %v76 = vld [vmem:[%s2] sm:$0xff]
    %v77 = vld [vmem:[%s0] sm:$0xff]
    %v78 = vld [vmem:[%s0 + $0x8] sm:$0xff]
    %v79 = vld [vmem:[%s0 + $0x10] sm:$0xff]
    %v80 = vld [vmem:[%s0 + $0x18] sm:$0xff]
    %v81 = vld [vmem:[%s0 + $0x20] sm:$0xf]
    %v82 = vld [vmem:[%s0 + $0x28] sm:$0xf]
    %v83 = vld [vmem:[%s0 + $0x30] sm:$0xf]
    %v84 = vld [vmem:[%s0 + $0x38] sm:$0xf]
    %86 = vset.pattern.permute.xlu0 0
    %87 = vperm.xlu0 %86, %v76
    %v88 = vpop.permute.xlu0 %87
    %v90 = vlaneseq
    %v91 = vshrl.u32 %v90, 7
    %v92 = vsub.s32 0, %v91
    %v93 = vrot.slane %v77, %v92
    %v94 = vlaneseq
    %v95 = vshrl.u32 %v94, 7
    %v96 = vsub.s32 0, %v95
    %v97 = vrot.slane %v78, %v96
    %v98 = vlaneseq
    %v99 = vshrl.u32 %v98, 7
    %v100 = vsub.s32 0, %v99
    %v101 = vrot.slane %v79, %v100
    %v102 = vlaneseq
    %v103 = vshrl.u32 %v102, 7
    %v104 = vsub.s32 0, %v103
    %v105 = vrot.slane %v80, %v104
    %v106 = vmul.f32 %v88, %v93
    %v107 = vmul.f32 %v88, %v97
    %v108 = vmul.f32 %v88, %v101
    %v109 = vmul.f32 %v88, %v105
    %110 = vset.pattern.permute.xlu0 1
    %111 = vperm.xlu0 %110, %v76
    %v112 = vpop.permute.xlu0 %111
    %v114 = vlaneseq
    %v115 = vshrl.u32 %v114, 7
    %v116 = vsub.s32 1, %v115
    %v117 = vrot.slane %v77, %v116
    %v118 = vlaneseq
    %v119 = vshrl.u32 %v118, 7
    %v120 = vsub.s32 1, %v119
    %v121 = vrot.slane %v78, %v120
    %v122 = vlaneseq
    %v123 = vshrl.u32 %v122, 7
    %v124 = vsub.s32 1, %v123
    %v125 = vrot.slane %v79, %v124
    %v126 = vlaneseq
    %v127 = vshrl.u32 %v126, 7
    %v128 = vsub.s32 1, %v127
    %v129 = vrot.slane %v80, %v128
    %v130 = vmul.f32 %v112, %v117
    %v131 = vmul.f32 %v112, %v121
    %v132 = vmul.f32 %v112, %v125
    %v133 = vmul.f32 %v112, %v129
    %v134 = vadd.f32 %v106, %v130
    %v135 = vadd.f32 %v107, %v131
    %v136 = vadd.f32 %v108, %v132
    %v137 = vadd.f32 %v109, %v133
    %138 = vset.pattern.permute.xlu0 2
    %139 = vperm.xlu0 %138, %v76
    %v140 = vpop.permute.xlu0 %139
    %v142 = vlaneseq
    %v143 = vshrl.u32 %v142, 7
    %v144 = vsub.s32 2, %v143
    %v145 = vrot.slane %v77, %v144
    %v146 = vlaneseq
    %v147 = vshrl.u32 %v146, 7
    %v148 = vsub.s32 2, %v147
    %v149 = vrot.slane %v78, %v148
    %v150 = vlaneseq
    %v151 = vshrl.u32 %v150, 7
    %v152 = vsub.s32 2, %v151
    %v153 = vrot.slane %v79, %v152
    %v154 = vlaneseq
    %v155 = vshrl.u32 %v154, 7
    %v156 = vsub.s32 2, %v155
    %v157 = vrot.slane %v80, %v156
    %v158 = vmul.f32 %v140, %v145
    %v159 = vmul.f32 %v140, %v149
    %v160 = vmul.f32 %v140, %v153
    %v161 = vmul.f32 %v140, %v157
    %v162 = vadd.f32 %v134, %v158
    %v163 = vadd.f32 %v135, %v159
    %v164 = vadd.f32 %v136, %v160
    %v165 = vadd.f32 %v137, %v161
    %166 = vset.pattern.permute.xlu0 3
    %167 = vperm.xlu0 %166, %v76
    %v168 = vpop.permute.xlu0 %167
    %v170 = vlaneseq
    %v171 = vshrl.u32 %v170, 7
    %v172 = vsub.s32 3, %v171
    %v173 = vrot.slane %v77, %v172
    %v174 = vlaneseq
    %v175 = vshrl.u32 %v174, 7
    %v176 = vsub.s32 3, %v175
    %v177 = vrot.slane %v78, %v176
    %v178 = vlaneseq
    %v179 = vshrl.u32 %v178, 7
    %v180 = vsub.s32 3, %v179
    %v181 = vrot.slane %v79, %v180
    %v182 = vlaneseq
    %v183 = vshrl.u32 %v182, 7
    %v184 = vsub.s32 3, %v183
    %v185 = vrot.slane %v80, %v184
    %v186 = vmul.f32 %v168, %v173
    %v187 = vmul.f32 %v168, %v177
    %v188 = vmul.f32 %v168, %v181
    %v189 = vmul.f32 %v168, %v185
    %v190 = vadd.f32 %v162, %v186
    %v191 = vadd.f32 %v163, %v187
    %v192 = vadd.f32 %v164, %v188
    %v193 = vadd.f32 %v165, %v189
    %194 = vset.pattern.permute.xlu0 4
    %195 = vperm.xlu0 %194, %v76
    %v196 = vpop.permute.xlu0 %195
    %v198 = vlaneseq
    %v199 = vshrl.u32 %v198, 7
    %v200 = vsub.s32 4, %v199
    %v201 = vrot.slane %v77, %v200
    %v202 = vlaneseq
    %v203 = vshrl.u32 %v202, 7
    %v204 = vsub.s32 4, %v203
    %v205 = vrot.slane %v78, %v204
    %v206 = vlaneseq
    %v207 = vshrl.u32 %v206, 7
    %v208 = vsub.s32 4, %v207
    %v209 = vrot.slane %v79, %v208
    %v210 = vlaneseq
    %v211 = vshrl.u32 %v210, 7
    %v212 = vsub.s32 4, %v211
    %v213 = vrot.slane %v80, %v212
    %v214 = vmul.f32 %v196, %v201
    %v215 = vmul.f32 %v196, %v205
    %v216 = vmul.f32 %v196, %v209
    %v217 = vmul.f32 %v196, %v213
    %v218 = vadd.f32 %v190, %v214
    %v219 = vadd.f32 %v191, %v215
    %v220 = vadd.f32 %v192, %v216
    %v221 = vadd.f32 %v193, %v217
    %222 = vset.pattern.permute.xlu0 5
    %223 = vperm.xlu0 %222, %v76
    %v224 = vpop.permute.xlu0 %223
    %v226 = vlaneseq
    %v227 = vshrl.u32 %v226, 7
    %v228 = vsub.s32 5, %v227
    %v229 = vrot.slane %v77, %v228
    %v230 = vlaneseq
    %v231 = vshrl.u32 %v230, 7
    %v232 = vsub.s32 5, %v231
    %v233 = vrot.slane %v78, %v232
    %v234 = vlaneseq
    %v235 = vshrl.u32 %v234, 7
    %v236 = vsub.s32 5, %v235
    %v237 = vrot.slane %v79, %v236
    %v238 = vlaneseq
    %v239 = vshrl.u32 %v238, 7
    %v240 = vsub.s32 5, %v239
    %v241 = vrot.slane %v80, %v240
    %v242 = vmul.f32 %v224, %v229
    %v243 = vmul.f32 %v224, %v233
    %v244 = vmul.f32 %v224, %v237
    %v245 = vmul.f32 %v224, %v241
    %v246 = vadd.f32 %v218, %v242
    %v247 = vadd.f32 %v219, %v243
    %v248 = vadd.f32 %v220, %v244
    %v249 = vadd.f32 %v221, %v245
    %250 = vset.pattern.permute.xlu0 6
    %251 = vperm.xlu0 %250, %v76
    %v252 = vpop.permute.xlu0 %251
    %v254 = vlaneseq
    %v255 = vshrl.u32 %v254, 7
    %v256 = vsub.s32 6, %v255
    %v257 = vrot.slane %v77, %v256
    %v258 = vlaneseq
    %v259 = vshrl.u32 %v258, 7
    %v260 = vsub.s32 6, %v259
    %v261 = vrot.slane %v78, %v260
    %v262 = vlaneseq
    %v263 = vshrl.u32 %v262, 7
    %v264 = vsub.s32 6, %v263
    %v265 = vrot.slane %v79, %v264
    %v266 = vlaneseq
    %v267 = vshrl.u32 %v266, 7
    %v268 = vsub.s32 6, %v267
    %v269 = vrot.slane %v80, %v268
    %v270 = vmul.f32 %v252, %v257
    %v271 = vmul.f32 %v252, %v261
    %v272 = vmul.f32 %v252, %v265
    %v273 = vmul.f32 %v252, %v269
    %v274 = vadd.f32 %v246, %v270
    %v275 = vadd.f32 %v247, %v271
    %v276 = vadd.f32 %v248, %v272
    %v277 = vadd.f32 %v249, %v273
    %278 = vset.pattern.permute.xlu0 7
    %279 = vperm.xlu0 %278, %v76
    %v280 = vpop.permute.xlu0 %279
    %v282 = vlaneseq
    %v283 = vshrl.u32 %v282, 7
    %v284 = vsub.s32 7, %v283
    %v285 = vrot.slane %v77, %v284
    %v286 = vlaneseq
    %v287 = vshrl.u32 %v286, 7
    %v288 = vsub.s32 7, %v287
    %v289 = vrot.slane %v78, %v288
    %v290 = vlaneseq
    %v291 = vshrl.u32 %v290, 7
    %v292 = vsub.s32 7, %v291
    %v293 = vrot.slane %v79, %v292
    %v294 = vlaneseq
    %v295 = vshrl.u32 %v294, 7
    %v296 = vsub.s32 7, %v295
    %v297 = vrot.slane %v80, %v296
    %v298 = vmul.f32 %v280, %v285
    %v299 = vmul.f32 %v280, %v289
    %v300 = vmul.f32 %v280, %v293
    %v301 = vmul.f32 %v280, %v297
    %v302 = vadd.f32 %v274, %v298
    %v303 = vadd.f32 %v275, %v299
    %v304 = vadd.f32 %v276, %v300
    %v305 = vadd.f32 %v277, %v301
    %306 = vset.pattern.permute.xlu0 8
    %307 = vperm.xlu0 %306, %v76
    %v308 = vpop.permute.xlu0 %307
    %v310 = vlaneseq
    %v311 = vshrl.u32 %v310, 7
    %v312 = vsub.s32 0, %v311
    %v313 = vrot.slane %v81, %v312
    %v314 = vlaneseq
    %v315 = vshrl.u32 %v314, 7
    %v316 = vsub.s32 0, %v315
    %v317 = vrot.slane %v82, %v316
    %v318 = vlaneseq
    %v319 = vshrl.u32 %v318, 7
    %v320 = vsub.s32 0, %v319
    %v321 = vrot.slane %v83, %v320
    %v322 = vlaneseq
    %v323 = vshrl.u32 %v322, 7
    %v324 = vsub.s32 0, %v323
    %v325 = vrot.slane %v84, %v324
    %v326 = vmul.f32 %v308, %v313
    %v327 = vmul.f32 %v308, %v317
    %v328 = vmul.f32 %v308, %v321
    %v329 = vmul.f32 %v308, %v325
    %v330 = vadd.f32 %v302, %v326
    %v331 = vadd.f32 %v303, %v327
    %v332 = vadd.f32 %v304, %v328
    %v333 = vadd.f32 %v305, %v329
    %334 = vset.pattern.permute.xlu0 9
    %335 = vperm.xlu0 %334, %v76
    %v336 = vpop.permute.xlu0 %335
    %v338 = vlaneseq
    %v339 = vshrl.u32 %v338, 7
    %v340 = vsub.s32 1, %v339
    %v341 = vrot.slane %v81, %v340
    %v342 = vlaneseq
    %v343 = vshrl.u32 %v342, 7
    %v344 = vsub.s32 1, %v343
    %v345 = vrot.slane %v82, %v344
    %v346 = vlaneseq
    %v347 = vshrl.u32 %v346, 7
    %v348 = vsub.s32 1, %v347
    %v349 = vrot.slane %v83, %v348
    %v350 = vlaneseq
    %v351 = vshrl.u32 %v350, 7
    %v352 = vsub.s32 1, %v351
    %v353 = vrot.slane %v84, %v352
    %v354 = vmul.f32 %v336, %v341
    %v355 = vmul.f32 %v336, %v345
    %v356 = vmul.f32 %v336, %v349
    %v357 = vmul.f32 %v336, %v353
    %v358 = vadd.f32 %v330, %v354
    %v359 = vadd.f32 %v331, %v355
    %v360 = vadd.f32 %v332, %v356
    %v361 = vadd.f32 %v333, %v357
    %362 = vset.pattern.permute.xlu0 10
    %363 = vperm.xlu0 %362, %v76
    %v364 = vpop.permute.xlu0 %363
    %v366 = vlaneseq
    %v367 = vshrl.u32 %v366, 7
    %v368 = vsub.s32 2, %v367
    %v369 = vrot.slane %v81, %v368
    %v370 = vlaneseq
    %v371 = vshrl.u32 %v370, 7
    %v372 = vsub.s32 2, %v371
    %v373 = vrot.slane %v82, %v372
    %v374 = vlaneseq
    %v375 = vshrl.u32 %v374, 7
    %v376 = vsub.s32 2, %v375
    %v377 = vrot.slane %v83, %v376
    %v378 = vlaneseq
    %v379 = vshrl.u32 %v378, 7
    %v380 = vsub.s32 2, %v379
    %v381 = vrot.slane %v84, %v380
    %v382 = vmul.f32 %v364, %v369
    %v383 = vmul.f32 %v364, %v373
    %v384 = vmul.f32 %v364, %v377
    %v385 = vmul.f32 %v364, %v381
    %v386 = vadd.f32 %v358, %v382
    %v387 = vadd.f32 %v359, %v383
    %v388 = vadd.f32 %v360, %v384
    %v389 = vadd.f32 %v361, %v385
    %390 = vset.pattern.permute.xlu0 11
    %391 = vperm.xlu0 %390, %v76
    %v392 = vpop.permute.xlu0 %391
    %v394 = vlaneseq
    %v395 = vshrl.u32 %v394, 7
    %v396 = vsub.s32 3, %v395
    %v397 = vrot.slane %v81, %v396
    %v398 = vlaneseq
    %v399 = vshrl.u32 %v398, 7
    %v400 = vsub.s32 3, %v399
    %v401 = vrot.slane %v82, %v400
    %v402 = vlaneseq
    %v403 = vshrl.u32 %v402, 7
    %v404 = vsub.s32 3, %v403
    %v405 = vrot.slane %v83, %v404
    %v406 = vlaneseq
    %v407 = vshrl.u32 %v406, 7
    %v408 = vsub.s32 3, %v407
    %v409 = vrot.slane %v84, %v408
    %v410 = vmul.f32 %v392, %v397
    %v411 = vmul.f32 %v392, %v401
    %v412 = vmul.f32 %v392, %v405
    %v413 = vmul.f32 %v392, %v409
    %v414 = vadd.f32 %v386, %v410
    %v415 = vadd.f32 %v387, %v411
    %v416 = vadd.f32 %v388, %v412
    %v417 = vadd.f32 %v389, %v413
    %v418 = vld [vmem:[%s3] sm:$0xff]
    %420 = vset.pattern.permute.xlu0 0
    %421 = vperm.xlu0 %420, %v418
    %v422 = vpop.permute.xlu0 %421
    %v424 = vadd.f32 %v414, %v422
    %v425 = vadd.f32 %v415, %v422
    %v426 = vadd.f32 %v416, %v422
    %v427 = vadd.f32 %v417, %v422
    %v428 = vmax.f32 %v424, 0.0
    %v429 = vmax.f32 %v425, 0.0
    %v430 = vmax.f32 %v426, 0.0
    %v431 = vmax.f32 %v427, 0.0
    %v432 = vld [vmem:[%s4] sm:$0xff]
    %v433 = vld [vmem:[%s5] sm:$0xff]
    %v434 = vadd.f32 %v428, %v429
    %v435 = vadd.f32 %v434, %v430
    %v436 = vadd.f32 %v435, %v431
    %437 = vadd.xlane.f32.xlu0 %v436
    %v438 = vpop.xlane.xlu0 %437
    %v439 = vmul.f32 %v428, %v428
    %v440 = vmul.f32 %v429, %v429
    %v441 = vmul.f32 %v430, %v430
    %v442 = vmul.f32 %v431, %v431
    %v443 = vadd.f32 %v439, %v440
    %v444 = vadd.f32 %v443, %v441
    %v445 = vadd.f32 %v444, %v442
    %446 = vadd.xlane.f32.xlu0 %v445
    %v447 = vpop.xlane.xlu0 %446
    %v448 = vmul.f32 %v438, 0.001953125
    %v449 = vmul.f32 %v447, 0.001953125
    %v450 = vmul.f32 %v448, %v448
    %v451 = vsub.f32 %v449, %v450
    %v452 = vadd.f32 %v451, 1e-05
    %v453 = vrsqrt.pop %v452
    %v454 = vmul.f32 %v453, %v432
    %v455 = vsub.f32 %v428, %v448
    %v456 = vsub.f32 %v429, %v448
    %v457 = vsub.f32 %v430, %v448
    %v458 = vsub.f32 %v431, %v448
    %460 = vset.pattern.permute.xlu0 0
    %461 = vperm.xlu0 %460, %v454
    %v462 = vpop.permute.xlu0 %461
    %v464 = vmul.f32 %v455, %v462
    %v465 = vmul.f32 %v456, %v462
    %v466 = vmul.f32 %v457, %v462
    %v467 = vmul.f32 %v458, %v462
    %469 = vset.pattern.permute.xlu0 0
    %470 = vperm.xlu0 %469, %v433
    %v471 = vpop.permute.xlu0 %470
    %v473 = vadd.f32 %v464, %v471
    %v474 = vadd.f32 %v465, %v471
    %v475 = vadd.f32 %v466, %v471
    %v476 = vadd.f32 %v467, %v471
    %v477 = vadd.f32 %v473, %v474
    %v478 = vadd.f32 %v477, %v475
    %v479 = vadd.f32 %v478, %v476
    %v480 = vmul.f32 %v479, 0.25
    %482 = vrot.lane.b32.xlu0 %v480, 96
    %v483 = vpop.permute.xlu0 %482
    %485 = vrot.lane.b32.xlu0 %v480, 64
    %v486 = vpop.permute.xlu0 %485
    %488 = vrot.lane.b32.xlu0 %v480, 32
    %v489 = vpop.permute.xlu0 %488
    %v491 = vld [vmem:[%s6] sm:$0xff]
    %v492 = vld [vmem:[%s6 + $0x8] sm:$0xff]
    %494 = vset.pattern.permute.xlu0 0
    %495 = vperm.xlu0 %494, %v491
    %v496 = vpop.permute.xlu0 %495
    %499 = vset.pattern.permute.xlu0 0
    %500 = vperm.xlu0 %499, %v492
    %v501 = vpop.permute.xlu0 %500
    %v503 = vlaneseq
    %v504 = vshrl.u32 %v503, 7
    %v505 = vsub.s32 0, %v504
    %v506 = vrot.slane %v480, %v505
    %v507 = vmul.f32 %v496, %v506
    %v508 = vmul.f32 %v501, %v506
    %509 = vset.pattern.permute.xlu0 1
    %510 = vperm.xlu0 %509, %v491
    %v511 = vpop.permute.xlu0 %510
    %513 = vset.pattern.permute.xlu0 1
    %514 = vperm.xlu0 %513, %v492
    %v515 = vpop.permute.xlu0 %514
    %v517 = vlaneseq
    %v518 = vshrl.u32 %v517, 7
    %v519 = vsub.s32 1, %v518
    %v520 = vrot.slane %v480, %v519
    %v521 = vmul.f32 %v511, %v520
    %v522 = vmul.f32 %v515, %v520
    %v523 = vadd.f32 %v507, %v521
    %v524 = vadd.f32 %v508, %v522
    %525 = vset.pattern.permute.xlu0 2
    %526 = vperm.xlu0 %525, %v491
    %v527 = vpop.permute.xlu0 %526
    %529 = vset.pattern.permute.xlu0 2
    %530 = vperm.xlu0 %529, %v492
    %v531 = vpop.permute.xlu0 %530
    %v533 = vlaneseq
    %v534 = vshrl.u32 %v533, 7
    %v535 = vsub.s32 2, %v534
    %v536 = vrot.slane %v480, %v535
    %v537 = vmul.f32 %v527, %v536
    %v538 = vmul.f32 %v531, %v536
    %v539 = vadd.f32 %v523, %v537
    %v540 = vadd.f32 %v524, %v538
    %541 = vset.pattern.permute.xlu0 3
    %542 = vperm.xlu0 %541, %v491
    %v543 = vpop.permute.xlu0 %542
    %545 = vset.pattern.permute.xlu0 3
    %546 = vperm.xlu0 %545, %v492
    %v547 = vpop.permute.xlu0 %546
    %v549 = vlaneseq
    %v550 = vshrl.u32 %v549, 7
    %v551 = vsub.s32 3, %v550
    %v552 = vrot.slane %v480, %v551
    %v553 = vmul.f32 %v543, %v552
    %v554 = vmul.f32 %v547, %v552
    %v555 = vadd.f32 %v539, %v553
    %v556 = vadd.f32 %v540, %v554
    %557 = vset.pattern.permute.xlu0 4
    %558 = vperm.xlu0 %557, %v491
    %v559 = vpop.permute.xlu0 %558
    %561 = vset.pattern.permute.xlu0 4
    %562 = vperm.xlu0 %561, %v492
    %v563 = vpop.permute.xlu0 %562
    %v565 = vlaneseq
    %v566 = vshrl.u32 %v565, 7
    %v567 = vsub.s32 4, %v566
    %v568 = vrot.slane %v480, %v567
    %v569 = vmul.f32 %v559, %v568
    %v570 = vmul.f32 %v563, %v568
    %v571 = vadd.f32 %v555, %v569
    %v572 = vadd.f32 %v556, %v570
    %573 = vset.pattern.permute.xlu0 5
    %574 = vperm.xlu0 %573, %v491
    %v575 = vpop.permute.xlu0 %574
    %577 = vset.pattern.permute.xlu0 5
    %578 = vperm.xlu0 %577, %v492
    %v579 = vpop.permute.xlu0 %578
    %v581 = vlaneseq
    %v582 = vshrl.u32 %v581, 7
    %v583 = vsub.s32 5, %v582
    %v584 = vrot.slane %v480, %v583
    %v585 = vmul.f32 %v575, %v584
    %v586 = vmul.f32 %v579, %v584
    %v587 = vadd.f32 %v571, %v585
    %v588 = vadd.f32 %v572, %v586
    %589 = vset.pattern.permute.xlu0 6
    %590 = vperm.xlu0 %589, %v491
    %v591 = vpop.permute.xlu0 %590
    %593 = vset.pattern.permute.xlu0 6
    %594 = vperm.xlu0 %593, %v492
    %v595 = vpop.permute.xlu0 %594
    %v597 = vlaneseq
    %v598 = vshrl.u32 %v597, 7
    %v599 = vsub.s32 6, %v598
    %v600 = vrot.slane %v480, %v599
    %v601 = vmul.f32 %v591, %v600
    %v602 = vmul.f32 %v595, %v600
    %v603 = vadd.f32 %v587, %v601
    %v604 = vadd.f32 %v588, %v602
    %605 = vset.pattern.permute.xlu0 7
    %606 = vperm.xlu0 %605, %v491
    %v607 = vpop.permute.xlu0 %606
    %609 = vset.pattern.permute.xlu0 7
    %610 = vperm.xlu0 %609, %v492
    %v611 = vpop.permute.xlu0 %610
    %v613 = vlaneseq
    %v614 = vshrl.u32 %v613, 7
    %v615 = vsub.s32 7, %v614
    %v616 = vrot.slane %v480, %v615
    %v617 = vmul.f32 %v607, %v616
    %v618 = vmul.f32 %v611, %v616
    %v619 = vadd.f32 %v603, %v617
    %v620 = vadd.f32 %v604, %v618
    %621 = vset.pattern.permute.xlu0 8
    %622 = vperm.xlu0 %621, %v491
    %v623 = vpop.permute.xlu0 %622
    %625 = vset.pattern.permute.xlu0 8
    %626 = vperm.xlu0 %625, %v492
    %v627 = vpop.permute.xlu0 %626
    %v629 = vlaneseq
    %v630 = vshrl.u32 %v629, 7
    %v631 = vsub.s32 0, %v630
    %v632 = vrot.slane %v483, %v631
    %v633 = vmul.f32 %v623, %v632
    %v634 = vmul.f32 %v627, %v632
    %v635 = vadd.f32 %v619, %v633
    %v636 = vadd.f32 %v620, %v634
    %637 = vset.pattern.permute.xlu0 9
    %638 = vperm.xlu0 %637, %v491
    %v639 = vpop.permute.xlu0 %638
    %641 = vset.pattern.permute.xlu0 9
    %642 = vperm.xlu0 %641, %v492
    %v643 = vpop.permute.xlu0 %642
    %v645 = vlaneseq
    %v646 = vshrl.u32 %v645, 7
    %v647 = vsub.s32 1, %v646
    %v648 = vrot.slane %v483, %v647
    %v649 = vmul.f32 %v639, %v648
    %v650 = vmul.f32 %v643, %v648
    %v651 = vadd.f32 %v635, %v649
    %v652 = vadd.f32 %v636, %v650
    %653 = vset.pattern.permute.xlu0 10
    %654 = vperm.xlu0 %653, %v491
    %v655 = vpop.permute.xlu0 %654
    %657 = vset.pattern.permute.xlu0 10
    %658 = vperm.xlu0 %657, %v492
    %v659 = vpop.permute.xlu0 %658
    %v661 = vlaneseq
    %v662 = vshrl.u32 %v661, 7
    %v663 = vsub.s32 2, %v662
    %v664 = vrot.slane %v483, %v663
    %v665 = vmul.f32 %v655, %v664
    %v666 = vmul.f32 %v659, %v664
    %v667 = vadd.f32 %v651, %v665
    %v668 = vadd.f32 %v652, %v666
    %669 = vset.pattern.permute.xlu0 11
    %670 = vperm.xlu0 %669, %v491
    %v671 = vpop.permute.xlu0 %670
    %673 = vset.pattern.permute.xlu0 11
    %674 = vperm.xlu0 %673, %v492
    %v675 = vpop.permute.xlu0 %674
    %v677 = vlaneseq
    %v678 = vshrl.u32 %v677, 7
    %v679 = vsub.s32 3, %v678
    %v680 = vrot.slane %v483, %v679
    %v681 = vmul.f32 %v671, %v680
    %v682 = vmul.f32 %v675, %v680
    %v683 = vadd.f32 %v667, %v681
    %v684 = vadd.f32 %v668, %v682
    %685 = vset.pattern.permute.xlu0 12
    %686 = vperm.xlu0 %685, %v491
    %v687 = vpop.permute.xlu0 %686
    %689 = vset.pattern.permute.xlu0 12
    %690 = vperm.xlu0 %689, %v492
    %v691 = vpop.permute.xlu0 %690
    %v693 = vlaneseq
    %v694 = vshrl.u32 %v693, 7
    %v695 = vsub.s32 4, %v694
    %v696 = vrot.slane %v483, %v695
    %v697 = vmul.f32 %v687, %v696
    %v698 = vmul.f32 %v691, %v696
    %v699 = vadd.f32 %v683, %v697
    %v700 = vadd.f32 %v684, %v698
    %701 = vset.pattern.permute.xlu0 13
    %702 = vperm.xlu0 %701, %v491
    %v703 = vpop.permute.xlu0 %702
    %705 = vset.pattern.permute.xlu0 13
    %706 = vperm.xlu0 %705, %v492
    %v707 = vpop.permute.xlu0 %706
    %v709 = vlaneseq
    %v710 = vshrl.u32 %v709, 7
    %v711 = vsub.s32 5, %v710
    %v712 = vrot.slane %v483, %v711
    %v713 = vmul.f32 %v703, %v712
    %v714 = vmul.f32 %v707, %v712
    %v715 = vadd.f32 %v699, %v713
    %v716 = vadd.f32 %v700, %v714
    %717 = vset.pattern.permute.xlu0 14
    %718 = vperm.xlu0 %717, %v491
    %v719 = vpop.permute.xlu0 %718
    %721 = vset.pattern.permute.xlu0 14
    %722 = vperm.xlu0 %721, %v492
    %v723 = vpop.permute.xlu0 %722
    %v725 = vlaneseq
    %v726 = vshrl.u32 %v725, 7
    %v727 = vsub.s32 6, %v726
    %v728 = vrot.slane %v483, %v727
    %v729 = vmul.f32 %v719, %v728
    %v730 = vmul.f32 %v723, %v728
    %v731 = vadd.f32 %v715, %v729
    %v732 = vadd.f32 %v716, %v730
    %733 = vset.pattern.permute.xlu0 15
    %734 = vperm.xlu0 %733, %v491
    %v735 = vpop.permute.xlu0 %734
    %737 = vset.pattern.permute.xlu0 15
    %738 = vperm.xlu0 %737, %v492
    %v739 = vpop.permute.xlu0 %738
    %v741 = vlaneseq
    %v742 = vshrl.u32 %v741, 7
    %v743 = vsub.s32 7, %v742
    %v744 = vrot.slane %v483, %v743
    %v745 = vmul.f32 %v735, %v744
    %v746 = vmul.f32 %v739, %v744
    %v747 = vadd.f32 %v731, %v745
    %v748 = vadd.f32 %v732, %v746
    %749 = vset.pattern.permute.xlu0 16
    %750 = vperm.xlu0 %749, %v491
    %v751 = vpop.permute.xlu0 %750
    %753 = vset.pattern.permute.xlu0 16
    %754 = vperm.xlu0 %753, %v492
    %v755 = vpop.permute.xlu0 %754
    %v757 = vlaneseq
    %v758 = vshrl.u32 %v757, 7
    %v759 = vsub.s32 0, %v758
    %v760 = vrot.slane %v486, %v759
    %v761 = vmul.f32 %v751, %v760
    %v762 = vmul.f32 %v755, %v760
    %v763 = vadd.f32 %v747, %v761
    %v764 = vadd.f32 %v748, %v762
    %765 = vset.pattern.permute.xlu0 17
    %766 = vperm.xlu0 %765, %v491
    %v767 = vpop.permute.xlu0 %766
    %769 = vset.pattern.permute.xlu0 17
    %770 = vperm.xlu0 %769, %v492
    %v771 = vpop.permute.xlu0 %770
    %v773 = vlaneseq
    %v774 = vshrl.u32 %v773, 7
    %v775 = vsub.s32 1, %v774
    %v776 = vrot.slane %v486, %v775
    %v777 = vmul.f32 %v767, %v776
    %v778 = vmul.f32 %v771, %v776
    %v779 = vadd.f32 %v763, %v777
    %v780 = vadd.f32 %v764, %v778
    %781 = vset.pattern.permute.xlu0 18
    %782 = vperm.xlu0 %781, %v491
    %v783 = vpop.permute.xlu0 %782
    %785 = vset.pattern.permute.xlu0 18
    %786 = vperm.xlu0 %785, %v492
    %v787 = vpop.permute.xlu0 %786
    %v789 = vlaneseq
    %v790 = vshrl.u32 %v789, 7
    %v791 = vsub.s32 2, %v790
    %v792 = vrot.slane %v486, %v791
    %v793 = vmul.f32 %v783, %v792
    %v794 = vmul.f32 %v787, %v792
    %v795 = vadd.f32 %v779, %v793
    %v796 = vadd.f32 %v780, %v794
    %797 = vset.pattern.permute.xlu0 19
    %798 = vperm.xlu0 %797, %v491
    %v799 = vpop.permute.xlu0 %798
    %801 = vset.pattern.permute.xlu0 19
    %802 = vperm.xlu0 %801, %v492
    %v803 = vpop.permute.xlu0 %802
    %v805 = vlaneseq
    %v806 = vshrl.u32 %v805, 7
    %v807 = vsub.s32 3, %v806
    %v808 = vrot.slane %v486, %v807
    %v809 = vmul.f32 %v799, %v808
    %v810 = vmul.f32 %v803, %v808
    %v811 = vadd.f32 %v795, %v809
    %v812 = vadd.f32 %v796, %v810
    %813 = vset.pattern.permute.xlu0 20
    %814 = vperm.xlu0 %813, %v491
    %v815 = vpop.permute.xlu0 %814
    %817 = vset.pattern.permute.xlu0 20
    %818 = vperm.xlu0 %817, %v492
    %v819 = vpop.permute.xlu0 %818
    %v821 = vlaneseq
    %v822 = vshrl.u32 %v821, 7
    %v823 = vsub.s32 4, %v822
    %v824 = vrot.slane %v486, %v823
    %v825 = vmul.f32 %v815, %v824
    %v826 = vmul.f32 %v819, %v824
    %v827 = vadd.f32 %v811, %v825
    %v828 = vadd.f32 %v812, %v826
    %829 = vset.pattern.permute.xlu0 21
    %830 = vperm.xlu0 %829, %v491
    %v831 = vpop.permute.xlu0 %830
    %833 = vset.pattern.permute.xlu0 21
    %834 = vperm.xlu0 %833, %v492
    %v835 = vpop.permute.xlu0 %834
    %v837 = vlaneseq
    %v838 = vshrl.u32 %v837, 7
    %v839 = vsub.s32 5, %v838
    %v840 = vrot.slane %v486, %v839
    %v841 = vmul.f32 %v831, %v840
    %v842 = vmul.f32 %v835, %v840
    %v843 = vadd.f32 %v827, %v841
    %v844 = vadd.f32 %v828, %v842
    %845 = vset.pattern.permute.xlu0 22
    %846 = vperm.xlu0 %845, %v491
    %v847 = vpop.permute.xlu0 %846
    %849 = vset.pattern.permute.xlu0 22
    %850 = vperm.xlu0 %849, %v492
    %v851 = vpop.permute.xlu0 %850
    %v853 = vlaneseq
    %v854 = vshrl.u32 %v853, 7
    %v855 = vsub.s32 6, %v854
    %v856 = vrot.slane %v486, %v855
    %v857 = vmul.f32 %v847, %v856
    %v858 = vmul.f32 %v851, %v856
    %v859 = vadd.f32 %v843, %v857
    %v860 = vadd.f32 %v844, %v858
    %861 = vset.pattern.permute.xlu0 23
    %862 = vperm.xlu0 %861, %v491
    %v863 = vpop.permute.xlu0 %862
    %865 = vset.pattern.permute.xlu0 23
    %866 = vperm.xlu0 %865, %v492
    %v867 = vpop.permute.xlu0 %866
    %v869 = vlaneseq
    %v870 = vshrl.u32 %v869, 7
    %v871 = vsub.s32 7, %v870
    %v872 = vrot.slane %v486, %v871
    %v873 = vmul.f32 %v863, %v872
    %v874 = vmul.f32 %v867, %v872
    %v875 = vadd.f32 %v859, %v873
    %v876 = vadd.f32 %v860, %v874
    %877 = vset.pattern.permute.xlu0 24
    %878 = vperm.xlu0 %877, %v491
    %v879 = vpop.permute.xlu0 %878
    %881 = vset.pattern.permute.xlu0 24
    %882 = vperm.xlu0 %881, %v492
    %v883 = vpop.permute.xlu0 %882
    %v885 = vlaneseq
    %v886 = vshrl.u32 %v885, 7
    %v887 = vsub.s32 0, %v886
    %v888 = vrot.slane %v489, %v887
    %v889 = vmul.f32 %v879, %v888
    %v890 = vmul.f32 %v883, %v888
    %v891 = vadd.f32 %v875, %v889
    %v892 = vadd.f32 %v876, %v890
    %893 = vset.pattern.permute.xlu0 25
    %894 = vperm.xlu0 %893, %v491
    %v895 = vpop.permute.xlu0 %894
    %897 = vset.pattern.permute.xlu0 25
    %898 = vperm.xlu0 %897, %v492
    %v899 = vpop.permute.xlu0 %898
    %v901 = vlaneseq
    %v902 = vshrl.u32 %v901, 7
    %v903 = vsub.s32 1, %v902
    %v904 = vrot.slane %v489, %v903
    %v905 = vmul.f32 %v895, %v904
    %v906 = vmul.f32 %v899, %v904
    %v907 = vadd.f32 %v891, %v905
    %v908 = vadd.f32 %v892, %v906
    %909 = vset.pattern.permute.xlu0 26
    %910 = vperm.xlu0 %909, %v491
    %v911 = vpop.permute.xlu0 %910
    %913 = vset.pattern.permute.xlu0 26
    %914 = vperm.xlu0 %913, %v492
    %v915 = vpop.permute.xlu0 %914
    %v917 = vlaneseq
    %v918 = vshrl.u32 %v917, 7
    %v919 = vsub.s32 2, %v918
    %v920 = vrot.slane %v489, %v919
    %v921 = vmul.f32 %v911, %v920
    %v922 = vmul.f32 %v915, %v920
    %v923 = vadd.f32 %v907, %v921
    %v924 = vadd.f32 %v908, %v922
    %925 = vset.pattern.permute.xlu0 27
    %926 = vperm.xlu0 %925, %v491
    %v927 = vpop.permute.xlu0 %926
    %929 = vset.pattern.permute.xlu0 27
    %930 = vperm.xlu0 %929, %v492
    %v931 = vpop.permute.xlu0 %930
    %v933 = vlaneseq
    %v934 = vshrl.u32 %v933, 7
    %v935 = vsub.s32 3, %v934
    %v936 = vrot.slane %v489, %v935
    %v937 = vmul.f32 %v927, %v936
    %v938 = vmul.f32 %v931, %v936
    %v939 = vadd.f32 %v923, %v937
    %v940 = vadd.f32 %v924, %v938
    %941 = vset.pattern.permute.xlu0 28
    %942 = vperm.xlu0 %941, %v491
    %v943 = vpop.permute.xlu0 %942
    %945 = vset.pattern.permute.xlu0 28
    %946 = vperm.xlu0 %945, %v492
    %v947 = vpop.permute.xlu0 %946
    %v949 = vlaneseq
    %v950 = vshrl.u32 %v949, 7
    %v951 = vsub.s32 4, %v950
    %v952 = vrot.slane %v489, %v951
    %v953 = vmul.f32 %v943, %v952
    %v954 = vmul.f32 %v947, %v952
    %v955 = vadd.f32 %v939, %v953
    %v956 = vadd.f32 %v940, %v954
    %957 = vset.pattern.permute.xlu0 29
    %958 = vperm.xlu0 %957, %v491
    %v959 = vpop.permute.xlu0 %958
    %961 = vset.pattern.permute.xlu0 29
    %962 = vperm.xlu0 %961, %v492
    %v963 = vpop.permute.xlu0 %962
    %v965 = vlaneseq
    %v966 = vshrl.u32 %v965, 7
    %v967 = vsub.s32 5, %v966
    %v968 = vrot.slane %v489, %v967
    %v969 = vmul.f32 %v959, %v968
    %v970 = vmul.f32 %v963, %v968
    %v971 = vadd.f32 %v955, %v969
    %v972 = vadd.f32 %v956, %v970
    %973 = vset.pattern.permute.xlu0 30
    %974 = vperm.xlu0 %973, %v491
    %v975 = vpop.permute.xlu0 %974
    %977 = vset.pattern.permute.xlu0 30
    %978 = vperm.xlu0 %977, %v492
    %v979 = vpop.permute.xlu0 %978
    %v981 = vlaneseq
    %v982 = vshrl.u32 %v981, 7
    %v983 = vsub.s32 6, %v982
    %v984 = vrot.slane %v489, %v983
    %v985 = vmul.f32 %v975, %v984
    %v986 = vmul.f32 %v979, %v984
    %v987 = vadd.f32 %v971, %v985
    %v988 = vadd.f32 %v972, %v986
    %989 = vset.pattern.permute.xlu0 31
    %990 = vperm.xlu0 %989, %v491
    %v991 = vpop.permute.xlu0 %990
    %993 = vset.pattern.permute.xlu0 31
    %994 = vperm.xlu0 %993, %v492
    %v995 = vpop.permute.xlu0 %994
    %v997 = vlaneseq
    %v998 = vshrl.u32 %v997, 7
    %v999 = vsub.s32 7, %v998
    %v1000 = vrot.slane %v489, %v999
    %v1001 = vmul.f32 %v991, %v1000
    %v1002 = vmul.f32 %v995, %v1000
    %v1003 = vadd.f32 %v987, %v1001
    %v1004 = vadd.f32 %v988, %v1002
    %v1005 = vld [vmem:[%s7] sm:$0xff]
    %v1006 = vld [vmem:[%s7 + $0x8] sm:$0xff]
    %1008 = vset.pattern.permute.xlu0 0
    %1009 = vperm.xlu0 %1008, %v1005
    %v1010 = vpop.permute.xlu0 %1009
    %1013 = vset.pattern.permute.xlu0 0
    %1014 = vperm.xlu0 %1013, %v1006
    %v1015 = vpop.permute.xlu0 %1014
    %v1017 = vadd.f32 %v1003, %v1010
    %v1018 = vadd.f32 %v1004, %v1015
    %v1019 = vmax.f32 %v1017, 0.0
    %v1020 = vmax.f32 %v1018, 0.0
    %v1021 = vld [vmem:[%s8] sm:$0xff]
    %v1022 = vld [vmem:[%s8 + $0x8] sm:$0xff]
    %v1023 = vld [vmem:[%s9] sm:$0xff]
    %v1024 = vld [vmem:[%s9 + $0x8] sm:$0xff]
    %vm1025 = vcmask 261120
    %v1026 = vsel %vm1025, %v1019, 0.0
    %1027 = vadd.xlane.f32.xlu0 %v1026
    %v1028 = vpop.xlane.xlu0 %1027
    %v1029 = vsel %vm1025, %v1020, 0.0
    %1030 = vadd.xlane.f32.xlu0 %v1029
    %v1031 = vpop.xlane.xlu0 %1030
    %v1032 = vmul.f32 %v1019, %v1019
    %v1033 = vmul.f32 %v1020, %v1020
    %v1034 = vsel %vm1025, %v1032, 0.0
    %1035 = vadd.xlane.f32.xlu0 %v1034
    %v1036 = vpop.xlane.xlu0 %1035
    %v1037 = vsel %vm1025, %v1033, 0.0
    %1038 = vadd.xlane.f32.xlu0 %v1037
    %v1039 = vpop.xlane.xlu0 %1038
    %v1040 = vmul.f32 %v1028, 0.03125
    %v1041 = vmul.f32 %v1031, 0.03125
    %v1042 = vmul.f32 %v1036, 0.03125
    %v1043 = vmul.f32 %v1039, 0.03125
    %v1044 = vmul.f32 %v1040, %v1040
    %v1045 = vmul.f32 %v1041, %v1041
    %v1046 = vsub.f32 %v1042, %v1044
    %v1047 = vsub.f32 %v1043, %v1045
    %v1048 = vadd.f32 %v1046, 1e-05
    %v1049 = vadd.f32 %v1047, 1e-05
    %v1050 = vrsqrt.pop %v1048
    %v1051 = vrsqrt.pop %v1049
    %v1052 = vmul.f32 %v1050, %v1021
    %v1053 = vmul.f32 %v1051, %v1022
    %v1054 = vsub.f32 %v1019, %v1040
    %v1055 = vsub.f32 %v1020, %v1041
    %1057 = vset.pattern.permute.xlu0 0
    %1058 = vperm.xlu0 %1057, %v1052
    %v1059 = vpop.permute.xlu0 %1058
    %1062 = vset.pattern.permute.xlu0 0
    %1063 = vperm.xlu0 %1062, %v1053
    %v1064 = vpop.permute.xlu0 %1063
    %v1066 = vmul.f32 %v1054, %v1059
    %v1067 = vmul.f32 %v1055, %v1064
    %1069 = vset.pattern.permute.xlu0 0
    %1070 = vperm.xlu0 %1069, %v1023
    %v1071 = vpop.permute.xlu0 %1070
    %1074 = vset.pattern.permute.xlu0 0
    %1075 = vperm.xlu0 %1074, %v1024
    %v1076 = vpop.permute.xlu0 %1075
    %v1078 = vadd.f32 %v1066, %v1071
    %v1079 = vadd.f32 %v1067, %v1076
    %1080 = vst [vmem:[#allocation2] sm:$0xff] 0.0
    %1081 = vst [vmem:[#allocation2 + $0x8] sm:$0xff] 0.0
    %vm1082 = vcmask 122880
    %1083 = vst.msk [vmem:[#allocation2] sm:$0x1] %vm1082, %v1078
    %1085 = vrot.lane.b32.xlu0 %v1078, 112
    %v1086 = vpop.permute.xlu0 %1085
    %1088 = vst.msk [vmem:[#allocation2 + $0x1] sm:$0x1] %vm1082, %v1086
    %v1089 = vrot.slane %v1078, 1
    %1090 = vrot.lane.b32.xlu0 %v1089, 16
    %v1091 = vpop.permute.xlu0 %1090
    %vm1093 = vcmask 254080
    %1094 = vst.msk [vmem:[#allocation2] sm:$0x1] %vm1093, %v1091
    %1096 = vst.msk [vmem:[#allocation2 + $0x1] sm:$0x1] %vm1093, %v1089
    %v1097 = vrot.slane %v1078, 2
    %1098 = vrot.lane.b32.xlu0 %v1097, 32
    %v1099 = vpop.permute.xlu0 %1098
    %vm1101 = vcmask 385280
    %1102 = vst.msk [vmem:[#allocation2] sm:$0x1] %vm1101, %v1099
    %1103 = vrot.lane.b32.xlu0 %v1097, 16
    %v1104 = vpop.permute.xlu0 %1103
    %1106 = vst.msk [vmem:[#allocation2 + $0x1] sm:$0x1] %vm1101, %v1104
    %v1107 = vrot.slane %v1078, 3
    %1108 = vrot.lane.b32.xlu0 %v1107, 48
    %v1109 = vpop.permute.xlu0 %1108
    %vm1111 = vcmask 516480
    %1112 = vst.msk [vmem:[#allocation2] sm:$0x1] %vm1111, %v1109
    %1113 = vrot.lane.b32.xlu0 %v1107, 32
    %v1114 = vpop.permute.xlu0 %1113
    %1116 = vst.msk [vmem:[#allocation2 + $0x1] sm:$0x1] %vm1111, %v1114
    %v1117 = vrot.slane %v1078, 4
    %1118 = vrot.lane.b32.xlu0 %v1117, 64
    %v1119 = vpop.permute.xlu0 %1118
    %vm1121 = vcmask 647680
    %1122 = vst.msk [vmem:[#allocation2] sm:$0x1] %vm1121, %v1119
    %1123 = vrot.lane.b32.xlu0 %v1117, 48
    %v1124 = vpop.permute.xlu0 %1123
    %1126 = vst.msk [vmem:[#allocation2 + $0x1] sm:$0x1] %vm1121, %v1124
    %v1127 = vrot.slane %v1078, 5
    %1128 = vrot.lane.b32.xlu0 %v1127, 80
    %v1129 = vpop.permute.xlu0 %1128
    %vm1131 = vcmask 778880
    %1132 = vst.msk [vmem:[#allocation2] sm:$0x1] %vm1131, %v1129
    %1133 = vrot.lane.b32.xlu0 %v1127, 64
    %v1134 = vpop.permute.xlu0 %1133
    %1136 = vst.msk [vmem:[#allocation2 + $0x1] sm:$0x1] %vm1131, %v1134
    %v1137 = vrot.slane %v1078, 6
    %1138 = vrot.lane.b32.xlu0 %v1137, 96
    %v1139 = vpop.permute.xlu0 %1138
    %vm1141 = vcmask 910080
    %1142 = vst.msk [vmem:[#allocation2] sm:$0x1] %vm1141, %v1139
    %1143 = vrot.lane.b32.xlu0 %v1137, 80
    %v1144 = vpop.permute.xlu0 %1143
    %1146 = vst.msk [vmem:[#allocation2 + $0x1] sm:$0x1] %vm1141, %v1144
    %v1147 = vrot.slane %v1078, 7
    %1148 = vrot.lane.b32.xlu0 %v1147, 112
    %v1149 = vpop.permute.xlu0 %1148
    %vm1151 = vcmask 1041280
    %1152 = vst.msk [vmem:[#allocation2] sm:$0x1] %vm1151, %v1149
    %1153 = vrot.lane.b32.xlu0 %v1147, 96
    %v1154 = vpop.permute.xlu0 %1153
    %1156 = vst.msk [vmem:[#allocation2 + $0x1] sm:$0x1] %vm1151, %v1154
    %1157 = vst.msk [vmem:[#allocation2 + $0x8] sm:$0x1] %vm1082, %v1079
    %1159 = vrot.lane.b32.xlu0 %v1079, 112
    %v1160 = vpop.permute.xlu0 %1159
    %1162 = vst.msk [vmem:[#allocation2 + $0x9] sm:$0x1] %vm1082, %v1160
    %v1163 = vrot.slane %v1079, 1
    %1164 = vrot.lane.b32.xlu0 %v1163, 16
    %v1165 = vpop.permute.xlu0 %1164
    %1167 = vst.msk [vmem:[#allocation2 + $0x8] sm:$0x1] %vm1093, %v1165
    %1169 = vst.msk [vmem:[#allocation2 + $0x9] sm:$0x1] %vm1093, %v1163
    %v1170 = vrot.slane %v1079, 2
    %1171 = vrot.lane.b32.xlu0 %v1170, 32
    %v1172 = vpop.permute.xlu0 %1171
    %1174 = vst.msk [vmem:[#allocation2 + $0x8] sm:$0x1] %vm1101, %v1172
    %1175 = vrot.lane.b32.xlu0 %v1170, 16
    %v1176 = vpop.permute.xlu0 %1175
    %1178 = vst.msk [vmem:[#allocation2 + $0x9] sm:$0x1] %vm1101, %v1176
    %v1179 = vrot.slane %v1079, 3
    %1180 = vrot.lane.b32.xlu0 %v1179, 48
    %v1181 = vpop.permute.xlu0 %1180
    %1183 = vst.msk [vmem:[#allocation2 + $0x8] sm:$0x1] %vm1111, %v1181
    %1184 = vrot.lane.b32.xlu0 %v1179, 32
    %v1185 = vpop.permute.xlu0 %1184
    %1187 = vst.msk [vmem:[#allocation2 + $0x9] sm:$0x1] %vm1111, %v1185
    %v1188 = vrot.slane %v1079, 4
    %1189 = vrot.lane.b32.xlu0 %v1188, 64
    %v1190 = vpop.permute.xlu0 %1189
    %1192 = vst.msk [vmem:[#allocation2 + $0x8] sm:$0x1] %vm1121, %v1190
    %1193 = vrot.lane.b32.xlu0 %v1188, 48
    %v1194 = vpop.permute.xlu0 %1193
    %1196 = vst.msk [vmem:[#allocation2 + $0x9] sm:$0x1] %vm1121, %v1194
    %v1197 = vrot.slane %v1079, 5
    %1198 = vrot.lane.b32.xlu0 %v1197, 80
    %v1199 = vpop.permute.xlu0 %1198
    %1201 = vst.msk [vmem:[#allocation2 + $0x8] sm:$0x1] %vm1131, %v1199
    %1202 = vrot.lane.b32.xlu0 %v1197, 64
    %v1203 = vpop.permute.xlu0 %1202
    %1205 = vst.msk [vmem:[#allocation2 + $0x9] sm:$0x1] %vm1131, %v1203
    %v1206 = vrot.slane %v1079, 6
    %1207 = vrot.lane.b32.xlu0 %v1206, 96
    %v1208 = vpop.permute.xlu0 %1207
    %1210 = vst.msk [vmem:[#allocation2 + $0x8] sm:$0x1] %vm1141, %v1208
    %1211 = vrot.lane.b32.xlu0 %v1206, 80
    %v1212 = vpop.permute.xlu0 %1211
    %1214 = vst.msk [vmem:[#allocation2 + $0x9] sm:$0x1] %vm1141, %v1212
    %v1215 = vrot.slane %v1079, 7
    %1216 = vrot.lane.b32.xlu0 %v1215, 112
    %v1217 = vpop.permute.xlu0 %1216
    %1219 = vst.msk [vmem:[#allocation2 + $0x8] sm:$0x1] %vm1151, %v1217
    %1220 = vrot.lane.b32.xlu0 %v1215, 96
    %v1221 = vpop.permute.xlu0 %1220
    %1223 = vst.msk [vmem:[#allocation2 + $0x9] sm:$0x1] %vm1151, %v1221
    %v1224 = vld [vmem:[#allocation2] sm:$0xff]
    %v1225 = vld [vmem:[#allocation2 + $0x8] sm:$0xff]
    %v1226 = vld [vmem:[%s10] sm:$0xff]
    %v1227 = vld [vmem:[%s10 + $0x8] sm:$0xff]
    %v1228 = vld [vmem:[%s10 + $0x10] sm:$0xff]
    %v1229 = vld [vmem:[%s10 + $0x18] sm:$0xff]
    %v1230 = vld [vmem:[%s10 + $0x20] sm:$0xff]
    %v1231 = vld [vmem:[%s10 + $0x28] sm:$0xff]
    %v1232 = vld [vmem:[%s10 + $0x30] sm:$0xff]
    %v1233 = vld [vmem:[%s10 + $0x38] sm:$0xff]
    %v1234 = vld [vmem:[%s10 + $0x40] sm:$0xff]
    %v1235 = vld [vmem:[%s10 + $0x48] sm:$0xff]
    %v1236 = vld [vmem:[%s10 + $0x50] sm:$0xff]
    %v1237 = vld [vmem:[%s10 + $0x58] sm:$0xff]
    %v1238 = vld [vmem:[%s10 + $0x60] sm:$0xff]
    %v1239 = vld [vmem:[%s10 + $0x68] sm:$0xff]
    %v1240 = vld [vmem:[%s10 + $0x70] sm:$0xff]
    %v1241 = vld [vmem:[%s10 + $0x78] sm:$0xff]
    %v1242 = vld [vmem:[%s10 + $0x80] sm:$0xff]
    %v1243 = vld [vmem:[%s10 + $0x88] sm:$0xff]
    %v1244 = vld [vmem:[%s10 + $0x90] sm:$0xff]
    %v1245 = vld [vmem:[%s10 + $0x98] sm:$0xff]
    %v1246 = vld [vmem:[%s10 + $0xa0] sm:$0xff]
    %v1247 = vld [vmem:[%s10 + $0xa8] sm:$0xff]
    %v1248 = vld [vmem:[%s10 + $0xb0] sm:$0xff]
    %v1249 = vld [vmem:[%s10 + $0xb8] sm:$0xff]
    %v1250 = vld [vmem:[%s10 + $0xc0] sm:$0xff]
    %v1251 = vld [vmem:[%s10 + $0xc8] sm:$0xff]
    %v1252 = vld [vmem:[%s10 + $0xd0] sm:$0xff]
    %v1253 = vld [vmem:[%s10 + $0xd8] sm:$0xff]
    %v1254 = vld [vmem:[%s10 + $0xe0] sm:$0xff]
    %v1255 = vld [vmem:[%s10 + $0xe8] sm:$0xff]
    %v1256 = vld [vmem:[%s10 + $0xf0] sm:$0xff]
    %v1257 = vld [vmem:[%s10 + $0xf8] sm:$0xff]
    %v1258 = vld [vmem:[%s10 + $0x100] sm:$0xff]
    %v1259 = vld [vmem:[%s10 + $0x108] sm:$0xff]
    %v1260 = vld [vmem:[%s10 + $0x110] sm:$0xff]
    %v1261 = vld [vmem:[%s10 + $0x118] sm:$0xff]
    %v1262 = vld [vmem:[%s10 + $0x120] sm:$0xff]
    %v1263 = vld [vmem:[%s10 + $0x128] sm:$0xff]
    %v1264 = vld [vmem:[%s10 + $0x130] sm:$0xff]
    %v1265 = vld [vmem:[%s10 + $0x138] sm:$0xff]
    %v1266 = vld [vmem:[%s10 + $0x140] sm:$0xff]
    %v1267 = vld [vmem:[%s10 + $0x148] sm:$0xff]
    %v1268 = vld [vmem:[%s10 + $0x150] sm:$0xff]
    %v1269 = vld [vmem:[%s10 + $0x158] sm:$0xff]
    %v1270 = vld [vmem:[%s10 + $0x160] sm:$0xff]
    %v1271 = vld [vmem:[%s10 + $0x168] sm:$0xff]
    %v1272 = vld [vmem:[%s10 + $0x170] sm:$0xff]
    %v1273 = vld [vmem:[%s10 + $0x178] sm:$0xff]
    %v1274 = vld [vmem:[%s10 + $0x180] sm:$0xff]
    %v1275 = vld [vmem:[%s10 + $0x188] sm:$0xff]
    %v1276 = vld [vmem:[%s10 + $0x190] sm:$0xff]
    %v1277 = vld [vmem:[%s10 + $0x198] sm:$0xff]
    %v1278 = vld [vmem:[%s10 + $0x1a0] sm:$0xff]
    %v1279 = vld [vmem:[%s10 + $0x1a8] sm:$0xff]
    %v1280 = vld [vmem:[%s10 + $0x1b0] sm:$0xff]
    %v1281 = vld [vmem:[%s10 + $0x1b8] sm:$0xff]
    %v1282 = vld [vmem:[%s10 + $0x1c0] sm:$0xff]
    %v1283 = vld [vmem:[%s10 + $0x1c8] sm:$0xff]
    %v1284 = vld [vmem:[%s10 + $0x1d0] sm:$0xff]
    %v1285 = vld [vmem:[%s10 + $0x1d8] sm:$0xff]
    %v1286 = vld [vmem:[%s10 + $0x1e0] sm:$0xff]
    %v1287 = vld [vmem:[%s10 + $0x1e8] sm:$0xff]
    %v1288 = vld [vmem:[%s10 + $0x1f0] sm:$0xff]
    %v1289 = vld [vmem:[%s10 + $0x1f8] sm:$0xff]
    %v1290 = vld [vmem:[%s10 + $0x200] sm:$0xff]
    %v1291 = vld [vmem:[%s10 + $0x208] sm:$0xff]
    %v1292 = vld [vmem:[%s10 + $0x210] sm:$0xff]
    %v1293 = vld [vmem:[%s10 + $0x218] sm:$0xff]
    %v1294 = vld [vmem:[%s10 + $0x220] sm:$0xff]
    %v1295 = vld [vmem:[%s10 + $0x228] sm:$0xff]
    %v1296 = vld [vmem:[%s10 + $0x230] sm:$0xff]
    %v1297 = vld [vmem:[%s10 + $0x238] sm:$0xff]
    %v1298 = vld [vmem:[%s10 + $0x240] sm:$0xff]
    %v1299 = vld [vmem:[%s10 + $0x248] sm:$0xff]
    %v1300 = vld [vmem:[%s10 + $0x250] sm:$0xff]
    %v1301 = vld [vmem:[%s10 + $0x258] sm:$0xff]
    %v1302 = vld [vmem:[%s10 + $0x260] sm:$0xff]
    %v1303 = vld [vmem:[%s10 + $0x268] sm:$0xff]
    %v1304 = vld [vmem:[%s10 + $0x270] sm:$0xff]
    %v1305 = vld [vmem:[%s10 + $0x278] sm:$0xff]
    %v1306 = vld [vmem:[%s10 + $0x280] sm:$0xff]
    %v1307 = vld [vmem:[%s10 + $0x288] sm:$0xff]
    %v1308 = vld [vmem:[%s10 + $0x290] sm:$0xff]
    %v1309 = vld [vmem:[%s10 + $0x298] sm:$0xff]
    %v1310 = vld [vmem:[%s10 + $0x2a0] sm:$0xff]
    %v1311 = vld [vmem:[%s10 + $0x2a8] sm:$0xff]
    %v1312 = vld [vmem:[%s10 + $0x2b0] sm:$0xff]
    %v1313 = vld [vmem:[%s10 + $0x2b8] sm:$0xff]
    %v1314 = vld [vmem:[%s10 + $0x2c0] sm:$0xff]
    %v1315 = vld [vmem:[%s10 + $0x2c8] sm:$0xff]
    %v1316 = vld [vmem:[%s10 + $0x2d0] sm:$0xff]
    %v1317 = vld [vmem:[%s10 + $0x2d8] sm:$0xff]
    %v1318 = vld [vmem:[%s10 + $0x2e0] sm:$0xff]
    %v1319 = vld [vmem:[%s10 + $0x2e8] sm:$0xff]
    %v1320 = vld [vmem:[%s10 + $0x2f0] sm:$0xff]
    %v1321 = vld [vmem:[%s10 + $0x2f8] sm:$0xff]
    %v1322 = vld [vmem:[%s10 + $0x300] sm:$0xff]
    %v1323 = vld [vmem:[%s10 + $0x308] sm:$0xff]
    %v1324 = vld [vmem:[%s10 + $0x310] sm:$0xff]
    %v1325 = vld [vmem:[%s10 + $0x318] sm:$0xff]
    %v1326 = vld [vmem:[%s10 + $0x320] sm:$0xff]
    %v1327 = vld [vmem:[%s10 + $0x328] sm:$0xff]
    %v1328 = vld [vmem:[%s10 + $0x330] sm:$0xff]
    %v1329 = vld [vmem:[%s10 + $0x338] sm:$0xff]
    %v1330 = vld [vmem:[%s10 + $0x340] sm:$0xff]
    %v1331 = vld [vmem:[%s10 + $0x348] sm:$0xff]
    %v1332 = vld [vmem:[%s10 + $0x350] sm:$0xff]
    %v1333 = vld [vmem:[%s10 + $0x358] sm:$0xff]
    %v1334 = vld [vmem:[%s10 + $0x360] sm:$0xff]
    %v1335 = vld [vmem:[%s10 + $0x368] sm:$0xff]
    %v1336 = vld [vmem:[%s10 + $0x370] sm:$0xff]
    %v1337 = vld [vmem:[%s10 + $0x378] sm:$0xff]
    %v1338 = vld [vmem:[%s10 + $0x380] sm:$0xff]
    %v1339 = vld [vmem:[%s10 + $0x388] sm:$0xff]
    %v1340 = vld [vmem:[%s10 + $0x390] sm:$0xff]
    %v1341 = vld [vmem:[%s10 + $0x398] sm:$0xff]
    %v1342 = vld [vmem:[%s10 + $0x3a0] sm:$0xff]
    %v1343 = vld [vmem:[%s10 + $0x3a8] sm:$0xff]
    %v1344 = vld [vmem:[%s10 + $0x3b0] sm:$0xff]
    %v1345 = vld [vmem:[%s10 + $0x3b8] sm:$0xff]
    %v1346 = vld [vmem:[%s10 + $0x3c0] sm:$0xff]
    %v1347 = vld [vmem:[%s10 + $0x3c8] sm:$0xff]
    %v1348 = vld [vmem:[%s10 + $0x3d0] sm:$0xff]
    %v1349 = vld [vmem:[%s10 + $0x3d8] sm:$0xff]
    %v1350 = vld [vmem:[%s10 + $0x3e0] sm:$0xff]
    %v1351 = vld [vmem:[%s10 + $0x3e8] sm:$0xff]
    %v1352 = vld [vmem:[%s10 + $0x3f0] sm:$0xff]
    %v1353 = vld [vmem:[%s10 + $0x3f8] sm:$0xff]
    %v1354 = vld [vmem:[%s11] sm:$0xf]
    %v1356 = vlaneseq
    %v1357 = vshrl.u32 %v1356, 7
    %v1358 = vsub.s32 0, %v1357
    %v1359 = vrot.slane %v1354, %v1358
    %v1360 = vlaneseq
    %v1361 = vshrl.u32 %v1360, 7
    %v1362 = vsub.s32 1, %v1361
    %v1363 = vrot.slane %v1354, %v1362
    %v1364 = vlaneseq
    %v1365 = vshrl.u32 %v1364, 7
    %v1366 = vsub.s32 2, %v1365
    %v1367 = vrot.slane %v1354, %v1366
    %v1368 = vlaneseq
    %v1369 = vshrl.u32 %v1368, 7
    %v1370 = vsub.s32 3, %v1369
    %v1371 = vrot.slane %v1354, %v1370
    %1376 = vmatprep.subr.mxu0 %v1227
    %1377 = vmatpush1.msra.mxu0 %v1226
    %1378 = vmatprep.subr.mxu0 %v1231
    %1379 = vmatpush1.msra.mxu0 %v1230
    %1380 = vmatprep.subr.mxu0 %v1235
    %1381 = vmatpush1.msra.mxu0 %v1234
    %1382 = vmatprep.subr.mxu0 %v1239
    %1383 = vmatpush1.msra.mxu0 %v1238
    %1384 = vmatprep.subr.mxu0 %v1243
    %1385 = vmatpush1.msra.mxu0 %v1242
    %1386 = vmatprep.subr.mxu0 %v1247
    %1387 = vmatpush1.msra.mxu0 %v1246
    %1388 = vmatprep.subr.mxu0 %v1251
    %1389 = vmatpush1.msra.mxu0 %v1250
    %1390 = vmatprep.subr.mxu0 %v1255
    %1391 = vmatpush1.msra.mxu0 %v1254
    %1392 = vmatprep.subr.mxu0 %v1259
    %1393 = vmatpush1.msra.mxu0 %v1258
    %1394 = vmatprep.subr.mxu0 %v1263
    %1395 = vmatpush1.msra.mxu0 %v1262
    %1396 = vmatprep.subr.mxu0 %v1267
    %1397 = vmatpush1.msra.mxu0 %v1266
    %1398 = vmatprep.subr.mxu0 %v1271
    %1399 = vmatpush1.msra.mxu0 %v1270
    %1400 = vmatprep.subr.mxu0 %v1275
    %1401 = vmatpush1.msra.mxu0 %v1274
    %1402 = vmatprep.subr.mxu0 %v1279
    %1403 = vmatpush1.msra.mxu0 %v1278
    %1404 = vmatprep.subr.mxu0 %v1283
    %1405 = vmatpush1.msra.mxu0 %v1282
    %1406 = vmatprep.subr.mxu0 %v1287
    %1407 = vmatpush1.msra.mxu0 %v1286
    %1408 = vmatprep.subr.mxu0 %v1291
    %1409 = vmatpush1.msra.mxu0 %v1290
    %1410 = vmatprep.subr.mxu0 %v1295
    %1411 = vmatpush1.msra.mxu0 %v1294
    %1412 = vmatprep.subr.mxu0 %v1299
    %1413 = vmatpush1.msra.mxu0 %v1298
    %1414 = vmatprep.subr.mxu0 %v1303
    %1415 = vmatpush1.msra.mxu0 %v1302
    %1416 = vmatprep.subr.mxu0 %v1307
    %1417 = vmatpush1.msra.mxu0 %v1306
    %1418 = vmatprep.subr.mxu0 %v1311
    %1419 = vmatpush1.msra.mxu0 %v1310
    %1420 = vmatprep.subr.mxu0 %v1315
    %1421 = vmatpush1.msra.mxu0 %v1314
    %1422 = vmatprep.subr.mxu0 %v1319
    %1423 = vmatpush1.msra.mxu0 %v1318
    %1424 = vmatprep.subr.mxu0 %v1323
    %1425 = vmatpush1.msra.mxu0 %v1322
    %1426 = vmatprep.subr.mxu0 %v1327
    %1427 = vmatpush1.msra.mxu0 %v1326
    %1428 = vmatprep.subr.mxu0 %v1331
    %1429 = vmatpush1.msra.mxu0 %v1330
    %1430 = vmatprep.subr.mxu0 %v1335
    %1431 = vmatpush1.msra.mxu0 %v1334
    %1432 = vmatprep.subr.mxu0 %v1339
    %1433 = vmatpush1.msra.mxu0 %v1338
    %1434 = vmatprep.subr.mxu0 %v1343
    %1435 = vmatpush1.msra.mxu0 %v1342
    %1436 = vmatprep.subr.mxu0 %v1347
    %1437 = vmatpush1.msra.mxu0 %v1346
    %1438 = vmatprep.subr.mxu0 %v1351
    %1439 = vmatpush1.msra.mxu0 %v1350
    %1440 = vmatprep.mubr.f32.mxu0 %v1225
    %1441 = vmatmul.mubr.f32.gmra.mrb[0].mxu0 %v1224
    %v1442 = vpop.f32.mrb[0].mxu0
    %v1443 = vadd.f32 %v1359, %v1442
    %v1444 = vpop.f32.mrb[0].mxu0
    %v1445 = vadd.f32 %v1363, %v1444
    %1446 = vdwg.mxu0
    %1447 = vmatprep.subr.mxu0 %v1229
    %1448 = vmatpush1.msra.mxu0 %v1228
    %1449 = vmatprep.subr.mxu0 %v1233
    %1450 = vmatpush1.msra.mxu0 %v1232
    %1451 = vmatprep.subr.mxu0 %v1237
    %1452 = vmatpush1.msra.mxu0 %v1236
    %1453 = vmatprep.subr.mxu0 %v1241
    %1454 = vmatpush1.msra.mxu0 %v1240
    %1455 = vmatprep.subr.mxu0 %v1245
    %1456 = vmatpush1.msra.mxu0 %v1244
    %1457 = vmatprep.subr.mxu0 %v1249
    %1458 = vmatpush1.msra.mxu0 %v1248
    %1459 = vmatprep.subr.mxu0 %v1253
    %1460 = vmatpush1.msra.mxu0 %v1252
    %1461 = vmatprep.subr.mxu0 %v1257
    %1462 = vmatpush1.msra.mxu0 %v1256
    %1463 = vmatprep.subr.mxu0 %v1261
    %1464 = vmatpush1.msra.mxu0 %v1260
    %1465 = vmatprep.subr.mxu0 %v1265
    %1466 = vmatpush1.msra.mxu0 %v1264
    %1467 = vmatprep.subr.mxu0 %v1269
    %1468 = vmatpush1.msra.mxu0 %v1268
    %1469 = vmatprep.subr.mxu0 %v1273
    %1470 = vmatpush1.msra.mxu0 %v1272
    %1471 = vmatprep.subr.mxu0 %v1277
    %1472 = vmatpush1.msra.mxu0 %v1276
    %1473 = vmatprep.subr.mxu0 %v1281
    %1474 = vmatpush1.msra.mxu0 %v1280
    %1475 = vmatprep.subr.mxu0 %v1285
    %1476 = vmatpush1.msra.mxu0 %v1284
    %1477 = vmatprep.subr.mxu0 %v1289
    %1478 = vmatpush1.msra.mxu0 %v1288
    %1479 = vmatprep.subr.mxu0 %v1293
    %1480 = vmatpush1.msra.mxu0 %v1292
    %1481 = vmatprep.subr.mxu0 %v1297
    %1482 = vmatpush1.msra.mxu0 %v1296
    %1483 = vmatprep.subr.mxu0 %v1301
    %1484 = vmatpush1.msra.mxu0 %v1300
    %1485 = vmatprep.subr.mxu0 %v1305
    %1486 = vmatpush1.msra.mxu0 %v1304
    %1487 = vmatprep.subr.mxu0 %v1309
    %1488 = vmatpush1.msra.mxu0 %v1308
    %1489 = vmatprep.subr.mxu0 %v1313
    %1490 = vmatpush1.msra.mxu0 %v1312
    %1491 = vmatprep.subr.mxu0 %v1317
    %1492 = vmatpush1.msra.mxu0 %v1316
    %1493 = vmatprep.subr.mxu0 %v1321
    %1494 = vmatpush1.msra.mxu0 %v1320
    %1495 = vmatprep.subr.mxu0 %v1325
    %1496 = vmatpush1.msra.mxu0 %v1324
    %1497 = vmatprep.subr.mxu0 %v1329
    %1498 = vmatpush1.msra.mxu0 %v1328
    %1499 = vmatprep.subr.mxu0 %v1333
    %1500 = vmatpush1.msra.mxu0 %v1332
    %1501 = vmatprep.subr.mxu0 %v1337
    %1502 = vmatpush1.msra.mxu0 %v1336
    %1503 = vmatprep.subr.mxu0 %v1341
    %1504 = vmatpush1.msra.mxu0 %v1340
    %1505 = vmatprep.subr.mxu0 %v1345
    %1506 = vmatpush1.msra.mxu0 %v1344
    %1507 = vmatprep.subr.mxu0 %v1349
    %1508 = vmatpush1.msra.mxu0 %v1348
    %1509 = vmatprep.subr.mxu0 %v1353
    %1510 = vmatpush1.msra.mxu0 %v1352
    %1511 = vmatprep.mubr.f32.mxu0 %v1225
    %1512 = vmatmul.mubr.f32.gmra.mrb[0].mxu0 %v1224
    %v1513 = vpop.f32.mrb[0].mxu0
    %v1514 = vadd.f32 %v1367, %v1513
    %v1515 = vpop.f32.mrb[0].mxu0
    %v1516 = vadd.f32 %v1371, %v1515
    %1517 = vdwg.mxu0
    %v1520 = vcombine.low %v1443, %v1445
    %v1522 = vunpack.c.l.s4 1983009808
    %v1523 = vunpack.c.0.s8 %v1522
    %v1524 = vlaneseq
    %v1525 = vshrl.u32 %v1524, 7
    %v1526 = vsub.s32 %v1523, %v1525
    %v1527 = vrot.slane %v1520, %v1526
    %1529 = vst [vmem:[#allocation4] sm:$0xf] %v1527
    %v1532 = vcombine.low %v1514, %v1516
    %v1534 = vunpack.c.l.s4 1983009808
    %v1535 = vunpack.c.0.s8 %v1534
    %v1536 = vlaneseq
    %v1537 = vshrl.u32 %v1536, 7
    %v1538 = vsub.s32 %v1535, %v1537
    %v1539 = vrot.slane %v1532, %v1538
    %1541 = vst [vmem:[#allocation6] sm:$0xf] %v1539
    %v1542 = vmul.f32 %v1514, 0.5
    %v1543 = vmul.f32 %v1516, 0.5
    %v1544 = vmul.f32 %v1542, 1.442695
    %v1545 = vpow.pop %v1544
    %v1546 = vmul.f32 %v1543, 1.442695
    %v1547 = vpow.pop %v1546
    %v1548 = vld [vmem:[%s1] sm:$0xf]
    %v1551 = vunpack.c.l.s4 1983009808
    %v1552 = vunpack.c.0.s8 %v1551
    %v1553 = vlaneseq
    %v1554 = vshrl.u32 %v1553, 7
    %v1555 = vsub.s32 %v1552, %v1554
    %v1556 = vrot.slane %v1548, %v1555
    %v1557 = vcombine.high %v1556, %v1556
    %v1560 = vmul.f32 %v1545, %v1556
    %v1561 = vmul.f32 %v1547, %v1557
    %v1562 = vadd.f32 %v1443, %v1560
    %v1563 = vadd.f32 %v1445, %v1561
    %1564 = vst [vmem:[#allocation2] sm:$0x3] %v1562
    %1565 = vst [vmem:[#allocation2 + $0x8] sm:$0x3] %v1563
    %v1566 = vld [vmem:[#allocation2] sm:$0xff]
    %v1567 = vld [vmem:[#allocation2 + $0x8] sm:$0xff]
    %v1568 = vld [vmem:[%s12] sm:$0xff]
    %v1569 = vld [vmem:[%s12 + $0x8] sm:$0xff]
    %v1570 = vld [vmem:[%s12 + $0x10] sm:$0xff]
    %v1571 = vld [vmem:[%s12 + $0x18] sm:$0xff]
    %v1572 = vld [vmem:[%s12 + $0x20] sm:$0xff]
    %v1573 = vld [vmem:[%s12 + $0x28] sm:$0xff]
    %v1574 = vld [vmem:[%s12 + $0x30] sm:$0xff]
    %v1575 = vld [vmem:[%s12 + $0x38] sm:$0xff]
    %v1576 = vld [vmem:[%s12 + $0x40] sm:$0xff]
    %v1577 = vld [vmem:[%s12 + $0x48] sm:$0xff]
    %v1578 = vld [vmem:[%s12 + $0x50] sm:$0xff]
    %v1579 = vld [vmem:[%s12 + $0x58] sm:$0xff]
    %v1580 = vld [vmem:[%s12 + $0x60] sm:$0xff]
    %v1581 = vld [vmem:[%s12 + $0x68] sm:$0xff]
    %v1582 = vld [vmem:[%s12 + $0x70] sm:$0xff]
    %v1583 = vld [vmem:[%s12 + $0x78] sm:$0xff]
    %v1584 = vld [vmem:[%s12 + $0x80] sm:$0xff]
    %v1585 = vld [vmem:[%s12 + $0x88] sm:$0xff]
    %v1586 = vld [vmem:[%s12 + $0x90] sm:$0xff]
    %v1587 = vld [vmem:[%s12 + $0x98] sm:$0xff]
    %v1588 = vld [vmem:[%s12 + $0xa0] sm:$0xff]
    %v1589 = vld [vmem:[%s12 + $0xa8] sm:$0xff]
    %v1590 = vld [vmem:[%s12 + $0xb0] sm:$0xff]
    %v1591 = vld [vmem:[%s12 + $0xb8] sm:$0xff]
    %v1592 = vld [vmem:[%s12 + $0xc0] sm:$0xff]
    %v1593 = vld [vmem:[%s12 + $0xc8] sm:$0xff]
    %v1594 = vld [vmem:[%s12 + $0xd0] sm:$0xff]
    %v1595 = vld [vmem:[%s12 + $0xd8] sm:$0xff]
    %v1596 = vld [vmem:[%s12 + $0xe0] sm:$0xff]
    %v1597 = vld [vmem:[%s12 + $0xe8] sm:$0xff]
    %v1598 = vld [vmem:[%s12 + $0xf0] sm:$0xff]
    %v1599 = vld [vmem:[%s12 + $0xf8] sm:$0xff]
    %v1600 = vld [vmem:[%s13] sm:$0x1]
    %v1602 = vlaneseq
    %v1603 = vshrl.u32 %v1602, 7
    %v1604 = vsub.s32 0, %v1603
    %v1605 = vrot.slane %v1600, %v1604
    %1607 = vmatprep.subr.mxu0 0.0
    %1608 = vmatpush1.msra.mxu0 %v1568
    %1609 = vmatprep.subr.mxu0 0.0
    %1610 = vmatpush1.msra.mxu0 %v1569
    %1611 = vmatprep.subr.mxu0 0.0
    %1612 = vmatpush1.msra.mxu0 %v1570
    %1613 = vmatprep.subr.mxu0 0.0
    %1614 = vmatpush1.msra.mxu0 %v1571
    %1615 = vmatprep.subr.mxu0 0.0
    %1616 = vmatpush1.msra.mxu0 %v1572
    %1617 = vmatprep.subr.mxu0 0.0
    %1618 = vmatpush1.msra.mxu0 %v1573
    %1619 = vmatprep.subr.mxu0 0.0
    %1620 = vmatpush1.msra.mxu0 %v1574
    %1621 = vmatprep.subr.mxu0 0.0
    %1622 = vmatpush1.msra.mxu0 %v1575
    %1623 = vmatprep.subr.mxu0 0.0
    %1624 = vmatpush1.msra.mxu0 %v1576
    %1625 = vmatprep.subr.mxu0 0.0
    %1626 = vmatpush1.msra.mxu0 %v1577
    %1627 = vmatprep.subr.mxu0 0.0
    %1628 = vmatpush1.msra.mxu0 %v1578
    %1629 = vmatprep.subr.mxu0 0.0
    %1630 = vmatpush1.msra.mxu0 %v1579
    %1631 = vmatprep.subr.mxu0 0.0
    %1632 = vmatpush1.msra.mxu0 %v1580
    %1633 = vmatprep.subr.mxu0 0.0
    %1634 = vmatpush1.msra.mxu0 %v1581
    %1635 = vmatprep.subr.mxu0 0.0
    %1636 = vmatpush1.msra.mxu0 %v1582
    %1637 = vmatprep.subr.mxu0 0.0
    %1638 = vmatpush1.msra.mxu0 %v1583
    %1639 = vmatprep.subr.mxu0 0.0
    %1640 = vmatpush1.msra.mxu0 %v1584
    %1641 = vmatprep.subr.mxu0 0.0
    %1642 = vmatpush1.msra.mxu0 %v1585
    %1643 = vmatprep.subr.mxu0 0.0
    %1644 = vmatpush1.msra.mxu0 %v1586
    %1645 = vmatprep.subr.mxu0 0.0
    %1646 = vmatpush1.msra.mxu0 %v1587
    %1647 = vmatprep.subr.mxu0 0.0
    %1648 = vmatpush1.msra.mxu0 %v1588
    %1649 = vmatprep.subr.mxu0 0.0
    %1650 = vmatpush1.msra.mxu0 %v1589
    %1651 = vmatprep.subr.mxu0 0.0
    %1652 = vmatpush1.msra.mxu0 %v1590
    %1653 = vmatprep.subr.mxu0 0.0
    %1654 = vmatpush1.msra.mxu0 %v1591
    %1655 = vmatprep.subr.mxu0 0.0
    %1656 = vmatpush1.msra.mxu0 %v1592
    %1657 = vmatprep.subr.mxu0 0.0
    %1658 = vmatpush1.msra.mxu0 %v1593
    %1659 = vmatprep.subr.mxu0 0.0
    %1660 = vmatpush1.msra.mxu0 %v1594
    %1661 = vmatprep.subr.mxu0 0.0
    %1662 = vmatpush1.msra.mxu0 %v1595
    %1663 = vmatprep.subr.mxu0 0.0
    %1664 = vmatpush1.msra.mxu0 %v1596
    %1665 = vmatprep.subr.mxu0 0.0
    %1666 = vmatpush1.msra.mxu0 %v1597
    %1667 = vmatprep.subr.mxu0 0.0
    %1668 = vmatpush1.msra.mxu0 %v1598
    %1669 = vmatprep.subr.mxu0 0.0
    %1670 = vmatpush1.msra.mxu0 %v1599
    %1671 = vmatprep.mubr.f32.mxu0 %v1567
    %1672 = vmatmul.mubr.f32.gmra.mrb[0].mxu0 %v1566
    %v1673 = vpop.f32.mrb[0].mxu0
    %v1674 = vadd.f32 %v1605, %v1673
    %v1675 = vpop.f32.mrb[0].mxu0
    %1676 = vdwg.mxu0
    %v1677 = vmax.f32 %v1674, 0.0
    %1678 = vst.msk [vmem:[#allocation3] sm:$0x1] %vm1082, %v1677
    %1680 = vrot.lane.b32.xlu0 %v1677, 112
    %v1681 = vpop.permute.xlu0 %1680
    %1683 = vst.msk [vmem:[#allocation3 + $0x1] sm:$0x1] %vm1082, %v1681
    %1684 = vrot.lane.b32.xlu0 %v1677, 96
    %v1685 = vpop.permute.xlu0 %1684
    %1687 = vst.msk [vmem:[#allocation3 + $0x2] sm:$0x1] %vm1082, %v1685
    %1688 = vrot.lane.b32.xlu0 %v1677, 80
    %v1689 = vpop.permute.xlu0 %1688
    %1691 = vst.msk [vmem:[#allocation3 + $0x3] sm:$0x1] %vm1082, %v1689
    %1692 = vrot.lane.b32.xlu0 %v1677, 64
    %v1693 = vpop.permute.xlu0 %1692
    %1695 = vst.msk [vmem:[#allocation3 + $0x4] sm:$0x1] %vm1082, %v1693
    %1696 = vrot.lane.b32.xlu0 %v1677, 48
    %v1697 = vpop.permute.xlu0 %1696
    %1699 = vst.msk [vmem:[#allocation3 + $0x5] sm:$0x1] %vm1082, %v1697
    %1700 = vrot.lane.b32.xlu0 %v1677, 32
    %v1701 = vpop.permute.xlu0 %1700
    %1703 = vst.msk [vmem:[#allocation3 + $0x6] sm:$0x1] %vm1082, %v1701
    %1704 = vrot.lane.b32.xlu0 %v1677, 16
    %v1705 = vpop.permute.xlu0 %1704
    %1707 = vst.msk [vmem:[#allocation3 + $0x7] sm:$0x1] %vm1082, %v1705
    %vm1708 = vcmask 123905
    %1709 = vst.msk [vmem:[#allocation3 + $0x7] sm:$0x2] %vm1708, %v1677
    %1710 = vst.msk [vmem:[#allocation3 + $0x8] sm:$0x2] %vm1708, %v1681
    %1711 = vst.msk [vmem:[#allocation3 + $0x9] sm:$0x2] %vm1708, %v1685
    %1712 = vst.msk [vmem:[#allocation3 + $0xa] sm:$0x2] %vm1708, %v1689
    %1713 = vst.msk [vmem:[#allocation3 + $0xb] sm:$0x2] %vm1708, %v1693
    %1714 = vst.msk [vmem:[#allocation3 + $0xc] sm:$0x2] %vm1708, %v1697
    %1715 = vst.msk [vmem:[#allocation3 + $0xd] sm:$0x2] %vm1708, %v1701
    %1716 = vst.msk [vmem:[#allocation3 + $0xe] sm:$0x2] %vm1708, %v1705
    %v1717 = vld [vmem:[#allocation3] sm:$0xff]
    %v1718 = vld [vmem:[#allocation3 + $0x8] sm:$0xff]
    %v1719 = vld [vmem:[%s14] sm:$0xff]
    %v1720 = vmax.f32 %v1719, 0.0
    %vm1721 = vcmask 130048
    %v1722 = vsel %vm1721, %v1717, 0.0
    %1723 = vadd.xlane.f32.xlu0 %v1722
    %v1724 = vpop.xlane.xlu0 %1723
    %v1725 = vsel %vm1721, %v1718, 0.0
    %1726 = vadd.xlane.f32.xlu0 %v1725
    %v1727 = vpop.xlane.xlu0 %1726
    %v1728 = vmul.f32 %v1717, %v1717
    %v1729 = vmul.f32 %v1718, %v1718
    %v1730 = vsel %vm1721, %v1728, 0.0
    %1731 = vadd.xlane.f32.xlu0 %v1730
    %v1732 = vpop.xlane.xlu0 %1731
    %v1733 = vsel %vm1721, %v1729, 0.0
    %1734 = vadd.xlane.f32.xlu0 %v1733
    %v1735 = vpop.xlane.xlu0 %1734
    %v1736 = vadd.f32 %v1724, %v1727
    %v1737 = vmul.f32 %v1720, 480.0
    %v1738 = vadd.f32 %v1736, %v1737
    %v1739 = vadd.f32 %v1732, %v1735
    %v1740 = vmul.f32 %v1737, %v1720
    %v1741 = vadd.f32 %v1739, %v1740
    %v1742 = vmul.f32 %v1738, 0.001953125
    %v1743 = vmul.f32 %v1741, 0.001953125
    %v1744 = vmul.f32 %v1742, %v1742
    %v1745 = vsub.f32 %v1743, %v1744
    %v1746 = vadd.f32 %v1745, 1e-05
    %v1747 = vrsqrt.pop %v1746
    %v1748 = vld [vmem:[%s15] sm:$0xff]
    %v1749 = vmul.f32 %v1747, %v1748
    %v1750 = vsub.f32 %v1720, %v1742
    %v1751 = vmul.f32 %v1750, %v1749
    %v1752 = vld [vmem:[%s16] sm:$0xff]
    %v1753 = vadd.f32 %v1751, %v1752
    %1755 = vset.pattern.permute.xlu0 0
    %1756 = vperm.xlu0 %1755, %v1742
    %v1757 = vpop.permute.xlu0 %1756
    %v1759 = vsub.f32 %v1717, %v1757
    %v1760 = vsub.f32 %v1718, %v1757
    %1762 = vset.pattern.permute.xlu0 0
    %1763 = vperm.xlu0 %1762, %v1749
    %v1764 = vpop.permute.xlu0 %1763
    %v1766 = vmul.f32 %v1759, %v1764
    %v1767 = vmul.f32 %v1760, %v1764
    %1769 = vset.pattern.permute.xlu0 0
    %1770 = vperm.xlu0 %1769, %v1752
    %v1771 = vpop.permute.xlu0 %1770
    %v1773 = vadd.f32 %v1766, %v1771
    %v1774 = vadd.f32 %v1767, %v1771
    %1776 = vset.pattern.permute.xlu0 0
    %1777 = vperm.xlu0 %1776, %v1753
    %v1778 = vpop.permute.xlu0 %1777
    %v1780 = vsub.f32 %v1773, %v1778
    %v1781 = vsub.f32 %v1774, %v1778
    %v1782 = vld [vmem:[%s17] sm:$0xff]
    %v1783 = vld [vmem:[%s17 + $0x8] sm:$0xff]
    %v1784 = vld [vmem:[%s17 + $0x10] sm:$0xff]
    %v1785 = vld [vmem:[%s17 + $0x18] sm:$0xff]
    %1787 = vset.pattern.permute.xlu0 0
    %1788 = vperm.xlu0 %1787, %v1780
    %v1789 = vpop.permute.xlu0 %1788
    %1792 = vset.pattern.permute.xlu0 0
    %1793 = vperm.xlu0 %1792, %v1781
    %v1794 = vpop.permute.xlu0 %1793
    %v1796 = vlaneseq
    %v1797 = vshrl.u32 %v1796, 7
    %v1798 = vsub.s32 0, %v1797
    %v1799 = vrot.slane %v1782, %v1798
    %v1800 = vlaneseq
    %v1801 = vshrl.u32 %v1800, 7
    %v1802 = vsub.s32 0, %v1801
    %v1803 = vrot.slane %v1783, %v1802
    %v1804 = vmul.f32 %v1789, %v1799
    %v1805 = vmul.f32 %v1789, %v1803
    %v1806 = vmul.f32 %v1794, %v1799
    %v1807 = vmul.f32 %v1794, %v1803
    %1808 = vset.pattern.permute.xlu0 1
    %1809 = vperm.xlu0 %1808, %v1780
    %v1810 = vpop.permute.xlu0 %1809
    %1812 = vset.pattern.permute.xlu0 1
    %1813 = vperm.xlu0 %1812, %v1781
    %v1814 = vpop.permute.xlu0 %1813
    %v1816 = vlaneseq
    %v1817 = vshrl.u32 %v1816, 7
    %v1818 = vsub.s32 1, %v1817
    %v1819 = vrot.slane %v1782, %v1818
    %v1820 = vlaneseq
    %v1821 = vshrl.u32 %v1820, 7
    %v1822 = vsub.s32 1, %v1821
    %v1823 = vrot.slane %v1783, %v1822
    %v1824 = vmul.f32 %v1810, %v1819
    %v1825 = vmul.f32 %v1810, %v1823
    %v1826 = vmul.f32 %v1814, %v1819
    %v1827 = vmul.f32 %v1814, %v1823
    %v1828 = vadd.f32 %v1804, %v1824
    %v1829 = vadd.f32 %v1805, %v1825
    %v1830 = vadd.f32 %v1806, %v1826
    %v1831 = vadd.f32 %v1807, %v1827
    %1832 = vset.pattern.permute.xlu0 2
    %1833 = vperm.xlu0 %1832, %v1780
    %v1834 = vpop.permute.xlu0 %1833
    %1836 = vset.pattern.permute.xlu0 2
    %1837 = vperm.xlu0 %1836, %v1781
    %v1838 = vpop.permute.xlu0 %1837
    %v1840 = vlaneseq
    %v1841 = vshrl.u32 %v1840, 7
    %v1842 = vsub.s32 2, %v1841
    %v1843 = vrot.slane %v1782, %v1842
    %v1844 = vlaneseq
    %v1845 = vshrl.u32 %v1844, 7
    %v1846 = vsub.s32 2, %v1845
    %v1847 = vrot.slane %v1783, %v1846
    %v1848 = vmul.f32 %v1834, %v1843
    %v1849 = vmul.f32 %v1834, %v1847
    %v1850 = vmul.f32 %v1838, %v1843
    %v1851 = vmul.f32 %v1838, %v1847
    %v1852 = vadd.f32 %v1828, %v1848
    %v1853 = vadd.f32 %v1829, %v1849
    %v1854 = vadd.f32 %v1830, %v1850
    %v1855 = vadd.f32 %v1831, %v1851
    %1856 = vset.pattern.permute.xlu0 3
    %1857 = vperm.xlu0 %1856, %v1780
    %v1858 = vpop.permute.xlu0 %1857
    %1860 = vset.pattern.permute.xlu0 3
    %1861 = vperm.xlu0 %1860, %v1781
    %v1862 = vpop.permute.xlu0 %1861
    %v1864 = vlaneseq
    %v1865 = vshrl.u32 %v1864, 7
    %v1866 = vsub.s32 3, %v1865
    %v1867 = vrot.slane %v1782, %v1866
    %v1868 = vlaneseq
    %v1869 = vshrl.u32 %v1868, 7
    %v1870 = vsub.s32 3, %v1869
    %v1871 = vrot.slane %v1783, %v1870
    %v1872 = vmul.f32 %v1858, %v1867
    %v1873 = vmul.f32 %v1858, %v1871
    %v1874 = vmul.f32 %v1862, %v1867
    %v1875 = vmul.f32 %v1862, %v1871
    %v1876 = vadd.f32 %v1852, %v1872
    %v1877 = vadd.f32 %v1853, %v1873
    %v1878 = vadd.f32 %v1854, %v1874
    %v1879 = vadd.f32 %v1855, %v1875
    %1880 = vset.pattern.permute.xlu0 4
    %1881 = vperm.xlu0 %1880, %v1780
    %v1882 = vpop.permute.xlu0 %1881
    %1884 = vset.pattern.permute.xlu0 4
    %1885 = vperm.xlu0 %1884, %v1781
    %v1886 = vpop.permute.xlu0 %1885
    %v1888 = vlaneseq
    %v1889 = vshrl.u32 %v1888, 7
    %v1890 = vsub.s32 4, %v1889
    %v1891 = vrot.slane %v1782, %v1890
    %v1892 = vlaneseq
    %v1893 = vshrl.u32 %v1892, 7
    %v1894 = vsub.s32 4, %v1893
    %v1895 = vrot.slane %v1783, %v1894
    %v1896 = vmul.f32 %v1882, %v1891
    %v1897 = vmul.f32 %v1882, %v1895
    %v1898 = vmul.f32 %v1886, %v1891
    %v1899 = vmul.f32 %v1886, %v1895
    %v1900 = vadd.f32 %v1876, %v1896
    %v1901 = vadd.f32 %v1877, %v1897
    %v1902 = vadd.f32 %v1878, %v1898
    %v1903 = vadd.f32 %v1879, %v1899
    %1904 = vset.pattern.permute.xlu0 5
    %1905 = vperm.xlu0 %1904, %v1780
    %v1906 = vpop.permute.xlu0 %1905
    %1908 = vset.pattern.permute.xlu0 5
    %1909 = vperm.xlu0 %1908, %v1781
    %v1910 = vpop.permute.xlu0 %1909
    %v1912 = vlaneseq
    %v1913 = vshrl.u32 %v1912, 7
    %v1914 = vsub.s32 5, %v1913
    %v1915 = vrot.slane %v1782, %v1914
    %v1916 = vlaneseq
    %v1917 = vshrl.u32 %v1916, 7
    %v1918 = vsub.s32 5, %v1917
    %v1919 = vrot.slane %v1783, %v1918
    %v1920 = vmul.f32 %v1906, %v1915
    %v1921 = vmul.f32 %v1906, %v1919
    %v1922 = vmul.f32 %v1910, %v1915
    %v1923 = vmul.f32 %v1910, %v1919
    %v1924 = vadd.f32 %v1900, %v1920
    %v1925 = vadd.f32 %v1901, %v1921
    %v1926 = vadd.f32 %v1902, %v1922
    %v1927 = vadd.f32 %v1903, %v1923
    %1928 = vset.pattern.permute.xlu0 6
    %1929 = vperm.xlu0 %1928, %v1780
    %v1930 = vpop.permute.xlu0 %1929
    %1932 = vset.pattern.permute.xlu0 6
    %1933 = vperm.xlu0 %1932, %v1781
    %v1934 = vpop.permute.xlu0 %1933
    %v1936 = vlaneseq
    %v1937 = vshrl.u32 %v1936, 7
    %v1938 = vsub.s32 6, %v1937
    %v1939 = vrot.slane %v1782, %v1938
    %v1940 = vlaneseq
    %v1941 = vshrl.u32 %v1940, 7
    %v1942 = vsub.s32 6, %v1941
    %v1943 = vrot.slane %v1783, %v1942
    %v1944 = vmul.f32 %v1930, %v1939
    %v1945 = vmul.f32 %v1930, %v1943
    %v1946 = vmul.f32 %v1934, %v1939
    %v1947 = vmul.f32 %v1934, %v1943
    %v1948 = vadd.f32 %v1924, %v1944
    %v1949 = vadd.f32 %v1925, %v1945
    %v1950 = vadd.f32 %v1926, %v1946
    %v1951 = vadd.f32 %v1927, %v1947
    %1952 = vset.pattern.permute.xlu0 7
    %1953 = vperm.xlu0 %1952, %v1780
    %v1954 = vpop.permute.xlu0 %1953
    %1956 = vset.pattern.permute.xlu0 7
    %1957 = vperm.xlu0 %1956, %v1781
    %v1958 = vpop.permute.xlu0 %1957
    %v1960 = vlaneseq
    %v1961 = vshrl.u32 %v1960, 7
    %v1962 = vsub.s32 7, %v1961
    %v1963 = vrot.slane %v1782, %v1962
    %v1964 = vlaneseq
    %v1965 = vshrl.u32 %v1964, 7
    %v1966 = vsub.s32 7, %v1965
    %v1967 = vrot.slane %v1783, %v1966
    %v1968 = vmul.f32 %v1954, %v1963
    %v1969 = vmul.f32 %v1954, %v1967
    %v1970 = vmul.f32 %v1958, %v1963
    %v1971 = vmul.f32 %v1958, %v1967
    %v1972 = vadd.f32 %v1948, %v1968
    %v1973 = vadd.f32 %v1949, %v1969
    %v1974 = vadd.f32 %v1950, %v1970
    %v1975 = vadd.f32 %v1951, %v1971
    %1976 = vset.pattern.permute.xlu0 8
    %1977 = vperm.xlu0 %1976, %v1780
    %v1978 = vpop.permute.xlu0 %1977
    %1980 = vset.pattern.permute.xlu0 8
    %1981 = vperm.xlu0 %1980, %v1781
    %v1982 = vpop.permute.xlu0 %1981
    %v1984 = vlaneseq
    %v1985 = vshrl.u32 %v1984, 7
    %v1986 = vsub.s32 0, %v1985
    %v1987 = vrot.slane %v1784, %v1986
    %v1988 = vlaneseq
    %v1989 = vshrl.u32 %v1988, 7
    %v1990 = vsub.s32 0, %v1989
    %v1991 = vrot.slane %v1785, %v1990
    %v1992 = vmul.f32 %v1978, %v1987
    %v1993 = vmul.f32 %v1978, %v1991
    %v1994 = vmul.f32 %v1982, %v1987
    %v1995 = vmul.f32 %v1982, %v1991
    %v1996 = vadd.f32 %v1972, %v1992
    %v1997 = vadd.f32 %v1973, %v1993
    %v1998 = vadd.f32 %v1974, %v1994
    %v1999 = vadd.f32 %v1975, %v1995
    %2000 = vset.pattern.permute.xlu0 9
    %2001 = vperm.xlu0 %2000, %v1780
    %v2002 = vpop.permute.xlu0 %2001
    %2004 = vset.pattern.permute.xlu0 9
    %2005 = vperm.xlu0 %2004, %v1781
    %v2006 = vpop.permute.xlu0 %2005
    %v2008 = vlaneseq
    %v2009 = vshrl.u32 %v2008, 7
    %v2010 = vsub.s32 1, %v2009
    %v2011 = vrot.slane %v1784, %v2010
    %v2012 = vlaneseq
    %v2013 = vshrl.u32 %v2012, 7
    %v2014 = vsub.s32 1, %v2013
    %v2015 = vrot.slane %v1785, %v2014
    %v2016 = vmul.f32 %v2002, %v2011
    %v2017 = vmul.f32 %v2002, %v2015
    %v2018 = vmul.f32 %v2006, %v2011
    %v2019 = vmul.f32 %v2006, %v2015
    %v2020 = vadd.f32 %v1996, %v2016
    %v2021 = vadd.f32 %v1997, %v2017
    %v2022 = vadd.f32 %v1998, %v2018
    %v2023 = vadd.f32 %v1999, %v2019
    %2024 = vset.pattern.permute.xlu0 10
    %2025 = vperm.xlu0 %2024, %v1780
    %v2026 = vpop.permute.xlu0 %2025
    %2028 = vset.pattern.permute.xlu0 10
    %2029 = vperm.xlu0 %2028, %v1781
    %v2030 = vpop.permute.xlu0 %2029
    %v2032 = vlaneseq
    %v2033 = vshrl.u32 %v2032, 7
    %v2034 = vsub.s32 2, %v2033
    %v2035 = vrot.slane %v1784, %v2034
    %v2036 = vlaneseq
    %v2037 = vshrl.u32 %v2036, 7
    %v2038 = vsub.s32 2, %v2037
    %v2039 = vrot.slane %v1785, %v2038
    %v2040 = vmul.f32 %v2026, %v2035
    %v2041 = vmul.f32 %v2026, %v2039
    %v2042 = vmul.f32 %v2030, %v2035
    %v2043 = vmul.f32 %v2030, %v2039
    %v2044 = vadd.f32 %v2020, %v2040
    %v2045 = vadd.f32 %v2021, %v2041
    %v2046 = vadd.f32 %v2022, %v2042
    %v2047 = vadd.f32 %v2023, %v2043
    %2048 = vset.pattern.permute.xlu0 11
    %2049 = vperm.xlu0 %2048, %v1780
    %v2050 = vpop.permute.xlu0 %2049
    %2052 = vset.pattern.permute.xlu0 11
    %2053 = vperm.xlu0 %2052, %v1781
    %v2054 = vpop.permute.xlu0 %2053
    %v2056 = vlaneseq
    %v2057 = vshrl.u32 %v2056, 7
    %v2058 = vsub.s32 3, %v2057
    %v2059 = vrot.slane %v1784, %v2058
    %v2060 = vlaneseq
    %v2061 = vshrl.u32 %v2060, 7
    %v2062 = vsub.s32 3, %v2061
    %v2063 = vrot.slane %v1785, %v2062
    %v2064 = vmul.f32 %v2050, %v2059
    %v2065 = vmul.f32 %v2050, %v2063
    %v2066 = vmul.f32 %v2054, %v2059
    %v2067 = vmul.f32 %v2054, %v2063
    %v2068 = vadd.f32 %v2044, %v2064
    %v2069 = vadd.f32 %v2045, %v2065
    %v2070 = vadd.f32 %v2046, %v2066
    %v2071 = vadd.f32 %v2047, %v2067
    %2072 = vset.pattern.permute.xlu0 12
    %2073 = vperm.xlu0 %2072, %v1780
    %v2074 = vpop.permute.xlu0 %2073
    %2076 = vset.pattern.permute.xlu0 12
    %2077 = vperm.xlu0 %2076, %v1781
    %v2078 = vpop.permute.xlu0 %2077
    %v2080 = vlaneseq
    %v2081 = vshrl.u32 %v2080, 7
    %v2082 = vsub.s32 4, %v2081
    %v2083 = vrot.slane %v1784, %v2082
    %v2084 = vlaneseq
    %v2085 = vshrl.u32 %v2084, 7
    %v2086 = vsub.s32 4, %v2085
    %v2087 = vrot.slane %v1785, %v2086
    %v2088 = vmul.f32 %v2074, %v2083
    %v2089 = vmul.f32 %v2074, %v2087
    %v2090 = vmul.f32 %v2078, %v2083
    %v2091 = vmul.f32 %v2078, %v2087
    %v2092 = vadd.f32 %v2068, %v2088
    %v2093 = vadd.f32 %v2069, %v2089
    %v2094 = vadd.f32 %v2070, %v2090
    %v2095 = vadd.f32 %v2071, %v2091
    %2096 = vset.pattern.permute.xlu0 13
    %2097 = vperm.xlu0 %2096, %v1780
    %v2098 = vpop.permute.xlu0 %2097
    %2100 = vset.pattern.permute.xlu0 13
    %2101 = vperm.xlu0 %2100, %v1781
    %v2102 = vpop.permute.xlu0 %2101
    %v2104 = vlaneseq
    %v2105 = vshrl.u32 %v2104, 7
    %v2106 = vsub.s32 5, %v2105
    %v2107 = vrot.slane %v1784, %v2106
    %v2108 = vlaneseq
    %v2109 = vshrl.u32 %v2108, 7
    %v2110 = vsub.s32 5, %v2109
    %v2111 = vrot.slane %v1785, %v2110
    %v2112 = vmul.f32 %v2098, %v2107
    %v2113 = vmul.f32 %v2098, %v2111
    %v2114 = vmul.f32 %v2102, %v2107
    %v2115 = vmul.f32 %v2102, %v2111
    %v2116 = vadd.f32 %v2092, %v2112
    %v2117 = vadd.f32 %v2093, %v2113
    %v2118 = vadd.f32 %v2094, %v2114
    %v2119 = vadd.f32 %v2095, %v2115
    %2120 = vset.pattern.permute.xlu0 14
    %2121 = vperm.xlu0 %2120, %v1780
    %v2122 = vpop.permute.xlu0 %2121
    %2124 = vset.pattern.permute.xlu0 14
    %2125 = vperm.xlu0 %2124, %v1781
    %v2126 = vpop.permute.xlu0 %2125
    %v2128 = vlaneseq
    %v2129 = vshrl.u32 %v2128, 7
    %v2130 = vsub.s32 6, %v2129
    %v2131 = vrot.slane %v1784, %v2130
    %v2132 = vlaneseq
    %v2133 = vshrl.u32 %v2132, 7
    %v2134 = vsub.s32 6, %v2133
    %v2135 = vrot.slane %v1785, %v2134
    %v2136 = vmul.f32 %v2122, %v2131
    %v2137 = vmul.f32 %v2122, %v2135
    %v2138 = vmul.f32 %v2126, %v2131
    %v2139 = vmul.f32 %v2126, %v2135
    %v2140 = vadd.f32 %v2116, %v2136
    %v2141 = vadd.f32 %v2117, %v2137
    %v2142 = vadd.f32 %v2118, %v2138
    %v2143 = vadd.f32 %v2119, %v2139
    %2144 = vset.pattern.permute.xlu0 15
    %2145 = vperm.xlu0 %2144, %v1780
    %v2146 = vpop.permute.xlu0 %2145
    %2148 = vset.pattern.permute.xlu0 15
    %2149 = vperm.xlu0 %2148, %v1781
    %v2150 = vpop.permute.xlu0 %2149
    %v2152 = vlaneseq
    %v2153 = vshrl.u32 %v2152, 7
    %v2154 = vsub.s32 7, %v2153
    %v2155 = vrot.slane %v1784, %v2154
    %v2156 = vlaneseq
    %v2157 = vshrl.u32 %v2156, 7
    %v2158 = vsub.s32 7, %v2157
    %v2159 = vrot.slane %v1785, %v2158
    %v2160 = vmul.f32 %v2146, %v2155
    %v2161 = vmul.f32 %v2146, %v2159
    %v2162 = vmul.f32 %v2150, %v2155
    %v2163 = vmul.f32 %v2150, %v2159
    %v2164 = vadd.f32 %v2140, %v2160
    %v2165 = vadd.f32 %v2141, %v2161
    %v2166 = vadd.f32 %v2142, %v2162
    %v2167 = vadd.f32 %v2143, %v2163
    %v2168 = vadd.f32 %v1778, %v2164
    %v2169 = vadd.f32 %v1778, %v2165
    %v2170 = vadd.f32 %v1778, %v2166
    %v2171 = vadd.f32 %v1778, %v2167
    %v2172 = vld [vmem:[%s18] sm:$0x3f]
    %v2173 = vld [vmem:[%s19] sm:$0x3f]
    %2175 = vset.pattern.permute.xlu0 0
    %2176 = vperm.xlu0 %2175, %v2172
    %v2177 = vpop.permute.xlu0 %2176
    %v2179 = vlaneseq
    %v2180 = vshrl.u32 %v2179, 7
    %v2181 = vsub.s32 0, %v2180
    %v2182 = vrot.slane %v2168, %v2181
    %v2183 = vlaneseq
    %v2184 = vshrl.u32 %v2183, 7
    %v2185 = vsub.s32 0, %v2184
    %v2186 = vrot.slane %v2169, %v2185
    %v2187 = vmul.f32 %v2177, %v2182
    %v2188 = vmul.f32 %v2177, %v2186
    %2189 = vset.pattern.permute.xlu0 1
    %2190 = vperm.xlu0 %2189, %v2172
    %v2191 = vpop.permute.xlu0 %2190
    %v2193 = vlaneseq
    %v2194 = vshrl.u32 %v2193, 7
    %v2195 = vsub.s32 1, %v2194
    %v2196 = vrot.slane %v2168, %v2195
    %v2197 = vlaneseq
    %v2198 = vshrl.u32 %v2197, 7
    %v2199 = vsub.s32 1, %v2198
    %v2200 = vrot.slane %v2169, %v2199
    %v2201 = vmul.f32 %v2191, %v2196
    %v2202 = vmul.f32 %v2191, %v2200
    %v2203 = vadd.f32 %v2187, %v2201
    %v2204 = vadd.f32 %v2188, %v2202
    %2205 = vset.pattern.permute.xlu0 2
    %2206 = vperm.xlu0 %2205, %v2172
    %v2207 = vpop.permute.xlu0 %2206
    %v2209 = vlaneseq
    %v2210 = vshrl.u32 %v2209, 7
    %v2211 = vsub.s32 2, %v2210
    %v2212 = vrot.slane %v2168, %v2211
    %v2213 = vlaneseq
    %v2214 = vshrl.u32 %v2213, 7
    %v2215 = vsub.s32 2, %v2214
    %v2216 = vrot.slane %v2169, %v2215
    %v2217 = vmul.f32 %v2207, %v2212
    %v2218 = vmul.f32 %v2207, %v2216
    %v2219 = vadd.f32 %v2203, %v2217
    %v2220 = vadd.f32 %v2204, %v2218
    %2221 = vset.pattern.permute.xlu0 3
    %2222 = vperm.xlu0 %2221, %v2172
    %v2223 = vpop.permute.xlu0 %2222
    %v2225 = vlaneseq
    %v2226 = vshrl.u32 %v2225, 7
    %v2227 = vsub.s32 3, %v2226
    %v2228 = vrot.slane %v2168, %v2227
    %v2229 = vlaneseq
    %v2230 = vshrl.u32 %v2229, 7
    %v2231 = vsub.s32 3, %v2230
    %v2232 = vrot.slane %v2169, %v2231
    %v2233 = vmul.f32 %v2223, %v2228
    %v2234 = vmul.f32 %v2223, %v2232
    %v2235 = vadd.f32 %v2219, %v2233
    %v2236 = vadd.f32 %v2220, %v2234
    %2237 = vset.pattern.permute.xlu0 4
    %2238 = vperm.xlu0 %2237, %v2172
    %v2239 = vpop.permute.xlu0 %2238
    %v2241 = vlaneseq
    %v2242 = vshrl.u32 %v2241, 7
    %v2243 = vsub.s32 4, %v2242
    %v2244 = vrot.slane %v2168, %v2243
    %v2245 = vlaneseq
    %v2246 = vshrl.u32 %v2245, 7
    %v2247 = vsub.s32 4, %v2246
    %v2248 = vrot.slane %v2169, %v2247
    %v2249 = vmul.f32 %v2239, %v2244
    %v2250 = vmul.f32 %v2239, %v2248
    %v2251 = vadd.f32 %v2235, %v2249
    %v2252 = vadd.f32 %v2236, %v2250
    %2253 = vset.pattern.permute.xlu0 5
    %2254 = vperm.xlu0 %2253, %v2172
    %v2255 = vpop.permute.xlu0 %2254
    %v2257 = vlaneseq
    %v2258 = vshrl.u32 %v2257, 7
    %v2259 = vsub.s32 5, %v2258
    %v2260 = vrot.slane %v2168, %v2259
    %v2261 = vlaneseq
    %v2262 = vshrl.u32 %v2261, 7
    %v2263 = vsub.s32 5, %v2262
    %v2264 = vrot.slane %v2169, %v2263
    %v2265 = vmul.f32 %v2255, %v2260
    %v2266 = vmul.f32 %v2255, %v2264
    %v2267 = vadd.f32 %v2251, %v2265
    %v2268 = vadd.f32 %v2252, %v2266
    %2269 = vset.pattern.permute.xlu0 6
    %2270 = vperm.xlu0 %2269, %v2172
    %v2271 = vpop.permute.xlu0 %2270
    %v2273 = vlaneseq
    %v2274 = vshrl.u32 %v2273, 7
    %v2275 = vsub.s32 6, %v2274
    %v2276 = vrot.slane %v2168, %v2275
    %v2277 = vlaneseq
    %v2278 = vshrl.u32 %v2277, 7
    %v2279 = vsub.s32 6, %v2278
    %v2280 = vrot.slane %v2169, %v2279
    %v2281 = vmul.f32 %v2271, %v2276
    %v2282 = vmul.f32 %v2271, %v2280
    %v2283 = vadd.f32 %v2267, %v2281
    %v2284 = vadd.f32 %v2268, %v2282
    %2285 = vset.pattern.permute.xlu0 7
    %2286 = vperm.xlu0 %2285, %v2172
    %v2287 = vpop.permute.xlu0 %2286
    %v2289 = vlaneseq
    %v2290 = vshrl.u32 %v2289, 7
    %v2291 = vsub.s32 7, %v2290
    %v2292 = vrot.slane %v2168, %v2291
    %v2293 = vlaneseq
    %v2294 = vshrl.u32 %v2293, 7
    %v2295 = vsub.s32 7, %v2294
    %v2296 = vrot.slane %v2169, %v2295
    %v2297 = vmul.f32 %v2287, %v2292
    %v2298 = vmul.f32 %v2287, %v2296
    %v2299 = vadd.f32 %v2283, %v2297
    %v2300 = vadd.f32 %v2284, %v2298
    %2301 = vset.pattern.permute.xlu0 8
    %2302 = vperm.xlu0 %2301, %v2172
    %v2303 = vpop.permute.xlu0 %2302
    %v2305 = vlaneseq
    %v2306 = vshrl.u32 %v2305, 7
    %v2307 = vsub.s32 0, %v2306
    %v2308 = vrot.slane %v2170, %v2307
    %v2309 = vlaneseq
    %v2310 = vshrl.u32 %v2309, 7
    %v2311 = vsub.s32 0, %v2310
    %v2312 = vrot.slane %v2171, %v2311
    %v2313 = vmul.f32 %v2303, %v2308
    %v2314 = vmul.f32 %v2303, %v2312
    %v2315 = vadd.f32 %v2299, %v2313
    %v2316 = vadd.f32 %v2300, %v2314
    %2317 = vset.pattern.permute.xlu0 9
    %2318 = vperm.xlu0 %2317, %v2172
    %v2319 = vpop.permute.xlu0 %2318
    %v2321 = vlaneseq
    %v2322 = vshrl.u32 %v2321, 7
    %v2323 = vsub.s32 1, %v2322
    %v2324 = vrot.slane %v2170, %v2323
    %v2325 = vlaneseq
    %v2326 = vshrl.u32 %v2325, 7
    %v2327 = vsub.s32 1, %v2326
    %v2328 = vrot.slane %v2171, %v2327
    %v2329 = vmul.f32 %v2319, %v2324
    %v2330 = vmul.f32 %v2319, %v2328
    %v2331 = vadd.f32 %v2315, %v2329
    %v2332 = vadd.f32 %v2316, %v2330
    %2333 = vset.pattern.permute.xlu0 10
    %2334 = vperm.xlu0 %2333, %v2172
    %v2335 = vpop.permute.xlu0 %2334
    %v2337 = vlaneseq
    %v2338 = vshrl.u32 %v2337, 7
    %v2339 = vsub.s32 2, %v2338
    %v2340 = vrot.slane %v2170, %v2339
    %v2341 = vlaneseq
    %v2342 = vshrl.u32 %v2341, 7
    %v2343 = vsub.s32 2, %v2342
    %v2344 = vrot.slane %v2171, %v2343
    %v2345 = vmul.f32 %v2335, %v2340
    %v2346 = vmul.f32 %v2335, %v2344
    %v2347 = vadd.f32 %v2331, %v2345
    %v2348 = vadd.f32 %v2332, %v2346
    %2349 = vset.pattern.permute.xlu0 11
    %2350 = vperm.xlu0 %2349, %v2172
    %v2351 = vpop.permute.xlu0 %2350
    %v2353 = vlaneseq
    %v2354 = vshrl.u32 %v2353, 7
    %v2355 = vsub.s32 3, %v2354
    %v2356 = vrot.slane %v2170, %v2355
    %v2357 = vlaneseq
    %v2358 = vshrl.u32 %v2357, 7
    %v2359 = vsub.s32 3, %v2358
    %v2360 = vrot.slane %v2171, %v2359
    %v2361 = vmul.f32 %v2351, %v2356
    %v2362 = vmul.f32 %v2351, %v2360
    %v2363 = vadd.f32 %v2347, %v2361
    %v2364 = vadd.f32 %v2348, %v2362
    %2365 = vset.pattern.permute.xlu0 12
    %2366 = vperm.xlu0 %2365, %v2172
    %v2367 = vpop.permute.xlu0 %2366
    %v2369 = vlaneseq
    %v2370 = vshrl.u32 %v2369, 7
    %v2371 = vsub.s32 4, %v2370
    %v2372 = vrot.slane %v2170, %v2371
    %v2373 = vlaneseq
    %v2374 = vshrl.u32 %v2373, 7
    %v2375 = vsub.s32 4, %v2374
    %v2376 = vrot.slane %v2171, %v2375
    %v2377 = vmul.f32 %v2367, %v2372
    %v2378 = vmul.f32 %v2367, %v2376
    %v2379 = vadd.f32 %v2363, %v2377
    %v2380 = vadd.f32 %v2364, %v2378
    %2381 = vset.pattern.permute.xlu0 13
    %2382 = vperm.xlu0 %2381, %v2172
    %v2383 = vpop.permute.xlu0 %2382
    %v2385 = vlaneseq
    %v2386 = vshrl.u32 %v2385, 7
    %v2387 = vsub.s32 5, %v2386
    %v2388 = vrot.slane %v2170, %v2387
    %v2389 = vlaneseq
    %v2390 = vshrl.u32 %v2389, 7
    %v2391 = vsub.s32 5, %v2390
    %v2392 = vrot.slane %v2171, %v2391
    %v2393 = vmul.f32 %v2383, %v2388
    %v2394 = vmul.f32 %v2383, %v2392
    %v2395 = vadd.f32 %v2379, %v2393
    %v2396 = vadd.f32 %v2380, %v2394
    %2397 = vset.pattern.permute.xlu0 14
    %2398 = vperm.xlu0 %2397, %v2172
    %v2399 = vpop.permute.xlu0 %2398
    %v2401 = vlaneseq
    %v2402 = vshrl.u32 %v2401, 7
    %v2403 = vsub.s32 6, %v2402
    %v2404 = vrot.slane %v2170, %v2403
    %v2405 = vlaneseq
    %v2406 = vshrl.u32 %v2405, 7
    %v2407 = vsub.s32 6, %v2406
    %v2408 = vrot.slane %v2171, %v2407
    %v2409 = vmul.f32 %v2399, %v2404
    %v2410 = vmul.f32 %v2399, %v2408
    %v2411 = vadd.f32 %v2395, %v2409
    %v2412 = vadd.f32 %v2396, %v2410
    %2413 = vset.pattern.permute.xlu0 15
    %2414 = vperm.xlu0 %2413, %v2172
    %v2415 = vpop.permute.xlu0 %2414
    %v2417 = vlaneseq
    %v2418 = vshrl.u32 %v2417, 7
    %v2419 = vsub.s32 7, %v2418
    %v2420 = vrot.slane %v2170, %v2419
    %v2421 = vlaneseq
    %v2422 = vshrl.u32 %v2421, 7
    %v2423 = vsub.s32 7, %v2422
    %v2424 = vrot.slane %v2171, %v2423
    %v2425 = vmul.f32 %v2415, %v2420
    %v2426 = vmul.f32 %v2415, %v2424
    %v2427 = vadd.f32 %v2411, %v2425
    %v2428 = vadd.f32 %v2412, %v2426
    %2430 = vset.pattern.permute.xlu0 0
    %2431 = vperm.xlu0 %2430, %v2173
    %v2432 = vpop.permute.xlu0 %2431
    %v2434 = vadd.f32 %v2432, %v2427
    %v2435 = vadd.f32 %v2432, %v2428
    %s2436 = scalar_lea.vmem %s18, 8
    %v2437 = vld [vmem:[%s2436] sm:$0x3f]
    %2439 = vset.pattern.permute.xlu0 0
    %2440 = vperm.xlu0 %2439, %v2437
    %v2441 = vpop.permute.xlu0 %2440
    %v2443 = vmul.f32 %v2441, %v2182
    %v2444 = vmul.f32 %v2441, %v2186
    %2445 = vset.pattern.permute.xlu0 1
    %2446 = vperm.xlu0 %2445, %v2437
    %v2447 = vpop.permute.xlu0 %2446
    %v2449 = vmul.f32 %v2447, %v2196
    %v2450 = vmul.f32 %v2447, %v2200
    %v2451 = vadd.f32 %v2443, %v2449
    %v2452 = vadd.f32 %v2444, %v2450
    %2453 = vset.pattern.permute.xlu0 2
    %2454 = vperm.xlu0 %2453, %v2437
    %v2455 = vpop.permute.xlu0 %2454
    %v2457 = vmul.f32 %v2455, %v2212
    %v2458 = vmul.f32 %v2455, %v2216
    %v2459 = vadd.f32 %v2451, %v2457
    %v2460 = vadd.f32 %v2452, %v2458
    %2461 = vset.pattern.permute.xlu0 3
    %2462 = vperm.xlu0 %2461, %v2437
    %v2463 = vpop.permute.xlu0 %2462
    %v2465 = vmul.f32 %v2463, %v2228
    %v2466 = vmul.f32 %v2463, %v2232
    %v2467 = vadd.f32 %v2459, %v2465
    %v2468 = vadd.f32 %v2460, %v2466
    %2469 = vset.pattern.permute.xlu0 4
    %2470 = vperm.xlu0 %2469, %v2437
    %v2471 = vpop.permute.xlu0 %2470
    %v2473 = vmul.f32 %v2471, %v2244
    %v2474 = vmul.f32 %v2471, %v2248
    %v2475 = vadd.f32 %v2467, %v2473
    %v2476 = vadd.f32 %v2468, %v2474
    %2477 = vset.pattern.permute.xlu0 5
    %2478 = vperm.xlu0 %2477, %v2437
    %v2479 = vpop.permute.xlu0 %2478
    %v2481 = vmul.f32 %v2479, %v2260
    %v2482 = vmul.f32 %v2479, %v2264
    %v2483 = vadd.f32 %v2475, %v2481
    %v2484 = vadd.f32 %v2476, %v2482
    %2485 = vset.pattern.permute.xlu0 6
    %2486 = vperm.xlu0 %2485, %v2437
    %v2487 = vpop.permute.xlu0 %2486
    %v2489 = vmul.f32 %v2487, %v2276
    %v2490 = vmul.f32 %v2487, %v2280
    %v2491 = vadd.f32 %v2483, %v2489
    %v2492 = vadd.f32 %v2484, %v2490
    %2493 = vset.pattern.permute.xlu0 7
    %2494 = vperm.xlu0 %2493, %v2437
    %v2495 = vpop.permute.xlu0 %2494
    %v2497 = vmul.f32 %v2495, %v2292
    %v2498 = vmul.f32 %v2495, %v2296
    %v2499 = vadd.f32 %v2491, %v2497
    %v2500 = vadd.f32 %v2492, %v2498
    %2501 = vset.pattern.permute.xlu0 8
    %2502 = vperm.xlu0 %2501, %v2437
    %v2503 = vpop.permute.xlu0 %2502
    %v2505 = vmul.f32 %v2503, %v2308
    %v2506 = vmul.f32 %v2503, %v2312
    %v2507 = vadd.f32 %v2499, %v2505
    %v2508 = vadd.f32 %v2500, %v2506
    %2509 = vset.pattern.permute.xlu0 9
    %2510 = vperm.xlu0 %2509, %v2437
    %v2511 = vpop.permute.xlu0 %2510
    %v2513 = vmul.f32 %v2511, %v2324
    %v2514 = vmul.f32 %v2511, %v2328
    %v2515 = vadd.f32 %v2507, %v2513
    %v2516 = vadd.f32 %v2508, %v2514
    %2517 = vset.pattern.permute.xlu0 10
    %2518 = vperm.xlu0 %2517, %v2437
    %v2519 = vpop.permute.xlu0 %2518
    %v2521 = vmul.f32 %v2519, %v2340
    %v2522 = vmul.f32 %v2519, %v2344
    %v2523 = vadd.f32 %v2515, %v2521
    %v2524 = vadd.f32 %v2516, %v2522
    %2525 = vset.pattern.permute.xlu0 11
    %2526 = vperm.xlu0 %2525, %v2437
    %v2527 = vpop.permute.xlu0 %2526
    %v2529 = vmul.f32 %v2527, %v2356
    %v2530 = vmul.f32 %v2527, %v2360
    %v2531 = vadd.f32 %v2523, %v2529
    %v2532 = vadd.f32 %v2524, %v2530
    %2533 = vset.pattern.permute.xlu0 12
    %2534 = vperm.xlu0 %2533, %v2437
    %v2535 = vpop.permute.xlu0 %2534
    %v2537 = vmul.f32 %v2535, %v2372
    %v2538 = vmul.f32 %v2535, %v2376
    %v2539 = vadd.f32 %v2531, %v2537
    %v2540 = vadd.f32 %v2532, %v2538
    %2541 = vset.pattern.permute.xlu0 13
    %2542 = vperm.xlu0 %2541, %v2437
    %v2543 = vpop.permute.xlu0 %2542
    %v2545 = vmul.f32 %v2543, %v2388
    %v2546 = vmul.f32 %v2543, %v2392
    %v2547 = vadd.f32 %v2539, %v2545
    %v2548 = vadd.f32 %v2540, %v2546
    %2549 = vset.pattern.permute.xlu0 14
    %2550 = vperm.xlu0 %2549, %v2437
    %v2551 = vpop.permute.xlu0 %2550
    %v2553 = vmul.f32 %v2551, %v2404
    %v2554 = vmul.f32 %v2551, %v2408
    %v2555 = vadd.f32 %v2547, %v2553
    %v2556 = vadd.f32 %v2548, %v2554
    %2557 = vset.pattern.permute.xlu0 15
    %2558 = vperm.xlu0 %2557, %v2437
    %v2559 = vpop.permute.xlu0 %2558
    %v2561 = vmul.f32 %v2559, %v2420
    %v2562 = vmul.f32 %v2559, %v2424
    %v2563 = vadd.f32 %v2555, %v2561
    %v2564 = vadd.f32 %v2556, %v2562
    %v2565 = vadd.f32 %v2432, %v2563
    %v2566 = vadd.f32 %v2432, %v2564
    %s2567 = scalar_lea.vmem %s18, 16
    %v2568 = vld [vmem:[%s2567] sm:$0x3f]
    %2570 = vset.pattern.permute.xlu0 0
    %2571 = vperm.xlu0 %2570, %v2568
    %v2572 = vpop.permute.xlu0 %2571
    %v2574 = vmul.f32 %v2572, %v2182
    %v2575 = vmul.f32 %v2572, %v2186
    %2576 = vset.pattern.permute.xlu0 1
    %2577 = vperm.xlu0 %2576, %v2568
    %v2578 = vpop.permute.xlu0 %2577
    %v2580 = vmul.f32 %v2578, %v2196
    %v2581 = vmul.f32 %v2578, %v2200
    %v2582 = vadd.f32 %v2574, %v2580
    %v2583 = vadd.f32 %v2575, %v2581
    %2584 = vset.pattern.permute.xlu0 2
    %2585 = vperm.xlu0 %2584, %v2568
    %v2586 = vpop.permute.xlu0 %2585
    %v2588 = vmul.f32 %v2586, %v2212
    %v2589 = vmul.f32 %v2586, %v2216
    %v2590 = vadd.f32 %v2582, %v2588
    %v2591 = vadd.f32 %v2583, %v2589
    %2592 = vset.pattern.permute.xlu0 3
    %2593 = vperm.xlu0 %2592, %v2568
    %v2594 = vpop.permute.xlu0 %2593
    %v2596 = vmul.f32 %v2594, %v2228
    %v2597 = vmul.f32 %v2594, %v2232
    %v2598 = vadd.f32 %v2590, %v2596
    %v2599 = vadd.f32 %v2591, %v2597
    %2600 = vset.pattern.permute.xlu0 4
    %2601 = vperm.xlu0 %2600, %v2568
    %v2602 = vpop.permute.xlu0 %2601
    %v2604 = vmul.f32 %v2602, %v2244
    %v2605 = vmul.f32 %v2602, %v2248
    %v2606 = vadd.f32 %v2598, %v2604
    %v2607 = vadd.f32 %v2599, %v2605
    %2608 = vset.pattern.permute.xlu0 5
    %2609 = vperm.xlu0 %2608, %v2568
    %v2610 = vpop.permute.xlu0 %2609
    %v2612 = vmul.f32 %v2610, %v2260
    %v2613 = vmul.f32 %v2610, %v2264
    %v2614 = vadd.f32 %v2606, %v2612
    %v2615 = vadd.f32 %v2607, %v2613
    %2616 = vset.pattern.permute.xlu0 6
    %2617 = vperm.xlu0 %2616, %v2568
    %v2618 = vpop.permute.xlu0 %2617
    %v2620 = vmul.f32 %v2618, %v2276
    %v2621 = vmul.f32 %v2618, %v2280
    %v2622 = vadd.f32 %v2614, %v2620
    %v2623 = vadd.f32 %v2615, %v2621
    %2624 = vset.pattern.permute.xlu0 7
    %2625 = vperm.xlu0 %2624, %v2568
    %v2626 = vpop.permute.xlu0 %2625
    %v2628 = vmul.f32 %v2626, %v2292
    %v2629 = vmul.f32 %v2626, %v2296
    %v2630 = vadd.f32 %v2622, %v2628
    %v2631 = vadd.f32 %v2623, %v2629
    %2632 = vset.pattern.permute.xlu0 8
    %2633 = vperm.xlu0 %2632, %v2568
    %v2634 = vpop.permute.xlu0 %2633
    %v2636 = vmul.f32 %v2634, %v2308
    %v2637 = vmul.f32 %v2634, %v2312
    %v2638 = vadd.f32 %v2630, %v2636
    %v2639 = vadd.f32 %v2631, %v2637
    %2640 = vset.pattern.permute.xlu0 9
    %2641 = vperm.xlu0 %2640, %v2568
    %v2642 = vpop.permute.xlu0 %2641
    %v2644 = vmul.f32 %v2642, %v2324
    %v2645 = vmul.f32 %v2642, %v2328
    %v2646 = vadd.f32 %v2638, %v2644
    %v2647 = vadd.f32 %v2639, %v2645
    %2648 = vset.pattern.permute.xlu0 10
    %2649 = vperm.xlu0 %2648, %v2568
    %v2650 = vpop.permute.xlu0 %2649
    %v2652 = vmul.f32 %v2650, %v2340
    %v2653 = vmul.f32 %v2650, %v2344
    %v2654 = vadd.f32 %v2646, %v2652
    %v2655 = vadd.f32 %v2647, %v2653
    %2656 = vset.pattern.permute.xlu0 11
    %2657 = vperm.xlu0 %2656, %v2568
    %v2658 = vpop.permute.xlu0 %2657
    %v2660 = vmul.f32 %v2658, %v2356
    %v2661 = vmul.f32 %v2658, %v2360
    %v2662 = vadd.f32 %v2654, %v2660
    %v2663 = vadd.f32 %v2655, %v2661
    %2664 = vset.pattern.permute.xlu0 12
    %2665 = vperm.xlu0 %2664, %v2568
    %v2666 = vpop.permute.xlu0 %2665
    %v2668 = vmul.f32 %v2666, %v2372
    %v2669 = vmul.f32 %v2666, %v2376
    %v2670 = vadd.f32 %v2662, %v2668
    %v2671 = vadd.f32 %v2663, %v2669
    %2672 = vset.pattern.permute.xlu0 13
    %2673 = vperm.xlu0 %2672, %v2568
    %v2674 = vpop.permute.xlu0 %2673
    %v2676 = vmul.f32 %v2674, %v2388
    %v2677 = vmul.f32 %v2674, %v2392
    %v2678 = vadd.f32 %v2670, %v2676
    %v2679 = vadd.f32 %v2671, %v2677
    %2680 = vset.pattern.permute.xlu0 14
    %2681 = vperm.xlu0 %2680, %v2568
    %v2682 = vpop.permute.xlu0 %2681
    %v2684 = vmul.f32 %v2682, %v2404
    %v2685 = vmul.f32 %v2682, %v2408
    %v2686 = vadd.f32 %v2678, %v2684
    %v2687 = vadd.f32 %v2679, %v2685
    %2688 = vset.pattern.permute.xlu0 15
    %2689 = vperm.xlu0 %2688, %v2568
    %v2690 = vpop.permute.xlu0 %2689
    %v2692 = vmul.f32 %v2690, %v2420
    %v2693 = vmul.f32 %v2690, %v2424
    %v2694 = vadd.f32 %v2686, %v2692
    %v2695 = vadd.f32 %v2687, %v2693
    %v2696 = vadd.f32 %v2432, %v2694
    %v2697 = vadd.f32 %v2432, %v2695
    %s2698 = scalar_lea.vmem %s18, 24
    %v2699 = vld [vmem:[%s2698] sm:$0x3f]
    %2701 = vset.pattern.permute.xlu0 0
    %2702 = vperm.xlu0 %2701, %v2699
    %v2703 = vpop.permute.xlu0 %2702
    %v2705 = vmul.f32 %v2703, %v2182
    %v2706 = vmul.f32 %v2703, %v2186
    %2707 = vset.pattern.permute.xlu0 1
    %2708 = vperm.xlu0 %2707, %v2699
    %v2709 = vpop.permute.xlu0 %2708
    %v2711 = vmul.f32 %v2709, %v2196
    %v2712 = vmul.f32 %v2709, %v2200
    %v2713 = vadd.f32 %v2705, %v2711
    %v2714 = vadd.f32 %v2706, %v2712
    %2715 = vset.pattern.permute.xlu0 2
    %2716 = vperm.xlu0 %2715, %v2699
    %v2717 = vpop.permute.xlu0 %2716
    %v2719 = vmul.f32 %v2717, %v2212
    %v2720 = vmul.f32 %v2717, %v2216
    %v2721 = vadd.f32 %v2713, %v2719
    %v2722 = vadd.f32 %v2714, %v2720
    %2723 = vset.pattern.permute.xlu0 3
    %2724 = vperm.xlu0 %2723, %v2699
    %v2725 = vpop.permute.xlu0 %2724
    %v2727 = vmul.f32 %v2725, %v2228
    %v2728 = vmul.f32 %v2725, %v2232
    %v2729 = vadd.f32 %v2721, %v2727
    %v2730 = vadd.f32 %v2722, %v2728
    %2731 = vset.pattern.permute.xlu0 4
    %2732 = vperm.xlu0 %2731, %v2699
    %v2733 = vpop.permute.xlu0 %2732
    %v2735 = vmul.f32 %v2733, %v2244
    %v2736 = vmul.f32 %v2733, %v2248
    %v2737 = vadd.f32 %v2729, %v2735
    %v2738 = vadd.f32 %v2730, %v2736
    %2739 = vset.pattern.permute.xlu0 5
    %2740 = vperm.xlu0 %2739, %v2699
    %v2741 = vpop.permute.xlu0 %2740
    %v2743 = vmul.f32 %v2741, %v2260
    %v2744 = vmul.f32 %v2741, %v2264
    %v2745 = vadd.f32 %v2737, %v2743
    %v2746 = vadd.f32 %v2738, %v2744
    %2747 = vset.pattern.permute.xlu0 6
    %2748 = vperm.xlu0 %2747, %v2699
    %v2749 = vpop.permute.xlu0 %2748
    %v2751 = vmul.f32 %v2749, %v2276
    %v2752 = vmul.f32 %v2749, %v2280
    %v2753 = vadd.f32 %v2745, %v2751
    %v2754 = vadd.f32 %v2746, %v2752
    %2755 = vset.pattern.permute.xlu0 7
    %2756 = vperm.xlu0 %2755, %v2699
    %v2757 = vpop.permute.xlu0 %2756
    %v2759 = vmul.f32 %v2757, %v2292
    %v2760 = vmul.f32 %v2757, %v2296
    %v2761 = vadd.f32 %v2753, %v2759
    %v2762 = vadd.f32 %v2754, %v2760
    %2763 = vset.pattern.permute.xlu0 8
    %2764 = vperm.xlu0 %2763, %v2699
    %v2765 = vpop.permute.xlu0 %2764
    %v2767 = vmul.f32 %v2765, %v2308
    %v2768 = vmul.f32 %v2765, %v2312
    %v2769 = vadd.f32 %v2761, %v2767
    %v2770 = vadd.f32 %v2762, %v2768
    %2771 = vset.pattern.permute.xlu0 9
    %2772 = vperm.xlu0 %2771, %v2699
    %v2773 = vpop.permute.xlu0 %2772
    %v2775 = vmul.f32 %v2773, %v2324
    %v2776 = vmul.f32 %v2773, %v2328
    %v2777 = vadd.f32 %v2769, %v2775
    %v2778 = vadd.f32 %v2770, %v2776
    %2779 = vset.pattern.permute.xlu0 10
    %2780 = vperm.xlu0 %2779, %v2699
    %v2781 = vpop.permute.xlu0 %2780
    %v2783 = vmul.f32 %v2781, %v2340
    %v2784 = vmul.f32 %v2781, %v2344
    %v2785 = vadd.f32 %v2777, %v2783
    %v2786 = vadd.f32 %v2778, %v2784
    %2787 = vset.pattern.permute.xlu0 11
    %2788 = vperm.xlu0 %2787, %v2699
    %v2789 = vpop.permute.xlu0 %2788
    %v2791 = vmul.f32 %v2789, %v2356
    %v2792 = vmul.f32 %v2789, %v2360
    %v2793 = vadd.f32 %v2785, %v2791
    %v2794 = vadd.f32 %v2786, %v2792
    %2795 = vset.pattern.permute.xlu0 12
    %2796 = vperm.xlu0 %2795, %v2699
    %v2797 = vpop.permute.xlu0 %2796
    %v2799 = vmul.f32 %v2797, %v2372
    %v2800 = vmul.f32 %v2797, %v2376
    %v2801 = vadd.f32 %v2793, %v2799
    %v2802 = vadd.f32 %v2794, %v2800
    %2803 = vset.pattern.permute.xlu0 13
    %2804 = vperm.xlu0 %2803, %v2699
    %v2805 = vpop.permute.xlu0 %2804
    %v2807 = vmul.f32 %v2805, %v2388
    %v2808 = vmul.f32 %v2805, %v2392
    %v2809 = vadd.f32 %v2801, %v2807
    %v2810 = vadd.f32 %v2802, %v2808
    %2811 = vset.pattern.permute.xlu0 14
    %2812 = vperm.xlu0 %2811, %v2699
    %v2813 = vpop.permute.xlu0 %2812
    %v2815 = vmul.f32 %v2813, %v2404
    %v2816 = vmul.f32 %v2813, %v2408
    %v2817 = vadd.f32 %v2809, %v2815
    %v2818 = vadd.f32 %v2810, %v2816
    %2819 = vset.pattern.permute.xlu0 15
    %2820 = vperm.xlu0 %2819, %v2699
    %v2821 = vpop.permute.xlu0 %2820
    %v2823 = vmul.f32 %v2821, %v2420
    %v2824 = vmul.f32 %v2821, %v2424
    %v2825 = vadd.f32 %v2817, %v2823
    %v2826 = vadd.f32 %v2818, %v2824
    %v2827 = vadd.f32 %v2432, %v2825
    %v2828 = vadd.f32 %v2432, %v2826
    %v2829 = vmax.f32 %v2434, 0.0
    %v2830 = vmax.f32 %v2435, 0.0
    %v2831 = vmax.f32 %v2565, 0.0
    %v2832 = vmax.f32 %v2566, 0.0
    %v2833 = vmax.f32 %v2696, 0.0
    %v2834 = vmax.f32 %v2697, 0.0
    %v2835 = vmax.f32 %v2827, 0.0
    %v2836 = vmax.f32 %v2828, 0.0
    %vm2837 = vcmask 1045504
    %v2838 = vsel %vm2837, %v2829, 0.0
    %v2839 = vsel %vm2837, %v2830, 0.0
    %v2840 = vadd.f32 %v2838, %v2839
    %v2841 = vsel %vm2837, %v2831, 0.0
    %v2842 = vadd.f32 %v2840, %v2841
    %v2843 = vsel %vm2837, %v2832, 0.0
    %v2844 = vadd.f32 %v2842, %v2843
    %v2845 = vsel %vm2837, %v2833, 0.0
    %v2846 = vadd.f32 %v2844, %v2845
    %v2847 = vsel %vm2837, %v2834, 0.0
    %v2848 = vadd.f32 %v2846, %v2847
    %v2849 = vsel %vm2837, %v2835, 0.0
    %v2850 = vadd.f32 %v2848, %v2849
    %v2851 = vsel %vm2837, %v2836, 0.0
    %v2852 = vadd.f32 %v2850, %v2851
    %2853 = vadd.xlane.f32.xlu0 %v2852
    %v2854 = vpop.xlane.xlu0 %2853
    %v2855 = vmul.f32 %v2829, %v2829
    %v2856 = vmul.f32 %v2830, %v2830
    %v2857 = vmul.f32 %v2831, %v2831
    %v2858 = vmul.f32 %v2832, %v2832
    %v2859 = vmul.f32 %v2833, %v2833
    %v2860 = vmul.f32 %v2834, %v2834
    %v2861 = vmul.f32 %v2835, %v2835
    %v2862 = vmul.f32 %v2836, %v2836
    %v2863 = vsel %vm2837, %v2855, 0.0
    %v2864 = vsel %vm2837, %v2856, 0.0
    %v2865 = vadd.f32 %v2863, %v2864
    %v2866 = vsel %vm2837, %v2857, 0.0
    %v2867 = vadd.f32 %v2865, %v2866
    %v2868 = vsel %vm2837, %v2858, 0.0
    %v2869 = vadd.f32 %v2867, %v2868
    %v2870 = vsel %vm2837, %v2859, 0.0
    %v2871 = vadd.f32 %v2869, %v2870
    %v2872 = vsel %vm2837, %v2860, 0.0
    %v2873 = vadd.f32 %v2871, %v2872
    %v2874 = vsel %vm2837, %v2861, 0.0
    %v2875 = vadd.f32 %v2873, %v2874
    %v2876 = vsel %vm2837, %v2862, 0.0
    %v2877 = vadd.f32 %v2875, %v2876
    %2878 = vadd.xlane.f32.xlu0 %v2877
    %v2879 = vpop.xlane.xlu0 %2878
    %v2881 = vrot.slane %v2854, 3
    %v2883 = vadd.f32 %v2854, %v2881
    %v2885 = vrot.slane %v2879, 3
    %v2887 = vadd.f32 %v2879, %v2885
    %v2888 = vmul.f32 %v2883, 0.00048828125
    %v2889 = vmul.f32 %v2887, 0.00048828125
    %v2890 = vmul.f32 %v2888, %v2888
    %v2891 = vsub.f32 %v2889, %v2890
    %v2892 = vadd.f32 %v2891, 1e-05
    %v2893 = vrsqrt.pop %v2892
    %v2894 = vld [vmem:[%s20] sm:$0x7]
    %v2895 = vmul.f32 %v2893, %v2894
    %v2897 = vrot.slane %v2888, 5
    %vm2899 = vcmask 1042432
    %v2900 = vsel %vm2899, %v2888, %v2897
    %v2902 = vrot.slane %v2895, 5
    %v2904 = vsel %vm2899, %v2895, %v2902
    %v2905 = vld [vmem:[%s21] sm:$0x7]
    %v2907 = vrot.slane %v2905, 5
    %v2909 = vsel %vm2899, %v2905, %v2907
    %2911 = vset.pattern.permute.xlu0 0
    %2912 = vperm.xlu0 %2911, %v2900
    %v2913 = vpop.permute.xlu0 %2912
    %v2915 = vsub.f32 %v2829, %v2913
    %v2916 = vsub.f32 %v2830, %v2913
    %v2917 = vsub.f32 %v2831, %v2913
    %v2918 = vsub.f32 %v2832, %v2913
    %v2919 = vsub.f32 %v2833, %v2913
    %v2920 = vsub.f32 %v2834, %v2913
    %v2921 = vsub.f32 %v2835, %v2913
    %v2922 = vsub.f32 %v2836, %v2913
    %2924 = vset.pattern.permute.xlu0 0
    %2925 = vperm.xlu0 %2924, %v2904
    %v2926 = vpop.permute.xlu0 %2925
    %v2928 = vmul.f32 %v2915, %v2926
    %v2929 = vmul.f32 %v2916, %v2926
    %v2930 = vmul.f32 %v2917, %v2926
    %v2931 = vmul.f32 %v2918, %v2926
    %v2932 = vmul.f32 %v2919, %v2926
    %v2933 = vmul.f32 %v2920, %v2926
    %v2934 = vmul.f32 %v2921, %v2926
    %v2935 = vmul.f32 %v2922, %v2926
    %2937 = vset.pattern.permute.xlu0 0
    %2938 = vperm.xlu0 %2937, %v2909
    %v2939 = vpop.permute.xlu0 %2938
    %v2941 = vadd.f32 %v2928, %v2939
    %v2942 = vadd.f32 %v2929, %v2939
    %v2943 = vadd.f32 %v2930, %v2939
    %v2944 = vadd.f32 %v2931, %v2939
    %v2945 = vadd.f32 %v2932, %v2939
    %v2946 = vadd.f32 %v2933, %v2939
    %v2947 = vadd.f32 %v2934, %v2939
    %v2948 = vadd.f32 %v2935, %v2939
    %2949 = vst [vmem:[%s24] sm:$0x3f] %v2941
    %2950 = vst [vmem:[%s24 + $0x8] sm:$0x3f] %v2942
    %2951 = vst [vmem:[%s24 + $0x10] sm:$0x3f] %v2943
    %2952 = vst [vmem:[%s24 + $0x18] sm:$0x3f] %v2944
    %2953 = vst [vmem:[%s24 + $0x20] sm:$0x3f] %v2945
    %2954 = vst [vmem:[%s24 + $0x28] sm:$0x3f] %v2946
    %2955 = vst [vmem:[%s24 + $0x30] sm:$0x3f] %v2947
    %2956 = vst [vmem:[%s24 + $0x38] sm:$0x3f] %v2948
    // Predicated region
    $region90: #{vae_forward.1} parent=1 // pred_check
      _
    $region91: #{vae_forward.1} parent=1 // pred_check_branch
      %2958 = sbr.rel (0) target = $region93
    $region92: #{vae_forward.1} parent=1 // pred_region
      %s2960 = ssub.s32 64, 64
      %2961 = vsyncadd [#allocation5], %s2960
      %s2963 = sshll.u32 [#allocation4], 4
      %s2964 = int_to_ptr.vmem [resolvable:$true] %s2963
      %2966 = dma.vmem_to_hbm [thread:$0]  %s2964, 64, %s22, [#allocation5]
    $region93: #{vae_forward.1} parent=1 // pred_fallthru
      _
    // Predicated region
    $region94: #{vae_forward.1} parent=1 // pred_check
      _
    $region95: #{vae_forward.1} parent=1 // pred_check_branch
      %2968 = sbr.rel (0) target = $region97
    $region96: #{vae_forward.1} parent=1 // pred_region
      %s2970 = ssub.s32 64, 64
      %2971 = vsyncadd [#allocation7], %s2970
      %s2973 = sshll.u32 [#allocation6], 4
      %s2974 = int_to_ptr.vmem [resolvable:$true] %s2973
      %2976 = dma.vmem_to_hbm [thread:$0]  %s2974, 64, %s23, [#allocation7]
    $region97: #{vae_forward.1} parent=1 // pred_fallthru
      _
    // Predicated region
    $region98: #{vae_forward.1} parent=1 // pred_check
      _
    $region99: #{vae_forward.1} parent=1 // pred_check_branch
      %2978 = sbr.rel (0) target = $region101
    $region100: #{vae_forward.1} parent=1 // pred_region
      _
    $region101: #{vae_forward.1} parent=1 // pred_fallthru
      _
    // Predicated region
    $region102: #{vae_forward.1} parent=1 // pred_check
      _
    $region103: #{vae_forward.1} parent=1 // pred_check_branch
      %2980 = sbr.rel (0) target = $region105
    $region104: #{vae_forward.1} parent=1 // pred_region
      %2981 = dma.done [#allocation5], 64
    $region105: #{vae_forward.1} parent=1 // pred_fallthru
      _
    // Predicated region
    $region106: #{vae_forward.1} parent=1 // pred_check
      _
    $region107: #{vae_forward.1} parent=1 // pred_check_branch
      %2983 = sbr.rel (0) target = $region109
    $region108: #{vae_forward.1} parent=1 // pred_region
      %2984 = dma.done [#allocation7], 64
    $region109: #{vae_forward.1} parent=1 // pred_fallthru
      _
    // Predicated region
    $region110: #{vae_forward.1} parent=1 // pred_check
      _
    $region111: #{vae_forward.1} parent=1 // pred_check_branch
      %2986 = sbr.rel (0) target = $region113
    $region112: #{vae_forward.1} parent=1 // pred_region
      _
    $region113: #{vae_forward.1} parent=1 // pred_fallthru
      _
    %2987 = vsyncpa [#allocation5], 1
    %2988 = vsyncpa [#allocation7], 1

</llo_original>
